<compile_context>
chip_gen: v7x
topology: tpu7x:2x2x1
jax: 0.10.0
libtpu: 0.0.40
codegen_flags: <defaults>
</compile_context>

<pallas_src>
import jax
import jax.numpy as jnp
from jax import lax
from jax.experimental import pallas as pl
from jax.experimental.pallas import tpu as pltpu

EPS = 1e-5  # nn.InstanceNorm2d default eps


def _effective_weights(weight):
    """(C_out, C_in, 3, 3) -> (9, 2*C_out, C_in) per-(row_tap, col_tap) weights.

    Rows are ordered pi*C_out + c where pi is the output-row parity.  Row-tap remap
    (2x nearest upsample + reflection pad along rows == edge pad at original resolution):
      pi=0: dy {0,1,2} -> row taps {0,1,1};   pi=1: dy {0,1,2} -> row taps {1,1,2}.
    Columns are handled at upsampled resolution directly (no remap needed).
    """
    C_out, C_in = weight.shape[0], weight.shape[1]
    w = weight.astype(jnp.float32)
    A = jnp.zeros((3, 3, 2 * C_out, C_in), jnp.float32)
    for dx in range(3):
        # pi = 0 : dy=0 -> tr=0 ; dy=1,2 -> tr=1
        A = A.at[0, dx, 0:C_out, :].add(w[:, :, 0, dx])
        A = A.at[1, dx, 0:C_out, :].add(w[:, :, 1, dx] + w[:, :, 2, dx])
        # pi = 1 : dy=0,1 -> tr=1 ; dy=2 -> tr=2
        A = A.at[1, dx, C_out:, :].add(w[:, :, 0, dx] + w[:, :, 1, dx])
        A = A.at[2, dx, C_out:, :].add(w[:, :, 2, dx])
    return A.reshape(9, 2 * C_out, C_in)


def up_con_block(x, weight, bias=None, *, out_dtype=jnp.float32, tile_rows=None):
    """x: (N, C_in, H, W) NCHW; weight: (C_out, C_in, 3, 3); bias: (C_out,) (cancels under
    InstanceNorm, accepted for API fidelity).  Returns (N, C_out, 2H, 2W)."""
    del bias  # per-channel conv bias is removed exactly by InstanceNorm's mean subtraction
    N, C_in, H, W = x.shape
    C_out = weight.shape[0]
    assert weight.shape == (C_out, C_in, 3, 3), weight.shape

    Hp = H + 2            # row-edge-padded original rows
    Wu = 2 * W + 2        # width-upsampled + edge-padded columns
    CM2 = 2 * C_out       # 2 row parities stacked along the matmul M dim

    # ---- row-tile selection: 2*TH must be a sublane multiple (8) unless it covers the full dim ----
    if tile_rows is None:
        if H % 8 == 0:
            TH = 8
        elif H % 4 == 0:
            TH = 4
        else:
            TH = H
    else:
        TH = tile_rows
    assert H % TH == 0, (H, TH)
    T = H // TH

    # ---- wrapper-side prep (all bf16, all small): width-upsample + edge pad; effective weights ----
    xt = jnp.transpose(x, (0, 2, 1, 3)).astype(jnp.bfloat16)          # (N, H, C_in, W)
    xu = jnp.repeat(xt, 2, axis=3)                                     # (N, H, C_in, 2W)
    U = jnp.pad(xu, ((0, 0), (1, 1), (0, 0), (1, 1)), mode="edge")     # (N, Hp, C_in, Wu)
    A = _effective_weights(weight).astype(jnp.bfloat16)                # (9, CM2, C_in)

    # ---- fused kernel: phase 0 = conv + stats, phase 1 = normalize + ReLU + store ----
    def kernel(u_ref, w_ref, o_ref, pre_ref, s1_ref, s2_ref, mu_ref, rs_ref):
        ph = pl.program_id(1)
        t = pl.program_id(2)
        base = pl.multiple_of(t * TH, TH)

        @pl.when(jnp.logical_and(ph == 0, t == 0))
        def _init_stats():
            s1_ref[...] = jnp.zeros_like(s1_ref)
            s2_ref[...] = jnp.zeros_like(s2_ref)

        @pl.when(ph == 0)
        def _conv_and_stats():
            taps = [w_ref[k] for k in range(9)]                 # 9 x (CM2, C_in) bf16
            rows = u_ref[pl.ds(base, TH + 2)]                   # (TH+2, C_in, Wu) bf16
            ts1 = jnp.zeros((CM2, 2 * W), jnp.float32)
            ts2 = jnp.zeros((CM2, 2 * W), jnp.float32)
            for rr in range(TH):
                acc = jnp.zeros((CM2, 2 * W), jnp.float32)
                for tr in range(3):
                    src = rows[rr + tr]                          # (C_in, Wu)
                    for dx in range(3):
                        acc = acc + jnp.dot(taps[tr * 3 + dx], src[:, dx:dx + 2 * W],
                                            preferred_element_type=jnp.float32)
                ts1 = ts1 + acc
                ts2 = ts2 + acc * acc
                pre_ref[base + rr] = acc.astype(pre_ref.dtype)   # bf16 VMEM-resident pre-activation
            s1_ref[...] += ts1
            s2_ref[...] += ts2

        @pl.when(jnp.logical_and(ph == 1, t == 0))
        def _finalize_stats():
            cnt = 4.0 * H * W                                    # full output spatial extent (2H * 2W)
            s1 = jnp.sum(s1_ref[...], axis=1, keepdims=True)     # (CM2, 1)
            s2 = jnp.sum(s2_ref[...], axis=1, keepdims=True)
            s1c = s1[0:C_out] + s1[C_out:2 * C_out]              # combine row parities -> (C_out, 1)
            s2c = s2[0:C_out] + s2[C_out:2 * C_out]
            mean = s1c / cnt
            var = jnp.maximum(s2c / cnt - mean * mean, 0.0)
            rstd = lax.rsqrt(var + EPS)
            mu_ref[...] = jnp.concatenate([mean, mean], axis=0)  # back to (CM2, 1)
            rs_ref[...] = jnp.concatenate([rstd, rstd], axis=0)

        @pl.when(ph == 1)
        def _normalize_relu_store():
            mu = mu_ref[...]
            rs = rs_ref[...]
            pre = pre_ref[pl.ds(base, TH)]                       # (TH, CM2, 2W) bf16
            for rr in range(TH):
                y = (pre[rr].astype(jnp.float32) - mu) * rs
                y = jnp.maximum(y, 0.0).astype(o_ref.dtype)      # (CM2, 2W)
                o_ref[:, 2 * rr, :] = y[0:C_out]                 # output row parity 0
                o_ref[:, 2 * rr + 1, :] = y[C_out:2 * C_out]     # output row parity 1

    # ---- VMEM footprint / compiler params ----
    osz = jnp.dtype(out_dtype).itemsize
    vmem_bytes = (2 * Hp * C_in * Wu * 2            # padded input block (double buffered across N)
                  + 2 * 9 * CM2 * C_in * 2          # effective weights
                  + 2 * C_out * (2 * TH) * (2 * W) * osz   # output block (double buffered)
                  + H * CM2 * (2 * W) * 2           # bf16 pre-activation scratch
                  + 2 * CM2 * (2 * W) * 4           # sum / sumsq scratches
                  + 2 * CM2 * 4)                    # mean / rstd
    cp = dict(dimension_semantics=("parallel", "arbitrary", "arbitrary"))
    if vmem_bytes > 12 * 1024 * 1024:
        # raise scoped-VMEM ceiling (16 MiB default on v5e, 32 MiB on v6e/v7x); keep below v7x physical
        cp["vmem_limit_bytes"] = int(min(1.5 * vmem_bytes, 60 * 1024 * 1024))

    out = pl.pallas_call(
        kernel,
        out_shape=jax.ShapeDtypeStruct((N, C_out, 2 * H, 2 * W), out_dtype),
        grid_spec=pltpu.PrefetchScalarGridSpec(
            num_scalar_prefetch=0,
            grid=(N, 2, T),
            in_specs=[
                # whole padded image per batch: resident in VMEM across the (phase, tile) axes
                pl.BlockSpec((pl.Squeezed(), Hp, C_in, Wu), lambda n, ph, t: (n, 0, 0, 0)),
                pl.BlockSpec((9, CM2, C_in), lambda n, ph, t: (0, 0, 0)),
            ],
            # During phase 0 the index collapses to block 0 (no garbage flushes); during phase 1 each
            # row-tile block is written exactly once, directly in final NCHW layout.
            out_specs=pl.BlockSpec((pl.Squeezed(), C_out, 2 * TH, 2 * W),
                                   lambda n, ph, t: (n, 0, t * ph, 0)),
            scratch_shapes=[
                pltpu.VMEM((H, CM2, 2 * W), jnp.bfloat16),   # pre-activation (never hits HBM)
                pltpu.VMEM((CM2, 2 * W), jnp.float32),       # running sum
                pltpu.VMEM((CM2, 2 * W), jnp.float32),       # running sum of squares
                pltpu.VMEM((CM2, 1), jnp.float32),           # per-row mean
                pltpu.VMEM((CM2, 1), jnp.float32),           # per-row rstd
            ],
        ),
        compiler_params=pltpu.CompilerParams(**cp),
    )(U, A)
    return out


def up_con_block_ref(x, weight, bias):
    """Pure-JAX reference replicating the PyTorch forward (f32 everywhere)."""
    xu = jnp.repeat(jnp.repeat(x, 2, axis=2), 2, axis=3)
    xp = jnp.pad(xu, ((0, 0), (0, 0), (1, 1), (1, 1)), mode="reflect")
    y = lax.conv_general_dilated(xp, weight, (1, 1), "VALID",
                                 dimension_numbers=("NCHW", "OIHW", "NCHW"))
    y = y + bias[None, :, None, None]
    mean = jnp.mean(y, axis=(2, 3), keepdims=True)
    var = jnp.mean((y - mean) ** 2, axis=(2, 3), keepdims=True)
    y = (y - mean) * lax.rsqrt(var + EPS)
    return jnp.maximum(y, 0.0)


if __name__ == "__main__":
    key = jax.random.PRNGKey(0)
    k1, k2, k3 = jax.random.split(key, 3)

    N, in_c, out_c, H, W = 2, 4, 8, 16, 16
    x = jax.random.normal(k1, (N, in_c, H, W), dtype=jnp.float32)
    weight = jax.random.normal(k2, (out_c, in_c, 3, 3), dtype=jnp.float32) / jnp.sqrt(9.0 * in_c)
    bias = 0.1 * jax.random.normal(k3, (out_c,), dtype=jnp.float32)

    ref = jax.block_until_ready(up_con_block_ref(x, weight, bias))
    out = jax.block_until_ready(up_con_block(x, weight, bias))
    assert out.shape == (N, out_c, 2 * H, 2 * W), out.shape
    err = float(jnp.max(jnp.abs(out - ref)))
    # tolerance accounts for bf16 MXU operands and the bf16 VMEM pre-activation
    assert jnp.allclose(out, ref, atol=5e-2, rtol=5e-2), err

    # second config: exercises T=2 with TH=4, sublane-multiple channel counts, single batch
    k4, k5, k6 = jax.random.split(jax.random.PRNGKey(1), 3)
    N2, ic2, oc2, H2, W2 = 1, 8, 16, 8, 32
    x2 = jax.random.normal(k4, (N2, ic2, H2, W2), dtype=jnp.float32)
    w2 = jax.random.normal(k5, (oc2, ic2, 3, 3), dtype=jnp.float32) / jnp.sqrt(9.0 * ic2)
    b2 = 0.1 * jax.random.normal(k6, (oc2,), dtype=jnp.float32)
    ref2 = jax.block_until_ready(up_con_block_ref(x2, w2, b2))
    out2 = jax.block_until_ready(up_con_block(x2, w2, b2, tile_rows=4))
    err2 = float(jnp.max(jnp.abs(out2 - ref2)))
    assert jnp.allclose(out2, ref2, atol=5e-2, rtol=5e-2), err2

    print("KERNEL_OK")
</pallas_src>

<mosaic_0001>
module attributes {stable_mosaic.version = 11 : i64} {
  func.func @kernel(%arg0: i32, %arg1: i32, %arg2: i32, %arg3: memref<1x18x4x34xbf16, #tpu.memory_space<vmem>>, %arg4: memref<9x16x4xbf16, #tpu.memory_space<vmem>>, %arg5: memref<1x8x16x32xf32, #tpu.memory_space<vmem>>, %arg6: memref<16x16x32xbf16, #tpu.memory_space<vmem>>, %arg7: memref<16x32xf32, #tpu.memory_space<vmem>>, %arg8: memref<16x32xf32, #tpu.memory_space<vmem>>, %arg9: memref<16x1xf32, #tpu.memory_space<vmem>>, %arg10: memref<16x1xf32, #tpu.memory_space<vmem>>) attributes {dimension_semantics = [#tpu.dimension_semantics<parallel>, #tpu.dimension_semantics<arbitrary>, #tpu.dimension_semantics<arbitrary>], iteration_bounds = array<i64: 2, 2, 2>, scalar_prefetch = 0 : i64, scratch_operands = 5 : i64, tpu.core_type = #tpu.core_type<tc>, window_params = [{transform_indices = @transform_0, window_bounds = array<i64: 1, 18, 4, 34>}, {pipeline_mode = #tpu.pipeline_mode<synchronous>, transform_indices = @transform_1, window_bounds = array<i64: 9, 16, 4>}, {transform_indices = @transform_2, window_bounds = array<i64: 1, 8, 16, 32>}]} {
    %c8_i32 = arith.constant 8 : i32
    %0 = arith.muli %arg2, %c8_i32 : i32
    %1 = tpu.assume_multiple %0, 8 : i32
    %c0_i32 = arith.constant 0 : i32
    %2 = arith.cmpi eq, %arg1, %c0_i32 : i32
    %c0_i32_0 = arith.constant 0 : i32
    %3 = arith.cmpi eq, %arg2, %c0_i32_0 : i32
    %4 = arith.andi %2, %3 : i1
    %5 = arith.extui %4 : i1 to i32
    %c0_i32_1 = arith.constant 0 : i32
    %6 = arith.cmpi ne, %5, %c0_i32_1 : i32
    scf.if %6 {
      %cst = arith.constant 0.000000e+00 : f32
      %18 = vector.broadcast %cst : f32 to vector<16x32xf32>
      %c0 = arith.constant 0 : index
      %c0_8 = arith.constant 0 : index
      %19 = vector.load %arg7[%c0, %c0_8] : memref<16x32xf32, #tpu.memory_space<vmem>>, vector<16x32xf32>
      tpu.vector_store %arg7[%c0, %c0_8], %18 {strides = array<i32>} : memref<16x32xf32, #tpu.memory_space<vmem>>, vector<16x32xf32>,
      %cst_9 = arith.constant 0.000000e+00 : f32
      %20 = vector.broadcast %cst_9 : f32 to vector<16x32xf32>
      %c0_10 = arith.constant 0 : index
      %c0_11 = arith.constant 0 : index
      %21 = vector.load %arg8[%c0_10, %c0_11] : memref<16x32xf32, #tpu.memory_space<vmem>>, vector<16x32xf32>
      tpu.vector_store %arg8[%c0_10, %c0_11], %20 {strides = array<i32>} : memref<16x32xf32, #tpu.memory_space<vmem>>, vector<16x32xf32>,
    } else {
    }
    %c0_i32_2 = arith.constant 0 : i32
    %7 = arith.cmpi eq, %arg1, %c0_i32_2 : i32
    %8 = arith.extui %7 : i1 to i32
    %c0_i32_3 = arith.constant 0 : i32
    %9 = arith.cmpi ne, %8, %c0_i32_3 : i32
    scf.if %9 {
      %c0 = arith.constant 0 : index
      %c0_8 = arith.constant 0 : index
      %c0_9 = arith.constant 0 : index
      %18 = vector.load %arg4[%c0, %c0_8, %c0_9] : memref<9x16x4xbf16, #tpu.memory_space<vmem>>, vector<1x16x4xbf16>
      %19 = vector.shape_cast %18 : vector<1x16x4xbf16> to vector<16x4xbf16>
      %c1 = arith.constant 1 : index
      %c0_10 = arith.constant 0 : index
      %c0_11 = arith.constant 0 : index
      %20 = vector.load %arg4[%c1, %c0_10, %c0_11] : memref<9x16x4xbf16, #tpu.memory_space<vmem>>, vector<1x16x4xbf16>
      %21 = vector.shape_cast %20 : vector<1x16x4xbf16> to vector<16x4xbf16>
      %c2 = arith.constant 2 : index
      %c0_12 = arith.constant 0 : index
      %c0_13 = arith.constant 0 : index
      %22 = vector.load %arg4[%c2, %c0_12, %c0_13] : memref<9x16x4xbf16, #tpu.memory_space<vmem>>, vector<1x16x4xbf16>
      %23 = vector.shape_cast %22 : vector<1x16x4xbf16> to vector<16x4xbf16>
      %c3 = arith.constant 3 : index
      %c0_14 = arith.constant 0 : index
      %c0_15 = arith.constant 0 : index
      %24 = vector.load %arg4[%c3, %c0_14, %c0_15] : memref<9x16x4xbf16, #tpu.memory_space<vmem>>, vector<1x16x4xbf16>
      %25 = vector.shape_cast %24 : vector<1x16x4xbf16> to vector<16x4xbf16>
      %c4 = arith.constant 4 : index
      %c0_16 = arith.constant 0 : index
      %c0_17 = arith.constant 0 : index
      %26 = vector.load %arg4[%c4, %c0_16, %c0_17] : memref<9x16x4xbf16, #tpu.memory_space<vmem>>, vector<1x16x4xbf16>
      %27 = vector.shape_cast %26 : vector<1x16x4xbf16> to vector<16x4xbf16>
      %c5 = arith.constant 5 : index
      %c0_18 = arith.constant 0 : index
      %c0_19 = arith.constant 0 : index
      %28 = vector.load %arg4[%c5, %c0_18, %c0_19] : memref<9x16x4xbf16, #tpu.memory_space<vmem>>, vector<1x16x4xbf16>
      %29 = vector.shape_cast %28 : vector<1x16x4xbf16> to vector<16x4xbf16>
      %c6 = arith.constant 6 : index
      %c0_20 = arith.constant 0 : index
      %c0_21 = arith.constant 0 : index
      %30 = vector.load %arg4[%c6, %c0_20, %c0_21] : memref<9x16x4xbf16, #tpu.memory_space<vmem>>, vector<1x16x4xbf16>
      %31 = vector.shape_cast %30 : vector<1x16x4xbf16> to vector<16x4xbf16>
      %c7 = arith.constant 7 : index
      %c0_22 = arith.constant 0 : index
      %c0_23 = arith.constant 0 : index
      %32 = vector.load %arg4[%c7, %c0_22, %c0_23] : memref<9x16x4xbf16, #tpu.memory_space<vmem>>, vector<1x16x4xbf16>
      %33 = vector.shape_cast %32 : vector<1x16x4xbf16> to vector<16x4xbf16>
      %c8 = arith.constant 8 : index
      %c0_24 = arith.constant 0 : index
      %c0_25 = arith.constant 0 : index
      %34 = vector.load %arg4[%c8, %c0_24, %c0_25] : memref<9x16x4xbf16, #tpu.memory_space<vmem>>, vector<1x16x4xbf16>
      %35 = vector.shape_cast %34 : vector<1x16x4xbf16> to vector<16x4xbf16>
      %c0_26 = arith.constant 0 : index
      %36 = arith.index_cast %1 : i32 to index
      %c0_27 = arith.constant 0 : index
      %c0_28 = arith.constant 0 : index
      %37 = vector.load %arg3[%c0_26, %36, %c0_27, %c0_28] : memref<1x18x4x34xbf16, #tpu.memory_space<vmem>>, vector<1x10x4x34xbf16>
      %38 = vector.shape_cast %37 : vector<1x10x4x34xbf16> to vector<10x4x34xbf16>
      %cst = arith.constant 0.000000e+00 : f32
      %39 = vector.broadcast %cst : f32 to vector<16x32xf32>
      %cst_29 = arith.constant 0.000000e+00 : f32
      %40 = vector.broadcast %cst_29 : f32 to vector<16x32xf32>
      %cst_30 = arith.constant 0.000000e+00 : f32
      %41 = vector.broadcast %cst_30 : f32 to vector<16x32xf32>
      %42 = vector.extract_strided_slice %38 {offsets = [0, 0, 0], sizes = [1, 4, 34], strides = [1, 1, 1]} : vector<10x4x34xbf16> to vector<1x4x34xbf16>
      %43 = vector.shape_cast %42 : vector<1x4x34xbf16> to vector<4x34xbf16>
      %44 = vector.extract_strided_slice %43 {offsets = [0, 0], sizes = [4, 32], strides = [1, 1]} : vector<4x34xbf16> to vector<4x32xbf16>
      %cst_31 = arith.constant dense<0.000000e+00> : vector<16x32xf32>
      %45 = tpu.matmul %19, %44, %cst_31 {dimension_numbers = #tpu.dot_dimension_numbers<[1], [0], [0], [1], [0, 0, 1, 1], [], []>} : vector<16x4xbf16>, vector<4x32xbf16>, vector<16x32xf32> -> vector<16x32xf32>
      %46 = arith.addf %41, %45 : vector<16x32xf32>
      %47 = vector.extract_strided_slice %43 {offsets = [0, 1], sizes = [4, 32], strides = [1, 1]} : vector<4x34xbf16> to vector<4x32xbf16>
      %cst_32 = arith.constant dense<0.000000e+00> : vector<16x32xf32>
      %48 = tpu.matmul %21, %47, %cst_32 {dimension_numbers = #tpu.dot_dimension_numbers<[1], [0], [0], [1], [0, 0, 1, 1], [], []>} : vector<16x4xbf16>, vector<4x32xbf16>, vector<16x32xf32> -> vector<16x32xf32>
      %49 = arith.addf %46, %48 : vector<16x32xf32>
      %50 = vector.extract_strided_slice %43 {offsets = [0, 2], sizes = [4, 32], strides = [1, 1]} : vector<4x34xbf16> to vector<4x32xbf16>
      %cst_33 = arith.constant dense<0.000000e+00> : vector<16x32xf32>
      %51 = tpu.matmul %23, %50, %cst_33 {dimension_numbers = #tpu.dot_dimension_numbers<[1], [0], [0], [1], [0, 0, 1, 1], [], []>} : vector<16x4xbf16>, vector<4x32xbf16>, vector<16x32xf32> -> vector<16x32xf32>
      %52 = arith.addf %49, %51 : vector<16x32xf32>
      %53 = vector.extract_strided_slice %38 {offsets = [1, 0, 0], sizes = [1, 4, 34], strides = [1, 1, 1]} : vector<10x4x34xbf16> to vector<1x4x34xbf16>
      %54 = vector.shape_cast %53 : vector<1x4x34xbf16> to vector<4x34xbf16>
      %55 = vector.extract_strided_slice %54 {offsets = [0, 0], sizes = [4, 32], strides = [1, 1]} : vector<4x34xbf16> to vector<4x32xbf16>
      %cst_34 = arith.constant dense<0.000000e+00> : vector<16x32xf32>
      %56 = tpu.matmul %25, %55, %cst_34 {dimension_numbers = #tpu.dot_dimension_numbers<[1], [0], [0], [1], [0, 0, 1, 1], [], []>} : vector<16x4xbf16>, vector<4x32xbf16>, vector<16x32xf32> -> vector<16x32xf32>
      %57 = arith.addf %52, %56 : vector<16x32xf32>
      %58 = vector.extract_strided_slice %54 {offsets = [0, 1], sizes = [4, 32], strides = [1, 1]} : vector<4x34xbf16> to vector<4x32xbf16>
      %cst_35 = arith.constant dense<0.000000e+00> : vector<16x32xf32>
      %59 = tpu.matmul %27, %58, %cst_35 {dimension_numbers = #tpu.dot_dimension_numbers<[1], [0], [0], [1], [0, 0, 1, 1], [], []>} : vector<16x4xbf16>, vector<4x32xbf16>, vector<16x32xf32> -> vector<16x32xf32>
      %60 = arith.addf %57, %59 : vector<16x32xf32>
      %61 = vector.extract_strided_slice %54 {offsets = [0, 2], sizes = [4, 32], strides = [1, 1]} : vector<4x34xbf16> to vector<4x32xbf16>
      %cst_36 = arith.constant dense<0.000000e+00> : vector<16x32xf32>
      %62 = tpu.matmul %29, %61, %cst_36 {dimension_numbers = #tpu.dot_dimension_numbers<[1], [0], [0], [1], [0, 0, 1, 1], [], []>} : vector<16x4xbf16>, vector<4x32xbf16>, vector<16x32xf32> -> vector<16x32xf32>
      %63 = arith.addf %60, %62 : vector<16x32xf32>
      %64 = vector.extract_strided_slice %38 {offsets = [2, 0, 0], sizes = [1, 4, 34], strides = [1, 1, 1]} : vector<10x4x34xbf16> to vector<1x4x34xbf16>
      %65 = vector.shape_cast %64 : vector<1x4x34xbf16> to vector<4x34xbf16>
      %66 = vector.extract_strided_slice %65 {offsets = [0, 0], sizes = [4, 32], strides = [1, 1]} : vector<4x34xbf16> to vector<4x32xbf16>
      %cst_37 = arith.constant dense<0.000000e+00> : vector<16x32xf32>
      %67 = tpu.matmul %31, %66, %cst_37 {dimension_numbers = #tpu.dot_dimension_numbers<[1], [0], [0], [1], [0, 0, 1, 1], [], []>} : vector<16x4xbf16>, vector<4x32xbf16>, vector<16x32xf32> -> vector<16x32xf32>
      %68 = arith.addf %63, %67 : vector<16x32xf32>
      %69 = vector.extract_strided_slice %65 {offsets = [0, 1], sizes = [4, 32], strides = [1, 1]} : vector<4x34xbf16> to vector<4x32xbf16>
      %cst_38 = arith.constant dense<0.000000e+00> : vector<16x32xf32>
      %70 = tpu.matmul %33, %69, %cst_38 {dimension_numbers = #tpu.dot_dimension_numbers<[1], [0], [0], [1], [0, 0, 1, 1], [], []>} : vector<16x4xbf16>, vector<4x32xbf16>, vector<16x32xf32> -> vector<16x32xf32>
      %71 = arith.addf %68, %70 : vector<16x32xf32>
      %72 = vector.extract_strided_slice %65 {offsets = [0, 2], sizes = [4, 32], strides = [1, 1]} : vector<4x34xbf16> to vector<4x32xbf16>
      %cst_39 = arith.constant dense<0.000000e+00> : vector<16x32xf32>
      %73 = tpu.matmul %35, %72, %cst_39 {dimension_numbers = #tpu.dot_dimension_numbers<[1], [0], [0], [1], [0, 0, 1, 1], [], []>} : vector<16x4xbf16>, vector<4x32xbf16>, vector<16x32xf32> -> vector<16x32xf32>
      %74 = arith.addf %71, %73 : vector<16x32xf32>
      %75 = arith.addf %39, %74 : vector<16x32xf32>
      %76 = arith.mulf %74, %74 : vector<16x32xf32>
      %77 = arith.addf %40, %76 : vector<16x32xf32>
      %78 = arith.truncf %74 : vector<16x32xf32> to vector<16x32xbf16>
      %c0_i32_40 = arith.constant 0 : i32
      %79 = arith.addi %1, %c0_i32_40 : i32
      %80 = arith.index_cast %79 : i32 to index
      %c0_41 = arith.constant 0 : index
      %c0_42 = arith.constant 0 : index
      %81 = vector.load %arg6[%80, %c0_41, %c0_42] : memref<16x16x32xbf16, #tpu.memory_space<vmem>>, vector<1x16x32xbf16>
      %82 = vector.shape_cast %81 : vector<1x16x32xbf16> to vector<16x32xbf16>
      %83 = vector.shape_cast %78 : vector<16x32xbf16> to vector<1x16x32xbf16>
      tpu.vector_store %arg6[%80, %c0_41, %c0_42], %83 {strides = array<i32>} : memref<16x16x32xbf16, #tpu.memory_space<vmem>>, vector<1x16x32xbf16>,
      %cst_43 = arith.constant 0.000000e+00 : f32
      %84 = vector.broadcast %cst_43 : f32 to vector<16x32xf32>
      %85 = vector.extract_strided_slice %38 {offsets = [1, 0, 0], sizes = [1, 4, 34], strides = [1, 1, 1]} : vector<10x4x34xbf16> to vector<1x4x34xbf16>
      %86 = vector.shape_cast %85 : vector<1x4x34xbf16> to vector<4x34xbf16>
      %87 = vector.extract_strided_slice %86 {offsets = [0, 0], sizes = [4, 32], strides = [1, 1]} : vector<4x34xbf16> to vector<4x32xbf16>
      %cst_44 = arith.constant dense<0.000000e+00> : vector<16x32xf32>
      %88 = tpu.matmul %19, %87, %cst_44 {dimension_numbers = #tpu.dot_dimension_numbers<[1], [0], [0], [1], [0, 0, 1, 1], [], []>} : vector<16x4xbf16>, vector<4x32xbf16>, vector<16x32xf32> -> vector<16x32xf32>
      %89 = arith.addf %84, %88 : vector<16x32xf32>
      %90 = vector.extract_strided_slice %86 {offsets = [0, 1], sizes = [4, 32], strides = [1, 1]} : vector<4x34xbf16> to vector<4x32xbf16>
      %cst_45 = arith.constant dense<0.000000e+00> : vector<16x32xf32>
      %91 = tpu.matmul %21, %90, %cst_45 {dimension_numbers = #tpu.dot_dimension_numbers<[1], [0], [0], [1], [0, 0, 1, 1], [], []>} : vector<16x4xbf16>, vector<4x32xbf16>, vector<16x32xf32> -> vector<16x32xf32>
      %92 = arith.addf %89, %91 : vector<16x32xf32>
      %93 = vector.extract_strided_slice %86 {offsets = [0, 2], sizes = [4, 32], strides = [1, 1]} : vector<4x34xbf16> to vector<4x32xbf16>
      %cst_46 = arith.constant dense<0.000000e+00> : vector<16x32xf32>
      %94 = tpu.matmul %23, %93, %cst_46 {dimension_numbers = #tpu.dot_dimension_numbers<[1], [0], [0], [1], [0, 0, 1, 1], [], []>} : vector<16x4xbf16>, vector<4x32xbf16>, vector<16x32xf32> -> vector<16x32xf32>
      %95 = arith.addf %92, %94 : vector<16x32xf32>
      %96 = vector.extract_strided_slice %38 {offsets = [2, 0, 0], sizes = [1, 4, 34], strides = [1, 1, 1]} : vector<10x4x34xbf16> to vector<1x4x34xbf16>
      %97 = vector.shape_cast %96 : vector<1x4x34xbf16> to vector<4x34xbf16>
      %98 = vector.extract_strided_slice %97 {offsets = [0, 0], sizes = [4, 32], strides = [1, 1]} : vector<4x34xbf16> to vector<4x32xbf16>
      %cst_47 = arith.constant dense<0.000000e+00> : vector<16x32xf32>
      %99 = tpu.matmul %25, %98, %cst_47 {dimension_numbers = #tpu.dot_dimension_numbers<[1], [0], [0], [1], [0, 0, 1, 1], [], []>} : vector<16x4xbf16>, vector<4x32xbf16>, vector<16x32xf32> -> vector<16x32xf32>
      %100 = arith.addf %95, %99 : vector<16x32xf32>
      %101 = vector.extract_strided_slice %97 {offsets = [0, 1], sizes = [4, 32], strides = [1, 1]} : vector<4x34xbf16> to vector<4x32xbf16>
      %cst_48 = arith.constant dense<0.000000e+00> : vector<16x32xf32>
      %102 = tpu.matmul %27, %101, %cst_48 {dimension_numbers = #tpu.dot_dimension_numbers<[1], [0], [0], [1], [0, 0, 1, 1], [], []>} : vector<16x4xbf16>, vector<4x32xbf16>, vector<16x32xf32> -> vector<16x32xf32>
      %103 = arith.addf %100, %102 : vector<16x32xf32>
      %104 = vector.extract_strided_slice %97 {offsets = [0, 2], sizes = [4, 32], strides = [1, 1]} : vector<4x34xbf16> to vector<4x32xbf16>
      %cst_49 = arith.constant dense<0.000000e+00> : vector<16x32xf32>
      %105 = tpu.matmul %29, %104, %cst_49 {dimension_numbers = #tpu.dot_dimension_numbers<[1], [0], [0], [1], [0, 0, 1, 1], [], []>} : vector<16x4xbf16>, vector<4x32xbf16>, vector<16x32xf32> -> vector<16x32xf32>
      %106 = arith.addf %103, %105 : vector<16x32xf32>
      %107 = vector.extract_strided_slice %38 {offsets = [3, 0, 0], sizes = [1, 4, 34], strides = [1, 1, 1]} : vector<10x4x34xbf16> to vector<1x4x34xbf16>
      %108 = vector.shape_cast %107 : vector<1x4x34xbf16> to vector<4x34xbf16>
      %109 = vector.extract_strided_slice %108 {offsets = [0, 0], sizes = [4, 32], strides = [1, 1]} : vector<4x34xbf16> to vector<4x32xbf16>
      %cst_50 = arith.constant dense<0.000000e+00> : vector<16x32xf32>
      %110 = tpu.matmul %31, %109, %cst_50 {dimension_numbers = #tpu.dot_dimension_numbers<[1], [0], [0], [1], [0, 0, 1, 1], [], []>} : vector<16x4xbf16>, vector<4x32xbf16>, vector<16x32xf32> -> vector<16x32xf32>
      %111 = arith.addf %106, %110 : vector<16x32xf32>
      %112 = vector.extract_strided_slice %108 {offsets = [0, 1], sizes = [4, 32], strides = [1, 1]} : vector<4x34xbf16> to vector<4x32xbf16>
      %cst_51 = arith.constant dense<0.000000e+00> : vector<16x32xf32>
      %113 = tpu.matmul %33, %112, %cst_51 {dimension_numbers = #tpu.dot_dimension_numbers<[1], [0], [0], [1], [0, 0, 1, 1], [], []>} : vector<16x4xbf16>, vector<4x32xbf16>, vector<16x32xf32> -> vector<16x32xf32>
      %114 = arith.addf %111, %113 : vector<16x32xf32>
      %115 = vector.extract_strided_slice %108 {offsets = [0, 2], sizes = [4, 32], strides = [1, 1]} : vector<4x34xbf16> to vector<4x32xbf16>
      %cst_52 = arith.constant dense<0.000000e+00> : vector<16x32xf32>
      %116 = tpu.matmul %35, %115, %cst_52 {dimension_numbers = #tpu.dot_dimension_numbers<[1], [0], [0], [1], [0, 0, 1, 1], [], []>} : vector<16x4xbf16>, vector<4x32xbf16>, vector<16x32xf32> -> vector<16x32xf32>
      %117 = arith.addf %114, %116 : vector<16x32xf32>
      %118 = arith.addf %75, %117 : vector<16x32xf32>
      %119 = arith.mulf %117, %117 : vector<16x32xf32>
      %120 = arith.addf %77, %119 : vector<16x32xf32>
      %121 = arith.truncf %117 : vector<16x32xf32> to vector<16x32xbf16>
      %c1_i32_53 = arith.constant 1 : i32
      %122 = arith.addi %1, %c1_i32_53 : i32
      %123 = arith.index_cast %122 : i32 to index
      %c0_54 = arith.constant 0 : index
      %c0_55 = arith.constant 0 : index
      %124 = vector.load %arg6[%123, %c0_54, %c0_55] : memref<16x16x32xbf16, #tpu.memory_space<vmem>>, vector<1x16x32xbf16>
      %125 = vector.shape_cast %124 : vector<1x16x32xbf16> to vector<16x32xbf16>
      %126 = vector.shape_cast %121 : vector<16x32xbf16> to vector<1x16x32xbf16>
      tpu.vector_store %arg6[%123, %c0_54, %c0_55], %126 {strides = array<i32>} : memref<16x16x32xbf16, #tpu.memory_space<vmem>>, vector<1x16x32xbf16>,
      %cst_56 = arith.constant 0.000000e+00 : f32
      %127 = vector.broadcast %cst_56 : f32 to vector<16x32xf32>
      %128 = vector.extract_strided_slice %38 {offsets = [2, 0, 0], sizes = [1, 4, 34], strides = [1, 1, 1]} : vector<10x4x34xbf16> to vector<1x4x34xbf16>
      %129 = vector.shape_cast %128 : vector<1x4x34xbf16> to vector<4x34xbf16>
      %130 = vector.extract_strided_slice %129 {offsets = [0, 0], sizes = [4, 32], strides = [1, 1]} : vector<4x34xbf16> to vector<4x32xbf16>
      %cst_57 = arith.constant dense<0.000000e+00> : vector<16x32xf32>
      %131 = tpu.matmul %19, %130, %cst_57 {dimension_numbers = #tpu.dot_dimension_numbers<[1], [0], [0], [1], [0, 0, 1, 1], [], []>} : vector<16x4xbf16>, vector<4x32xbf16>, vector<16x32xf32> -> vector<16x32xf32>
      %132 = arith.addf %127, %131 : vector<16x32xf32>
      %133 = vector.extract_strided_slice %129 {offsets = [0, 1], sizes = [4, 32], strides = [1, 1]} : vector<4x34xbf16> to vector<4x32xbf16>
      %cst_58 = arith.constant dense<0.000000e+00> : vector<16x32xf32>
      %134 = tpu.matmul %21, %133, %cst_58 {dimension_numbers = #tpu.dot_dimension_numbers<[1], [0], [0], [1], [0, 0, 1, 1], [], []>} : vector<16x4xbf16>, vector<4x32xbf16>, vector<16x32xf32> -> vector<16x32xf32>
      %135 = arith.addf %132, %134 : vector<16x32xf32>
      %136 = vector.extract_strided_slice %129 {offsets = [0, 2], sizes = [4, 32], strides = [1, 1]} : vector<4x34xbf16> to vector<4x32xbf16>
      %cst_59 = arith.constant dense<0.000000e+00> : vector<16x32xf32>
      %137 = tpu.matmul %23, %136, %cst_59 {dimension_numbers = #tpu.dot_dimension_numbers<[1], [0], [0], [1], [0, 0, 1, 1], [], []>} : vector<16x4xbf16>, vector<4x32xbf16>, vector<16x32xf32> -> vector<16x32xf32>
      %138 = arith.addf %135, %137 : vector<16x32xf32>
      %139 = vector.extract_strided_slice %38 {offsets = [3, 0, 0], sizes = [1, 4, 34], strides = [1, 1, 1]} : vector<10x4x34xbf16> to vector<1x4x34xbf16>
      %140 = vector.shape_cast %139 : vector<1x4x34xbf16> to vector<4x34xbf16>
      %141 = vector.extract_strided_slice %140 {offsets = [0, 0], sizes = [4, 32], strides = [1, 1]} : vector<4x34xbf16> to vector<4x32xbf16>
      %cst_60 = arith.constant dense<0.000000e+00> : vector<16x32xf32>
      %142 = tpu.matmul %25, %141, %cst_60 {dimension_numbers = #tpu.dot_dimension_numbers<[1], [0], [0], [1], [0, 0, 1, 1], [], []>} : vector<16x4xbf16>, vector<4x32xbf16>, vector<16x32xf32> -> vector<16x32xf32>
      %143 = arith.addf %138, %142 : vector<16x32xf32>
      %144 = vector.extract_strided_slice %140 {offsets = [0, 1], sizes = [4, 32], strides = [1, 1]} : vector<4x34xbf16> to vector<4x32xbf16>
      %cst_61 = arith.constant dense<0.000000e+00> : vector<16x32xf32>
      %145 = tpu.matmul %27, %144, %cst_61 {dimension_numbers = #tpu.dot_dimension_numbers<[1], [0], [0], [1], [0, 0, 1, 1], [], []>} : vector<16x4xbf16>, vector<4x32xbf16>, vector<16x32xf32> -> vector<16x32xf32>
      %146 = arith.addf %143, %145 : vector<16x32xf32>
      %147 = vector.extract_strided_slice %140 {offsets = [0, 2], sizes = [4, 32], strides = [1, 1]} : vector<4x34xbf16> to vector<4x32xbf16>
      %cst_62 = arith.constant dense<0.000000e+00> : vector<16x32xf32>
      %148 = tpu.matmul %29, %147, %cst_62 {dimension_numbers = #tpu.dot_dimension_numbers<[1], [0], [0], [1], [0, 0, 1, 1], [], []>} : vector<16x4xbf16>, vector<4x32xbf16>, vector<16x32xf32> -> vector<16x32xf32>
      %149 = arith.addf %146, %148 : vector<16x32xf32>
      %150 = vector.extract_strided_slice %38 {offsets = [4, 0, 0], sizes = [1, 4, 34], strides = [1, 1, 1]} : vector<10x4x34xbf16> to vector<1x4x34xbf16>
      %151 = vector.shape_cast %150 : vector<1x4x34xbf16> to vector<4x34xbf16>
      %152 = vector.extract_strided_slice %151 {offsets = [0, 0], sizes = [4, 32], strides = [1, 1]} : vector<4x34xbf16> to vector<4x32xbf16>
      %cst_63 = arith.constant dense<0.000000e+00> : vector<16x32xf32>
      %153 = tpu.matmul %31, %152, %cst_63 {dimension_numbers = #tpu.dot_dimension_numbers<[1], [0], [0], [1], [0, 0, 1, 1], [], []>} : vector<16x4xbf16>, vector<4x32xbf16>, vector<16x32xf32> -> vector<16x32xf32>
      %154 = arith.addf %149, %153 : vector<16x32xf32>
      %155 = vector.extract_strided_slice %151 {offsets = [0, 1], sizes = [4, 32], strides = [1, 1]} : vector<4x34xbf16> to vector<4x32xbf16>
      %cst_64 = arith.constant dense<0.000000e+00> : vector<16x32xf32>
      %156 = tpu.matmul %33, %155, %cst_64 {dimension_numbers = #tpu.dot_dimension_numbers<[1], [0], [0], [1], [0, 0, 1, 1], [], []>} : vector<16x4xbf16>, vector<4x32xbf16>, vector<16x32xf32> -> vector<16x32xf32>
      %157 = arith.addf %154, %156 : vector<16x32xf32>
      %158 = vector.extract_strided_slice %151 {offsets = [0, 2], sizes = [4, 32], strides = [1, 1]} : vector<4x34xbf16> to vector<4x32xbf16>
      %cst_65 = arith.constant dense<0.000000e+00> : vector<16x32xf32>
      %159 = tpu.matmul %35, %158, %cst_65 {dimension_numbers = #tpu.dot_dimension_numbers<[1], [0], [0], [1], [0, 0, 1, 1], [], []>} : vector<16x4xbf16>, vector<4x32xbf16>, vector<16x32xf32> -> vector<16x32xf32>
      %160 = arith.addf %157, %159 : vector<16x32xf32>
      %161 = arith.addf %118, %160 : vector<16x32xf32>
      %162 = arith.mulf %160, %160 : vector<16x32xf32>
      %163 = arith.addf %120, %162 : vector<16x32xf32>
      %164 = arith.truncf %160 : vector<16x32xf32> to vector<16x32xbf16>
      %c2_i32 = arith.constant 2 : i32
      %165 = arith.addi %1, %c2_i32 : i32
      %166 = arith.index_cast %165 : i32 to index
      %c0_66 = arith.constant 0 : index
      %c0_67 = arith.constant 0 : index
      %167 = vector.load %arg6[%166, %c0_66, %c0_67] : memref<16x16x32xbf16, #tpu.memory_space<vmem>>, vector<1x16x32xbf16>
      %168 = vector.shape_cast %167 : vector<1x16x32xbf16> to vector<16x32xbf16>
      %169 = vector.shape_cast %164 : vector<16x32xbf16> to vector<1x16x32xbf16>
      tpu.vector_store %arg6[%166, %c0_66, %c0_67], %169 {strides = array<i32>} : memref<16x16x32xbf16, #tpu.memory_space<vmem>>, vector<1x16x32xbf16>,
      %cst_68 = arith.constant 0.000000e+00 : f32
      %170 = vector.broadcast %cst_68 : f32 to vector<16x32xf32>
      %171 = vector.extract_strided_slice %38 {offsets = [3, 0, 0], sizes = [1, 4, 34], strides = [1, 1, 1]} : vector<10x4x34xbf16> to vector<1x4x34xbf16>
      %172 = vector.shape_cast %171 : vector<1x4x34xbf16> to vector<4x34xbf16>
      %173 = vector.extract_strided_slice %172 {offsets = [0, 0], sizes = [4, 32], strides = [1, 1]} : vector<4x34xbf16> to vector<4x32xbf16>
      %cst_69 = arith.constant dense<0.000000e+00> : vector<16x32xf32>
      %174 = tpu.matmul %19, %173, %cst_69 {dimension_numbers = #tpu.dot_dimension_numbers<[1], [0], [0], [1], [0, 0, 1, 1], [], []>} : vector<16x4xbf16>, vector<4x32xbf16>, vector<16x32xf32> -> vector<16x32xf32>
      %175 = arith.addf %170, %174 : vector<16x32xf32>
      %176 = vector.extract_strided_slice %172 {offsets = [0, 1], sizes = [4, 32], strides = [1, 1]} : vector<4x34xbf16> to vector<4x32xbf16>
      %cst_70 = arith.constant dense<0.000000e+00> : vector<16x32xf32>
      %177 = tpu.matmul %21, %176, %cst_70 {dimension_numbers = #tpu.dot_dimension_numbers<[1], [0], [0], [1], [0, 0, 1, 1], [], []>} : vector<16x4xbf16>, vector<4x32xbf16>, vector<16x32xf32> -> vector<16x32xf32>
      %178 = arith.addf %175, %177 : vector<16x32xf32>
      %179 = vector.extract_strided_slice %172 {offsets = [0, 2], sizes = [4, 32], strides = [1, 1]} : vector<4x34xbf16> to vector<4x32xbf16>
      %cst_71 = arith.constant dense<0.000000e+00> : vector<16x32xf32>
      %180 = tpu.matmul %23, %179, %cst_71 {dimension_numbers = #tpu.dot_dimension_numbers<[1], [0], [0], [1], [0, 0, 1, 1], [], []>} : vector<16x4xbf16>, vector<4x32xbf16>, vector<16x32xf32> -> vector<16x32xf32>
      %181 = arith.addf %178, %180 : vector<16x32xf32>
      %182 = vector.extract_strided_slice %38 {offsets = [4, 0, 0], sizes = [1, 4, 34], strides = [1, 1, 1]} : vector<10x4x34xbf16> to vector<1x4x34xbf16>
      %183 = vector.shape_cast %182 : vector<1x4x34xbf16> to vector<4x34xbf16>
      %184 = vector.extract_strided_slice %183 {offsets = [0, 0], sizes = [4, 32], strides = [1, 1]} : vector<4x34xbf16> to vector<4x32xbf16>
      %cst_72 = arith.constant dense<0.000000e+00> : vector<16x32xf32>
      %185 = tpu.matmul %25, %184, %cst_72 {dimension_numbers = #tpu.dot_dimension_numbers<[1], [0], [0], [1], [0, 0, 1, 1], [], []>} : vector<16x4xbf16>, vector<4x32xbf16>, vector<16x32xf32> -> vector<16x32xf32>
      %186 = arith.addf %181, %185 : vector<16x32xf32>
      %187 = vector.extract_strided_slice %183 {offsets = [0, 1], sizes = [4, 32], strides = [1, 1]} : vector<4x34xbf16> to vector<4x32xbf16>
      %cst_73 = arith.constant dense<0.000000e+00> : vector<16x32xf32>
      %188 = tpu.matmul %27, %187, %cst_73 {dimension_numbers = #tpu.dot_dimension_numbers<[1], [0], [0], [1], [0, 0, 1, 1], [], []>} : vector<16x4xbf16>, vector<4x32xbf16>, vector<16x32xf32> -> vector<16x32xf32>
      %189 = arith.addf %186, %188 : vector<16x32xf32>
      %190 = vector.extract_strided_slice %183 {offsets = [0, 2], sizes = [4, 32], strides = [1, 1]} : vector<4x34xbf16> to vector<4x32xbf16>
      %cst_74 = arith.constant dense<0.000000e+00> : vector<16x32xf32>
      %191 = tpu.matmul %29, %190, %cst_74 {dimension_numbers = #tpu.dot_dimension_numbers<[1], [0], [0], [1], [0, 0, 1, 1], [], []>} : vector<16x4xbf16>, vector<4x32xbf16>, vector<16x32xf32> -> vector<16x32xf32>
      %192 = arith.addf %189, %191 : vector<16x32xf32>
      %193 = vector.extract_strided_slice %38 {offsets = [5, 0, 0], sizes = [1, 4, 34], strides = [1, 1, 1]} : vector<10x4x34xbf16> to vector<1x4x34xbf16>
      %194 = vector.shape_cast %193 : vector<1x4x34xbf16> to vector<4x34xbf16>
      %195 = vector.extract_strided_slice %194 {offsets = [0, 0], sizes = [4, 32], strides = [1, 1]} : vector<4x34xbf16> to vector<4x32xbf16>
      %cst_75 = arith.constant dense<0.000000e+00> : vector<16x32xf32>
      %196 = tpu.matmul %31, %195, %cst_75 {dimension_numbers = #tpu.dot_dimension_numbers<[1], [0], [0], [1], [0, 0, 1, 1], [], []>} : vector<16x4xbf16>, vector<4x32xbf16>, vector<16x32xf32> -> vector<16x32xf32>
      %197 = arith.addf %192, %196 : vector<16x32xf32>
      %198 = vector.extract_strided_slice %194 {offsets = [0, 1], sizes = [4, 32], strides = [1, 1]} : vector<4x34xbf16> to vector<4x32xbf16>
      %cst_76 = arith.constant dense<0.000000e+00> : vector<16x32xf32>
      %199 = tpu.matmul %33, %198, %cst_76 {dimension_numbers = #tpu.dot_dimension_numbers<[1], [0], [0], [1], [0, 0, 1, 1], [], []>} : vector<16x4xbf16>, vector<4x32xbf16>, vector<16x32xf32> -> vector<16x32xf32>
      %200 = arith.addf %197, %199 : vector<16x32xf32>
      %201 = vector.extract_strided_slice %194 {offsets = [0, 2], sizes = [4, 32], strides = [1, 1]} : vector<4x34xbf16> to vector<4x32xbf16>
      %cst_77 = arith.constant dense<0.000000e+00> : vector<16x32xf32>
      %202 = tpu.matmul %35, %201, %cst_77 {dimension_numbers = #tpu.dot_dimension_numbers<[1], [0], [0], [1], [0, 0, 1, 1], [], []>} : vector<16x4xbf16>, vector<4x32xbf16>, vector<16x32xf32> -> vector<16x32xf32>
      %203 = arith.addf %200, %202 : vector<16x32xf32>
      %204 = arith.addf %161, %203 : vector<16x32xf32>
      %205 = arith.mulf %203, %203 : vector<16x32xf32>
      %206 = arith.addf %163, %205 : vector<16x32xf32>
      %207 = arith.truncf %203 : vector<16x32xf32> to vector<16x32xbf16>
      %c3_i32 = arith.constant 3 : i32
      %208 = arith.addi %1, %c3_i32 : i32
      %209 = arith.index_cast %208 : i32 to index
      %c0_78 = arith.constant 0 : index
      %c0_79 = arith.constant 0 : index
      %210 = vector.load %arg6[%209, %c0_78, %c0_79] : memref<16x16x32xbf16, #tpu.memory_space<vmem>>, vector<1x16x32xbf16>
      %211 = vector.shape_cast %210 : vector<1x16x32xbf16> to vector<16x32xbf16>
      %212 = vector.shape_cast %207 : vector<16x32xbf16> to vector<1x16x32xbf16>
      tpu.vector_store %arg6[%209, %c0_78, %c0_79], %212 {strides = array<i32>} : memref<16x16x32xbf16, #tpu.memory_space<vmem>>, vector<1x16x32xbf16>,
      %cst_80 = arith.constant 0.000000e+00 : f32
      %213 = vector.broadcast %cst_80 : f32 to vector<16x32xf32>
      %214 = vector.extract_strided_slice %38 {offsets = [4, 0, 0], sizes = [1, 4, 34], strides = [1, 1, 1]} : vector<10x4x34xbf16> to vector<1x4x34xbf16>
      %215 = vector.shape_cast %214 : vector<1x4x34xbf16> to vector<4x34xbf16>
      %216 = vector.extract_strided_slice %215 {offsets = [0, 0], sizes = [4, 32], strides = [1, 1]} : vector<4x34xbf16> to vector<4x32xbf16>
      %cst_81 = arith.constant dense<0.000000e+00> : vector<16x32xf32>
      %217 = tpu.matmul %19, %216, %cst_81 {dimension_numbers = #tpu.dot_dimension_numbers<[1], [0], [0], [1], [0, 0, 1, 1], [], []>} : vector<16x4xbf16>, vector<4x32xbf16>, vector<16x32xf32> -> vector<16x32xf32>
      %218 = arith.addf %213, %217 : vector<16x32xf32>
      %219 = vector.extract_strided_slice %215 {offsets = [0, 1], sizes = [4, 32], strides = [1, 1]} : vector<4x34xbf16> to vector<4x32xbf16>
      %cst_82 = arith.constant dense<0.000000e+00> : vector<16x32xf32>
      %220 = tpu.matmul %21, %219, %cst_82 {dimension_numbers = #tpu.dot_dimension_numbers<[1], [0], [0], [1], [0, 0, 1, 1], [], []>} : vector<16x4xbf16>, vector<4x32xbf16>, vector<16x32xf32> -> vector<16x32xf32>
      %221 = arith.addf %218, %220 : vector<16x32xf32>
      %222 = vector.extract_strided_slice %215 {offsets = [0, 2], sizes = [4, 32], strides = [1, 1]} : vector<4x34xbf16> to vector<4x32xbf16>
      %cst_83 = arith.constant dense<0.000000e+00> : vector<16x32xf32>
      %223 = tpu.matmul %23, %222, %cst_83 {dimension_numbers = #tpu.dot_dimension_numbers<[1], [0], [0], [1], [0, 0, 1, 1], [], []>} : vector<16x4xbf16>, vector<4x32xbf16>, vector<16x32xf32> -> vector<16x32xf32>
      %224 = arith.addf %221, %223 : vector<16x32xf32>
      %225 = vector.extract_strided_slice %38 {offsets = [5, 0, 0], sizes = [1, 4, 34], strides = [1, 1, 1]} : vector<10x4x34xbf16> to vector<1x4x34xbf16>
      %226 = vector.shape_cast %225 : vector<1x4x34xbf16> to vector<4x34xbf16>
      %227 = vector.extract_strided_slice %226 {offsets = [0, 0], sizes = [4, 32], strides = [1, 1]} : vector<4x34xbf16> to vector<4x32xbf16>
      %cst_84 = arith.constant dense<0.000000e+00> : vector<16x32xf32>
      %228 = tpu.matmul %25, %227, %cst_84 {dimension_numbers = #tpu.dot_dimension_numbers<[1], [0], [0], [1], [0, 0, 1, 1], [], []>} : vector<16x4xbf16>, vector<4x32xbf16>, vector<16x32xf32> -> vector<16x32xf32>
      %229 = arith.addf %224, %228 : vector<16x32xf32>
      %230 = vector.extract_strided_slice %226 {offsets = [0, 1], sizes = [4, 32], strides = [1, 1]} : vector<4x34xbf16> to vector<4x32xbf16>
      %cst_85 = arith.constant dense<0.000000e+00> : vector<16x32xf32>
      %231 = tpu.matmul %27, %230, %cst_85 {dimension_numbers = #tpu.dot_dimension_numbers<[1], [0], [0], [1], [0, 0, 1, 1], [], []>} : vector<16x4xbf16>, vector<4x32xbf16>, vector<16x32xf32> -> vector<16x32xf32>
      %232 = arith.addf %229, %231 : vector<16x32xf32>
      %233 = vector.extract_strided_slice %226 {offsets = [0, 2], sizes = [4, 32], strides = [1, 1]} : vector<4x34xbf16> to vector<4x32xbf16>
      %cst_86 = arith.constant dense<0.000000e+00> : vector<16x32xf32>
      %234 = tpu.matmul %29, %233, %cst_86 {dimension_numbers = #tpu.dot_dimension_numbers<[1], [0], [0], [1], [0, 0, 1, 1], [], []>} : vector<16x4xbf16>, vector<4x32xbf16>, vector<16x32xf32> -> vector<16x32xf32>
      %235 = arith.addf %232, %234 : vector<16x32xf32>
      %236 = vector.extract_strided_slice %38 {offsets = [6, 0, 0], sizes = [1, 4, 34], strides = [1, 1, 1]} : vector<10x4x34xbf16> to vector<1x4x34xbf16>
      %237 = vector.shape_cast %236 : vector<1x4x34xbf16> to vector<4x34xbf16>
      %238 = vector.extract_strided_slice %237 {offsets = [0, 0], sizes = [4, 32], strides = [1, 1]} : vector<4x34xbf16> to vector<4x32xbf16>
      %cst_87 = arith.constant dense<0.000000e+00> : vector<16x32xf32>
      %239 = tpu.matmul %31, %238, %cst_87 {dimension_numbers = #tpu.dot_dimension_numbers<[1], [0], [0], [1], [0, 0, 1, 1], [], []>} : vector<16x4xbf16>, vector<4x32xbf16>, vector<16x32xf32> -> vector<16x32xf32>
      %240 = arith.addf %235, %239 : vector<16x32xf32>
      %241 = vector.extract_strided_slice %237 {offsets = [0, 1], sizes = [4, 32], strides = [1, 1]} : vector<4x34xbf16> to vector<4x32xbf16>
      %cst_88 = arith.constant dense<0.000000e+00> : vector<16x32xf32>
      %242 = tpu.matmul %33, %241, %cst_88 {dimension_numbers = #tpu.dot_dimension_numbers<[1], [0], [0], [1], [0, 0, 1, 1], [], []>} : vector<16x4xbf16>, vector<4x32xbf16>, vector<16x32xf32> -> vector<16x32xf32>
      %243 = arith.addf %240, %242 : vector<16x32xf32>
      %244 = vector.extract_strided_slice %237 {offsets = [0, 2], sizes = [4, 32], strides = [1, 1]} : vector<4x34xbf16> to vector<4x32xbf16>
      %cst_89 = arith.constant dense<0.000000e+00> : vector<16x32xf32>
      %245 = tpu.matmul %35, %244, %cst_89 {dimension_numbers = #tpu.dot_dimension_numbers<[1], [0], [0], [1], [0, 0, 1, 1], [], []>} : vector<16x4xbf16>, vector<4x32xbf16>, vector<16x32xf32> -> vector<16x32xf32>
      %246 = arith.addf %243, %245 : vector<16x32xf32>
      %247 = arith.addf %204, %246 : vector<16x32xf32>
      %248 = arith.mulf %246, %246 : vector<16x32xf32>
      %249 = arith.addf %206, %248 : vector<16x32xf32>
      %250 = arith.truncf %246 : vector<16x32xf32> to vector<16x32xbf16>
      %c4_i32 = arith.constant 4 : i32
      %251 = arith.addi %1, %c4_i32 : i32
      %252 = arith.index_cast %251 : i32 to index
      %c0_90 = arith.constant 0 : index
      %c0_91 = arith.constant 0 : index
      %253 = vector.load %arg6[%252, %c0_90, %c0_91] : memref<16x16x32xbf16, #tpu.memory_space<vmem>>, vector<1x16x32xbf16>
      %254 = vector.shape_cast %253 : vector<1x16x32xbf16> to vector<16x32xbf16>
      %255 = vector.shape_cast %250 : vector<16x32xbf16> to vector<1x16x32xbf16>
      tpu.vector_store %arg6[%252, %c0_90, %c0_91], %255 {strides = array<i32>} : memref<16x16x32xbf16, #tpu.memory_space<vmem>>, vector<1x16x32xbf16>,
      %cst_92 = arith.constant 0.000000e+00 : f32
      %256 = vector.broadcast %cst_92 : f32 to vector<16x32xf32>
      %257 = vector.extract_strided_slice %38 {offsets = [5, 0, 0], sizes = [1, 4, 34], strides = [1, 1, 1]} : vector<10x4x34xbf16> to vector<1x4x34xbf16>
      %258 = vector.shape_cast %257 : vector<1x4x34xbf16> to vector<4x34xbf16>
      %259 = vector.extract_strided_slice %258 {offsets = [0, 0], sizes = [4, 32], strides = [1, 1]} : vector<4x34xbf16> to vector<4x32xbf16>
      %cst_93 = arith.constant dense<0.000000e+00> : vector<16x32xf32>
      %260 = tpu.matmul %19, %259, %cst_93 {dimension_numbers = #tpu.dot_dimension_numbers<[1], [0], [0], [1], [0, 0, 1, 1], [], []>} : vector<16x4xbf16>, vector<4x32xbf16>, vector<16x32xf32> -> vector<16x32xf32>
      %261 = arith.addf %256, %260 : vector<16x32xf32>
      %262 = vector.extract_strided_slice %258 {offsets = [0, 1], sizes = [4, 32], strides = [1, 1]} : vector<4x34xbf16> to vector<4x32xbf16>
      %cst_94 = arith.constant dense<0.000000e+00> : vector<16x32xf32>
      %263 = tpu.matmul %21, %262, %cst_94 {dimension_numbers = #tpu.dot_dimension_numbers<[1], [0], [0], [1], [0, 0, 1, 1], [], []>} : vector<16x4xbf16>, vector<4x32xbf16>, vector<16x32xf32> -> vector<16x32xf32>
      %264 = arith.addf %261, %263 : vector<16x32xf32>
      %265 = vector.extract_strided_slice %258 {offsets = [0, 2], sizes = [4, 32], strides = [1, 1]} : vector<4x34xbf16> to vector<4x32xbf16>
      %cst_95 = arith.constant dense<0.000000e+00> : vector<16x32xf32>
      %266 = tpu.matmul %23, %265, %cst_95 {dimension_numbers = #tpu.dot_dimension_numbers<[1], [0], [0], [1], [0, 0, 1, 1], [], []>} : vector<16x4xbf16>, vector<4x32xbf16>, vector<16x32xf32> -> vector<16x32xf32>
      %267 = arith.addf %264, %266 : vector<16x32xf32>
      %268 = vector.extract_strided_slice %38 {offsets = [6, 0, 0], sizes = [1, 4, 34], strides = [1, 1, 1]} : vector<10x4x34xbf16> to vector<1x4x34xbf16>
      %269 = vector.shape_cast %268 : vector<1x4x34xbf16> to vector<4x34xbf16>
      %270 = vector.extract_strided_slice %269 {offsets = [0, 0], sizes = [4, 32], strides = [1, 1]} : vector<4x34xbf16> to vector<4x32xbf16>
      %cst_96 = arith.constant dense<0.000000e+00> : vector<16x32xf32>
      %271 = tpu.matmul %25, %270, %cst_96 {dimension_numbers = #tpu.dot_dimension_numbers<[1], [0], [0], [1], [0, 0, 1, 1], [], []>} : vector<16x4xbf16>, vector<4x32xbf16>, vector<16x32xf32> -> vector<16x32xf32>
      %272 = arith.addf %267, %271 : vector<16x32xf32>
      %273 = vector.extract_strided_slice %269 {offsets = [0, 1], sizes = [4, 32], strides = [1, 1]} : vector<4x34xbf16> to vector<4x32xbf16>
      %cst_97 = arith.constant dense<0.000000e+00> : vector<16x32xf32>
      %274 = tpu.matmul %27, %273, %cst_97 {dimension_numbers = #tpu.dot_dimension_numbers<[1], [0], [0], [1], [0, 0, 1, 1], [], []>} : vector<16x4xbf16>, vector<4x32xbf16>, vector<16x32xf32> -> vector<16x32xf32>
      %275 = arith.addf %272, %274 : vector<16x32xf32>
      %276 = vector.extract_strided_slice %269 {offsets = [0, 2], sizes = [4, 32], strides = [1, 1]} : vector<4x34xbf16> to vector<4x32xbf16>
      %cst_98 = arith.constant dense<0.000000e+00> : vector<16x32xf32>
      %277 = tpu.matmul %29, %276, %cst_98 {dimension_numbers = #tpu.dot_dimension_numbers<[1], [0], [0], [1], [0, 0, 1, 1], [], []>} : vector<16x4xbf16>, vector<4x32xbf16>, vector<16x32xf32> -> vector<16x32xf32>
      %278 = arith.addf %275, %277 : vector<16x32xf32>
      %279 = vector.extract_strided_slice %38 {offsets = [7, 0, 0], sizes = [1, 4, 34], strides = [1, 1, 1]} : vector<10x4x34xbf16> to vector<1x4x34xbf16>
      %280 = vector.shape_cast %279 : vector<1x4x34xbf16> to vector<4x34xbf16>
      %281 = vector.extract_strided_slice %280 {offsets = [0, 0], sizes = [4, 32], strides = [1, 1]} : vector<4x34xbf16> to vector<4x32xbf16>
      %cst_99 = arith.constant dense<0.000000e+00> : vector<16x32xf32>
      %282 = tpu.matmul %31, %281, %cst_99 {dimension_numbers = #tpu.dot_dimension_numbers<[1], [0], [0], [1], [0, 0, 1, 1], [], []>} : vector<16x4xbf16>, vector<4x32xbf16>, vector<16x32xf32> -> vector<16x32xf32>
      %283 = arith.addf %278, %282 : vector<16x32xf32>
      %284 = vector.extract_strided_slice %280 {offsets = [0, 1], sizes = [4, 32], strides = [1, 1]} : vector<4x34xbf16> to vector<4x32xbf16>
      %cst_100 = arith.constant dense<0.000000e+00> : vector<16x32xf32>
      %285 = tpu.matmul %33, %284, %cst_100 {dimension_numbers = #tpu.dot_dimension_numbers<[1], [0], [0], [1], [0, 0, 1, 1], [], []>} : vector<16x4xbf16>, vector<4x32xbf16>, vector<16x32xf32> -> vector<16x32xf32>
      %286 = arith.addf %283, %285 : vector<16x32xf32>
      %287 = vector.extract_strided_slice %280 {offsets = [0, 2], sizes = [4, 32], strides = [1, 1]} : vector<4x34xbf16> to vector<4x32xbf16>
      %cst_101 = arith.constant dense<0.000000e+00> : vector<16x32xf32>
      %288 = tpu.matmul %35, %287, %cst_101 {dimension_numbers = #tpu.dot_dimension_numbers<[1], [0], [0], [1], [0, 0, 1, 1], [], []>} : vector<16x4xbf16>, vector<4x32xbf16>, vector<16x32xf32> -> vector<16x32xf32>
      %289 = arith.addf %286, %288 : vector<16x32xf32>
      %290 = arith.addf %247, %289 : vector<16x32xf32>
      %291 = arith.mulf %289, %289 : vector<16x32xf32>
      %292 = arith.addf %249, %291 : vector<16x32xf32>
      %293 = arith.truncf %289 : vector<16x32xf32> to vector<16x32xbf16>
      %c5_i32 = arith.constant 5 : i32
      %294 = arith.addi %1, %c5_i32 : i32
      %295 = arith.index_cast %294 : i32 to index
      %c0_102 = arith.constant 0 : index
      %c0_103 = arith.constant 0 : index
      %296 = vector.load %arg6[%295, %c0_102, %c0_103] : memref<16x16x32xbf16, #tpu.memory_space<vmem>>, vector<1x16x32xbf16>
      %297 = vector.shape_cast %296 : vector<1x16x32xbf16> to vector<16x32xbf16>
      %298 = vector.shape_cast %293 : vector<16x32xbf16> to vector<1x16x32xbf16>
      tpu.vector_store %arg6[%295, %c0_102, %c0_103], %298 {strides = array<i32>} : memref<16x16x32xbf16, #tpu.memory_space<vmem>>, vector<1x16x32xbf16>,
      %cst_104 = arith.constant 0.000000e+00 : f32
      %299 = vector.broadcast %cst_104 : f32 to vector<16x32xf32>
      %300 = vector.extract_strided_slice %38 {offsets = [6, 0, 0], sizes = [1, 4, 34], strides = [1, 1, 1]} : vector<10x4x34xbf16> to vector<1x4x34xbf16>
      %301 = vector.shape_cast %300 : vector<1x4x34xbf16> to vector<4x34xbf16>
      %302 = vector.extract_strided_slice %301 {offsets = [0, 0], sizes = [4, 32], strides = [1, 1]} : vector<4x34xbf16> to vector<4x32xbf16>
      %cst_105 = arith.constant dense<0.000000e+00> : vector<16x32xf32>
      %303 = tpu.matmul %19, %302, %cst_105 {dimension_numbers = #tpu.dot_dimension_numbers<[1], [0], [0], [1], [0, 0, 1, 1], [], []>} : vector<16x4xbf16>, vector<4x32xbf16>, vector<16x32xf32> -> vector<16x32xf32>
      %304 = arith.addf %299, %303 : vector<16x32xf32>
      %305 = vector.extract_strided_slice %301 {offsets = [0, 1], sizes = [4, 32], strides = [1, 1]} : vector<4x34xbf16> to vector<4x32xbf16>
      %cst_106 = arith.constant dense<0.000000e+00> : vector<16x32xf32>
      %306 = tpu.matmul %21, %305, %cst_106 {dimension_numbers = #tpu.dot_dimension_numbers<[1], [0], [0], [1], [0, 0, 1, 1], [], []>} : vector<16x4xbf16>, vector<4x32xbf16>, vector<16x32xf32> -> vector<16x32xf32>
      %307 = arith.addf %304, %306 : vector<16x32xf32>
      %308 = vector.extract_strided_slice %301 {offsets = [0, 2], sizes = [4, 32], strides = [1, 1]} : vector<4x34xbf16> to vector<4x32xbf16>
      %cst_107 = arith.constant dense<0.000000e+00> : vector<16x32xf32>
      %309 = tpu.matmul %23, %308, %cst_107 {dimension_numbers = #tpu.dot_dimension_numbers<[1], [0], [0], [1], [0, 0, 1, 1], [], []>} : vector<16x4xbf16>, vector<4x32xbf16>, vector<16x32xf32> -> vector<16x32xf32>
      %310 = arith.addf %307, %309 : vector<16x32xf32>
      %311 = vector.extract_strided_slice %38 {offsets = [7, 0, 0], sizes = [1, 4, 34], strides = [1, 1, 1]} : vector<10x4x34xbf16> to vector<1x4x34xbf16>
      %312 = vector.shape_cast %311 : vector<1x4x34xbf16> to vector<4x34xbf16>
      %313 = vector.extract_strided_slice %312 {offsets = [0, 0], sizes = [4, 32], strides = [1, 1]} : vector<4x34xbf16> to vector<4x32xbf16>
      %cst_108 = arith.constant dense<0.000000e+00> : vector<16x32xf32>
      %314 = tpu.matmul %25, %313, %cst_108 {dimension_numbers = #tpu.dot_dimension_numbers<[1], [0], [0], [1], [0, 0, 1, 1], [], []>} : vector<16x4xbf16>, vector<4x32xbf16>, vector<16x32xf32> -> vector<16x32xf32>
      %315 = arith.addf %310, %314 : vector<16x32xf32>
      %316 = vector.extract_strided_slice %312 {offsets = [0, 1], sizes = [4, 32], strides = [1, 1]} : vector<4x34xbf16> to vector<4x32xbf16>
      %cst_109 = arith.constant dense<0.000000e+00> : vector<16x32xf32>
      %317 = tpu.matmul %27, %316, %cst_109 {dimension_numbers = #tpu.dot_dimension_numbers<[1], [0], [0], [1], [0, 0, 1, 1], [], []>} : vector<16x4xbf16>, vector<4x32xbf16>, vector<16x32xf32> -> vector<16x32xf32>
      %318 = arith.addf %315, %317 : vector<16x32xf32>
      %319 = vector.extract_strided_slice %312 {offsets = [0, 2], sizes = [4, 32], strides = [1, 1]} : vector<4x34xbf16> to vector<4x32xbf16>
      %cst_110 = arith.constant dense<0.000000e+00> : vector<16x32xf32>
      %320 = tpu.matmul %29, %319, %cst_110 {dimension_numbers = #tpu.dot_dimension_numbers<[1], [0], [0], [1], [0, 0, 1, 1], [], []>} : vector<16x4xbf16>, vector<4x32xbf16>, vector<16x32xf32> -> vector<16x32xf32>
      %321 = arith.addf %318, %320 : vector<16x32xf32>
      %322 = vector.extract_strided_slice %38 {offsets = [8, 0, 0], sizes = [1, 4, 34], strides = [1, 1, 1]} : vector<10x4x34xbf16> to vector<1x4x34xbf16>
      %323 = vector.shape_cast %322 : vector<1x4x34xbf16> to vector<4x34xbf16>
      %324 = vector.extract_strided_slice %323 {offsets = [0, 0], sizes = [4, 32], strides = [1, 1]} : vector<4x34xbf16> to vector<4x32xbf16>
      %cst_111 = arith.constant dense<0.000000e+00> : vector<16x32xf32>
      %325 = tpu.matmul %31, %324, %cst_111 {dimension_numbers = #tpu.dot_dimension_numbers<[1], [0], [0], [1], [0, 0, 1, 1], [], []>} : vector<16x4xbf16>, vector<4x32xbf16>, vector<16x32xf32> -> vector<16x32xf32>
      %326 = arith.addf %321, %325 : vector<16x32xf32>
      %327 = vector.extract_strided_slice %323 {offsets = [0, 1], sizes = [4, 32], strides = [1, 1]} : vector<4x34xbf16> to vector<4x32xbf16>
      %cst_112 = arith.constant dense<0.000000e+00> : vector<16x32xf32>
      %328 = tpu.matmul %33, %327, %cst_112 {dimension_numbers = #tpu.dot_dimension_numbers<[1], [0], [0], [1], [0, 0, 1, 1], [], []>} : vector<16x4xbf16>, vector<4x32xbf16>, vector<16x32xf32> -> vector<16x32xf32>
      %329 = arith.addf %326, %328 : vector<16x32xf32>
      %330 = vector.extract_strided_slice %323 {offsets = [0, 2], sizes = [4, 32], strides = [1, 1]} : vector<4x34xbf16> to vector<4x32xbf16>
      %cst_113 = arith.constant dense<0.000000e+00> : vector<16x32xf32>
      %331 = tpu.matmul %35, %330, %cst_113 {dimension_numbers = #tpu.dot_dimension_numbers<[1], [0], [0], [1], [0, 0, 1, 1], [], []>} : vector<16x4xbf16>, vector<4x32xbf16>, vector<16x32xf32> -> vector<16x32xf32>
      %332 = arith.addf %329, %331 : vector<16x32xf32>
      %333 = arith.addf %290, %332 : vector<16x32xf32>
      %334 = arith.mulf %332, %332 : vector<16x32xf32>
      %335 = arith.addf %292, %334 : vector<16x32xf32>
      %336 = arith.truncf %332 : vector<16x32xf32> to vector<16x32xbf16>
      %c6_i32 = arith.constant 6 : i32
      %337 = arith.addi %1, %c6_i32 : i32
      %338 = arith.index_cast %337 : i32 to index
      %c0_114 = arith.constant 0 : index
      %c0_115 = arith.constant 0 : index
      %339 = vector.load %arg6[%338, %c0_114, %c0_115] : memref<16x16x32xbf16, #tpu.memory_space<vmem>>, vector<1x16x32xbf16>
      %340 = vector.shape_cast %339 : vector<1x16x32xbf16> to vector<16x32xbf16>
      %341 = vector.shape_cast %336 : vector<16x32xbf16> to vector<1x16x32xbf16>
      tpu.vector_store %arg6[%338, %c0_114, %c0_115], %341 {strides = array<i32>} : memref<16x16x32xbf16, #tpu.memory_space<vmem>>, vector<1x16x32xbf16>,
      %cst_116 = arith.constant 0.000000e+00 : f32
      %342 = vector.broadcast %cst_116 : f32 to vector<16x32xf32>
      %343 = vector.extract_strided_slice %38 {offsets = [7, 0, 0], sizes = [1, 4, 34], strides = [1, 1, 1]} : vector<10x4x34xbf16> to vector<1x4x34xbf16>
      %344 = vector.shape_cast %343 : vector<1x4x34xbf16> to vector<4x34xbf16>
      %345 = vector.extract_strided_slice %344 {offsets = [0, 0], sizes = [4, 32], strides = [1, 1]} : vector<4x34xbf16> to vector<4x32xbf16>
      %cst_117 = arith.constant dense<0.000000e+00> : vector<16x32xf32>
      %346 = tpu.matmul %19, %345, %cst_117 {dimension_numbers = #tpu.dot_dimension_numbers<[1], [0], [0], [1], [0, 0, 1, 1], [], []>} : vector<16x4xbf16>, vector<4x32xbf16>, vector<16x32xf32> -> vector<16x32xf32>
      %347 = arith.addf %342, %346 : vector<16x32xf32>
      %348 = vector.extract_strided_slice %344 {offsets = [0, 1], sizes = [4, 32], strides = [1, 1]} : vector<4x34xbf16> to vector<4x32xbf16>
      %cst_118 = arith.constant dense<0.000000e+00> : vector<16x32xf32>
      %349 = tpu.matmul %21, %348, %cst_118 {dimension_numbers = #tpu.dot_dimension_numbers<[1], [0], [0], [1], [0, 0, 1, 1], [], []>} : vector<16x4xbf16>, vector<4x32xbf16>, vector<16x32xf32> -> vector<16x32xf32>
      %350 = arith.addf %347, %349 : vector<16x32xf32>
      %351 = vector.extract_strided_slice %344 {offsets = [0, 2], sizes = [4, 32], strides = [1, 1]} : vector<4x34xbf16> to vector<4x32xbf16>
      %cst_119 = arith.constant dense<0.000000e+00> : vector<16x32xf32>
      %352 = tpu.matmul %23, %351, %cst_119 {dimension_numbers = #tpu.dot_dimension_numbers<[1], [0], [0], [1], [0, 0, 1, 1], [], []>} : vector<16x4xbf16>, vector<4x32xbf16>, vector<16x32xf32> -> vector<16x32xf32>
      %353 = arith.addf %350, %352 : vector<16x32xf32>
      %354 = vector.extract_strided_slice %38 {offsets = [8, 0, 0], sizes = [1, 4, 34], strides = [1, 1, 1]} : vector<10x4x34xbf16> to vector<1x4x34xbf16>
      %355 = vector.shape_cast %354 : vector<1x4x34xbf16> to vector<4x34xbf16>
      %356 = vector.extract_strided_slice %355 {offsets = [0, 0], sizes = [4, 32], strides = [1, 1]} : vector<4x34xbf16> to vector<4x32xbf16>
      %cst_120 = arith.constant dense<0.000000e+00> : vector<16x32xf32>
      %357 = tpu.matmul %25, %356, %cst_120 {dimension_numbers = #tpu.dot_dimension_numbers<[1], [0], [0], [1], [0, 0, 1, 1], [], []>} : vector<16x4xbf16>, vector<4x32xbf16>, vector<16x32xf32> -> vector<16x32xf32>
      %358 = arith.addf %353, %357 : vector<16x32xf32>
      %359 = vector.extract_strided_slice %355 {offsets = [0, 1], sizes = [4, 32], strides = [1, 1]} : vector<4x34xbf16> to vector<4x32xbf16>
      %cst_121 = arith.constant dense<0.000000e+00> : vector<16x32xf32>
      %360 = tpu.matmul %27, %359, %cst_121 {dimension_numbers = #tpu.dot_dimension_numbers<[1], [0], [0], [1], [0, 0, 1, 1], [], []>} : vector<16x4xbf16>, vector<4x32xbf16>, vector<16x32xf32> -> vector<16x32xf32>
      %361 = arith.addf %358, %360 : vector<16x32xf32>
      %362 = vector.extract_strided_slice %355 {offsets = [0, 2], sizes = [4, 32], strides = [1, 1]} : vector<4x34xbf16> to vector<4x32xbf16>
      %cst_122 = arith.constant dense<0.000000e+00> : vector<16x32xf32>
      %363 = tpu.matmul %29, %362, %cst_122 {dimension_numbers = #tpu.dot_dimension_numbers<[1], [0], [0], [1], [0, 0, 1, 1], [], []>} : vector<16x4xbf16>, vector<4x32xbf16>, vector<16x32xf32> -> vector<16x32xf32>
      %364 = arith.addf %361, %363 : vector<16x32xf32>
      %365 = vector.extract_strided_slice %38 {offsets = [9, 0, 0], sizes = [1, 4, 34], strides = [1, 1, 1]} : vector<10x4x34xbf16> to vector<1x4x34xbf16>
      %366 = vector.shape_cast %365 : vector<1x4x34xbf16> to vector<4x34xbf16>
      %367 = vector.extract_strided_slice %366 {offsets = [0, 0], sizes = [4, 32], strides = [1, 1]} : vector<4x34xbf16> to vector<4x32xbf16>
      %cst_123 = arith.constant dense<0.000000e+00> : vector<16x32xf32>
      %368 = tpu.matmul %31, %367, %cst_123 {dimension_numbers = #tpu.dot_dimension_numbers<[1], [0], [0], [1], [0, 0, 1, 1], [], []>} : vector<16x4xbf16>, vector<4x32xbf16>, vector<16x32xf32> -> vector<16x32xf32>
      %369 = arith.addf %364, %368 : vector<16x32xf32>
      %370 = vector.extract_strided_slice %366 {offsets = [0, 1], sizes = [4, 32], strides = [1, 1]} : vector<4x34xbf16> to vector<4x32xbf16>
      %cst_124 = arith.constant dense<0.000000e+00> : vector<16x32xf32>
      %371 = tpu.matmul %33, %370, %cst_124 {dimension_numbers = #tpu.dot_dimension_numbers<[1], [0], [0], [1], [0, 0, 1, 1], [], []>} : vector<16x4xbf16>, vector<4x32xbf16>, vector<16x32xf32> -> vector<16x32xf32>
      %372 = arith.addf %369, %371 : vector<16x32xf32>
      %373 = vector.extract_strided_slice %366 {offsets = [0, 2], sizes = [4, 32], strides = [1, 1]} : vector<4x34xbf16> to vector<4x32xbf16>
      %cst_125 = arith.constant dense<0.000000e+00> : vector<16x32xf32>
      %374 = tpu.matmul %35, %373, %cst_125 {dimension_numbers = #tpu.dot_dimension_numbers<[1], [0], [0], [1], [0, 0, 1, 1], [], []>} : vector<16x4xbf16>, vector<4x32xbf16>, vector<16x32xf32> -> vector<16x32xf32>
      %375 = arith.addf %372, %374 : vector<16x32xf32>
      %376 = arith.addf %333, %375 : vector<16x32xf32>
      %377 = arith.mulf %375, %375 : vector<16x32xf32>
      %378 = arith.addf %335, %377 : vector<16x32xf32>
      %379 = arith.truncf %375 : vector<16x32xf32> to vector<16x32xbf16>
      %c7_i32 = arith.constant 7 : i32
      %380 = arith.addi %1, %c7_i32 : i32
      %381 = arith.index_cast %380 : i32 to index
      %c0_126 = arith.constant 0 : index
      %c0_127 = arith.constant 0 : index
      %382 = vector.load %arg6[%381, %c0_126, %c0_127] : memref<16x16x32xbf16, #tpu.memory_space<vmem>>, vector<1x16x32xbf16>
      %383 = vector.shape_cast %382 : vector<1x16x32xbf16> to vector<16x32xbf16>
      %384 = vector.shape_cast %379 : vector<16x32xbf16> to vector<1x16x32xbf16>
      tpu.vector_store %arg6[%381, %c0_126, %c0_127], %384 {strides = array<i32>} : memref<16x16x32xbf16, #tpu.memory_space<vmem>>, vector<1x16x32xbf16>,
      %c0_128 = arith.constant 0 : index
      %c0_129 = arith.constant 0 : index
      %385 = vector.load %arg7[%c0_128, %c0_129] : memref<16x32xf32, #tpu.memory_space<vmem>>, vector<16x32xf32>
      %386 = arith.addf %385, %376 : vector<16x32xf32>
      %c0_130 = arith.constant 0 : index
      %c0_131 = arith.constant 0 : index
      %387 = vector.load %arg7[%c0_130, %c0_131] : memref<16x32xf32, #tpu.memory_space<vmem>>, vector<16x32xf32>
      tpu.vector_store %arg7[%c0_130, %c0_131], %386 {strides = array<i32>} : memref<16x32xf32, #tpu.memory_space<vmem>>, vector<16x32xf32>,
      %c0_132 = arith.constant 0 : index
      %c0_133 = arith.constant 0 : index
      %388 = vector.load %arg8[%c0_132, %c0_133] : memref<16x32xf32, #tpu.memory_space<vmem>>, vector<16x32xf32>
      %389 = arith.addf %388, %378 : vector<16x32xf32>
      %c0_134 = arith.constant 0 : index
      %c0_135 = arith.constant 0 : index
      %390 = vector.load %arg8[%c0_134, %c0_135] : memref<16x32xf32, #tpu.memory_space<vmem>>, vector<16x32xf32>
      tpu.vector_store %arg8[%c0_134, %c0_135], %389 {strides = array<i32>} : memref<16x32xf32, #tpu.memory_space<vmem>>, vector<16x32xf32>,
    } else {
    }
    %c1_i32 = arith.constant 1 : i32
    %10 = arith.cmpi eq, %arg1, %c1_i32 : i32
    %c0_i32_4 = arith.constant 0 : i32
    %11 = arith.cmpi eq, %arg2, %c0_i32_4 : i32
    %12 = arith.andi %10, %11 : i1
    %13 = arith.extui %12 : i1 to i32
    %c0_i32_5 = arith.constant 0 : i32
    %14 = arith.cmpi ne, %13, %c0_i32_5 : i32
    scf.if %14 {
      %c0 = arith.constant 0 : index
      %c0_8 = arith.constant 0 : index
      %18 = vector.load %arg7[%c0, %c0_8] : memref<16x32xf32, #tpu.memory_space<vmem>>, vector<16x32xf32>
      %cst = arith.constant dense<0.000000e+00> : vector<16xf32>
      %19 = vector.multi_reduction <add>, %18, %cst [1] : vector<16x32xf32> to vector<16xf32>
      %20 = vector.shape_cast %19 : vector<16xf32> to vector<16x1xf32>
      %c0_9 = arith.constant 0 : index
      %c0_10 = arith.constant 0 : index
      %21 = vector.load %arg8[%c0_9, %c0_10] : memref<16x32xf32, #tpu.memory_space<vmem>>, vector<16x32xf32>
      %cst_11 = arith.constant dense<0.000000e+00> : vector<16xf32>
      %22 = vector.multi_reduction <add>, %21, %cst_11 [1] : vector<16x32xf32> to vector<16xf32>
      %23 = vector.shape_cast %22 : vector<16xf32> to vector<16x1xf32>
      %24 = vector.extract_strided_slice %20 {offsets = [0, 0], sizes = [8, 1], strides = [1, 1]} : vector<16x1xf32> to vector<8x1xf32>
      %25 = vector.extract_strided_slice %20 {offsets = [8, 0], sizes = [8, 1], strides = [1, 1]} : vector<16x1xf32> to vector<8x1xf32>
      %26 = arith.addf %24, %25 : vector<8x1xf32>
      %27 = vector.extract_strided_slice %23 {offsets = [0, 0], sizes = [8, 1], strides = [1, 1]} : vector<16x1xf32> to vector<8x1xf32>
      %28 = vector.extract_strided_slice %23 {offsets = [8, 0], sizes = [8, 1], strides = [1, 1]} : vector<16x1xf32> to vector<8x1xf32>
      %29 = arith.addf %27, %28 : vector<8x1xf32>
      %cst_12 = arith.constant 1.024000e+03 : f32
      %30 = vector.broadcast %cst_12 : f32 to vector<8x1xf32>
      %31 = arith.divf %26, %30 : vector<8x1xf32>
      %cst_13 = arith.constant 1.024000e+03 : f32
      %32 = vector.broadcast %cst_13 : f32 to vector<8x1xf32>
      %33 = arith.divf %29, %32 : vector<8x1xf32>
      %34 = arith.mulf %31, %31 : vector<8x1xf32>
      %35 = arith.subf %33, %34 : vector<8x1xf32>
      %cst_14 = arith.constant 0.000000e+00 : f32
      %36 = vector.broadcast %cst_14 : f32 to vector<8x1xf32>
      %37 = arith.maximumf %35, %36 : vector<8x1xf32>
      %cst_15 = arith.constant 9.99999974E-6 : f32
      %38 = vector.broadcast %cst_15 : f32 to vector<8x1xf32>
      %39 = arith.addf %37, %38 : vector<8x1xf32>
      %40 = math.rsqrt %39 : vector<8x1xf32>
      %41 = tpu.concatenate %31, %31 in 0 : vector<8x1xf32>, vector<8x1xf32> -> vector<16x1xf32>
      %c0_16 = arith.constant 0 : index
      %c0_17 = arith.constant 0 : index
      %42 = vector.load %arg9[%c0_16, %c0_17] : memref<16x1xf32, #tpu.memory_space<vmem>>, vector<16x1xf32>
      tpu.vector_store %arg9[%c0_16, %c0_17], %41 {strides = array<i32>} : memref<16x1xf32, #tpu.memory_space<vmem>>, vector<16x1xf32>,
      %43 = tpu.concatenate %40, %40 in 0 : vector<8x1xf32>, vector<8x1xf32> -> vector<16x1xf32>
      %c0_18 = arith.constant 0 : index
      %c0_19 = arith.constant 0 : index
      %44 = vector.load %arg10[%c0_18, %c0_19] : memref<16x1xf32, #tpu.memory_space<vmem>>, vector<16x1xf32>
      tpu.vector_store %arg10[%c0_18, %c0_19], %43 {strides = array<i32>} : memref<16x1xf32, #tpu.memory_space<vmem>>, vector<16x1xf32>,
    } else {
    }
    %c1_i32_6 = arith.constant 1 : i32
    %15 = arith.cmpi eq, %arg1, %c1_i32_6 : i32
    %16 = arith.extui %15 : i1 to i32
    %c0_i32_7 = arith.constant 0 : i32
    %17 = arith.cmpi ne, %16, %c0_i32_7 : i32
    scf.if %17 {
      %c0 = arith.constant 0 : index
      %c0_8 = arith.constant 0 : index
      %18 = vector.load %arg9[%c0, %c0_8] : memref<16x1xf32, #tpu.memory_space<vmem>>, vector<16x1xf32>
      %c0_9 = arith.constant 0 : index
      %c0_10 = arith.constant 0 : index
      %19 = vector.load %arg10[%c0_9, %c0_10] : memref<16x1xf32, #tpu.memory_space<vmem>>, vector<16x1xf32>
      %20 = arith.index_cast %1 : i32 to index
      %c0_11 = arith.constant 0 : index
      %c0_12 = arith.constant 0 : index
      %21 = vector.load %arg6[%20, %c0_11, %c0_12] : memref<16x16x32xbf16, #tpu.memory_space<vmem>>, vector<8x16x32xbf16>
      %22 = vector.extract_strided_slice %21 {offsets = [0, 0, 0], sizes = [1, 16, 32], strides = [1, 1, 1]} : vector<8x16x32xbf16> to vector<1x16x32xbf16>
      %23 = vector.shape_cast %22 : vector<1x16x32xbf16> to vector<16x32xbf16>
      %24 = arith.extf %23 : vector<16x32xbf16> to vector<16x32xf32>
      %25 = vector.broadcast %18 : vector<16x1xf32> to vector<16x32xf32>
      %26 = arith.subf %24, %25 : vector<16x32xf32>
      %27 = vector.broadcast %19 : vector<16x1xf32> to vector<16x32xf32>
      %28 = arith.mulf %26, %27 : vector<16x32xf32>
      %cst = arith.constant 0.000000e+00 : f32
      %29 = vector.broadcast %cst : f32 to vector<16x32xf32>
      %30 = arith.maximumf %28, %29 : vector<16x32xf32>
      %31 = vector.extract_strided_slice %30 {offsets = [0, 0], sizes = [8, 32], strides = [1, 1]} : vector<16x32xf32> to vector<8x32xf32>
      %c0_13 = arith.constant 0 : index
      %c0_14 = arith.constant 0 : index
      %c0_15 = arith.constant 0 : index
      %c0_16 = arith.constant 0 : index
      %32 = vector.load %arg5[%c0_13, %c0_14, %c0_15, %c0_16] : memref<1x8x16x32xf32, #tpu.memory_space<vmem>>, vector<1x8x1x32xf32>
      %33 = vector.shape_cast %32 : vector<1x8x1x32xf32> to vector<8x32xf32>
      %34 = vector.shape_cast %31 : vector<8x32xf32> to vector<1x8x1x32xf32>
      tpu.vector_store %arg5[%c0_13, %c0_14, %c0_15, %c0_16], %34 {strides = array<i32>} : memref<1x8x16x32xf32, #tpu.memory_space<vmem>>, vector<1x8x1x32xf32>,
      %35 = vector.extract_strided_slice %30 {offsets = [8, 0], sizes = [8, 32], strides = [1, 1]} : vector<16x32xf32> to vector<8x32xf32>
      %c0_17 = arith.constant 0 : index
      %c0_18 = arith.constant 0 : index
      %c1 = arith.constant 1 : index
      %c0_19 = arith.constant 0 : index
      %36 = vector.load %arg5[%c0_17, %c0_18, %c1, %c0_19] : memref<1x8x16x32xf32, #tpu.memory_space<vmem>>, vector<1x8x1x32xf32>
      %37 = vector.shape_cast %36 : vector<1x8x1x32xf32> to vector<8x32xf32>
      %38 = vector.shape_cast %35 : vector<8x32xf32> to vector<1x8x1x32xf32>
      tpu.vector_store %arg5[%c0_17, %c0_18, %c1, %c0_19], %38 {strides = array<i32>} : memref<1x8x16x32xf32, #tpu.memory_space<vmem>>, vector<1x8x1x32xf32>,
      %39 = vector.extract_strided_slice %21 {offsets = [1, 0, 0], sizes = [1, 16, 32], strides = [1, 1, 1]} : vector<8x16x32xbf16> to vector<1x16x32xbf16>
      %40 = vector.shape_cast %39 : vector<1x16x32xbf16> to vector<16x32xbf16>
      %41 = arith.extf %40 : vector<16x32xbf16> to vector<16x32xf32>
      %42 = vector.broadcast %18 : vector<16x1xf32> to vector<16x32xf32>
      %43 = arith.subf %41, %42 : vector<16x32xf32>
      %44 = vector.broadcast %19 : vector<16x1xf32> to vector<16x32xf32>
      %45 = arith.mulf %43, %44 : vector<16x32xf32>
      %cst_20 = arith.constant 0.000000e+00 : f32
      %46 = vector.broadcast %cst_20 : f32 to vector<16x32xf32>
      %47 = arith.maximumf %45, %46 : vector<16x32xf32>
      %48 = vector.extract_strided_slice %47 {offsets = [0, 0], sizes = [8, 32], strides = [1, 1]} : vector<16x32xf32> to vector<8x32xf32>
      %c0_21 = arith.constant 0 : index
      %c0_22 = arith.constant 0 : index
      %c2 = arith.constant 2 : index
      %c0_23 = arith.constant 0 : index
      %49 = vector.load %arg5[%c0_21, %c0_22, %c2, %c0_23] : memref<1x8x16x32xf32, #tpu.memory_space<vmem>>, vector<1x8x1x32xf32>
      %50 = vector.shape_cast %49 : vector<1x8x1x32xf32> to vector<8x32xf32>
      %51 = vector.shape_cast %48 : vector<8x32xf32> to vector<1x8x1x32xf32>
      tpu.vector_store %arg5[%c0_21, %c0_22, %c2, %c0_23], %51 {strides = array<i32>} : memref<1x8x16x32xf32, #tpu.memory_space<vmem>>, vector<1x8x1x32xf32>,
      %52 = vector.extract_strided_slice %47 {offsets = [8, 0], sizes = [8, 32], strides = [1, 1]} : vector<16x32xf32> to vector<8x32xf32>
      %c0_24 = arith.constant 0 : index
      %c0_25 = arith.constant 0 : index
      %c3 = arith.constant 3 : index
      %c0_26 = arith.constant 0 : index
      %53 = vector.load %arg5[%c0_24, %c0_25, %c3, %c0_26] : memref<1x8x16x32xf32, #tpu.memory_space<vmem>>, vector<1x8x1x32xf32>
      %54 = vector.shape_cast %53 : vector<1x8x1x32xf32> to vector<8x32xf32>
      %55 = vector.shape_cast %52 : vector<8x32xf32> to vector<1x8x1x32xf32>
      tpu.vector_store %arg5[%c0_24, %c0_25, %c3, %c0_26], %55 {strides = array<i32>} : memref<1x8x16x32xf32, #tpu.memory_space<vmem>>, vector<1x8x1x32xf32>,
      %56 = vector.extract_strided_slice %21 {offsets = [2, 0, 0], sizes = [1, 16, 32], strides = [1, 1, 1]} : vector<8x16x32xbf16> to vector<1x16x32xbf16>
      %57 = vector.shape_cast %56 : vector<1x16x32xbf16> to vector<16x32xbf16>
      %58 = arith.extf %57 : vector<16x32xbf16> to vector<16x32xf32>
      %59 = vector.broadcast %18 : vector<16x1xf32> to vector<16x32xf32>
      %60 = arith.subf %58, %59 : vector<16x32xf32>
      %61 = vector.broadcast %19 : vector<16x1xf32> to vector<16x32xf32>
      %62 = arith.mulf %60, %61 : vector<16x32xf32>
      %cst_27 = arith.constant 0.000000e+00 : f32
      %63 = vector.broadcast %cst_27 : f32 to vector<16x32xf32>
      %64 = arith.maximumf %62, %63 : vector<16x32xf32>
      %65 = vector.extract_strided_slice %64 {offsets = [0, 0], sizes = [8, 32], strides = [1, 1]} : vector<16x32xf32> to vector<8x32xf32>
      %c0_28 = arith.constant 0 : index
      %c0_29 = arith.constant 0 : index
      %c4 = arith.constant 4 : index
      %c0_30 = arith.constant 0 : index
      %66 = vector.load %arg5[%c0_28, %c0_29, %c4, %c0_30] : memref<1x8x16x32xf32, #tpu.memory_space<vmem>>, vector<1x8x1x32xf32>
      %67 = vector.shape_cast %66 : vector<1x8x1x32xf32> to vector<8x32xf32>
      %68 = vector.shape_cast %65 : vector<8x32xf32> to vector<1x8x1x32xf32>
      tpu.vector_store %arg5[%c0_28, %c0_29, %c4, %c0_30], %68 {strides = array<i32>} : memref<1x8x16x32xf32, #tpu.memory_space<vmem>>, vector<1x8x1x32xf32>,
      %69 = vector.extract_strided_slice %64 {offsets = [8, 0], sizes = [8, 32], strides = [1, 1]} : vector<16x32xf32> to vector<8x32xf32>
      %c0_31 = arith.constant 0 : index
      %c0_32 = arith.constant 0 : index
      %c5 = arith.constant 5 : index
      %c0_33 = arith.constant 0 : index
      %70 = vector.load %arg5[%c0_31, %c0_32, %c5, %c0_33] : memref<1x8x16x32xf32, #tpu.memory_space<vmem>>, vector<1x8x1x32xf32>
      %71 = vector.shape_cast %70 : vector<1x8x1x32xf32> to vector<8x32xf32>
      %72 = vector.shape_cast %69 : vector<8x32xf32> to vector<1x8x1x32xf32>
      tpu.vector_store %arg5[%c0_31, %c0_32, %c5, %c0_33], %72 {strides = array<i32>} : memref<1x8x16x32xf32, #tpu.memory_space<vmem>>, vector<1x8x1x32xf32>,
      %73 = vector.extract_strided_slice %21 {offsets = [3, 0, 0], sizes = [1, 16, 32], strides = [1, 1, 1]} : vector<8x16x32xbf16> to vector<1x16x32xbf16>
      %74 = vector.shape_cast %73 : vector<1x16x32xbf16> to vector<16x32xbf16>
      %75 = arith.extf %74 : vector<16x32xbf16> to vector<16x32xf32>
      %76 = vector.broadcast %18 : vector<16x1xf32> to vector<16x32xf32>
      %77 = arith.subf %75, %76 : vector<16x32xf32>
      %78 = vector.broadcast %19 : vector<16x1xf32> to vector<16x32xf32>
      %79 = arith.mulf %77, %78 : vector<16x32xf32>
      %cst_34 = arith.constant 0.000000e+00 : f32
      %80 = vector.broadcast %cst_34 : f32 to vector<16x32xf32>
      %81 = arith.maximumf %79, %80 : vector<16x32xf32>
      %82 = vector.extract_strided_slice %81 {offsets = [0, 0], sizes = [8, 32], strides = [1, 1]} : vector<16x32xf32> to vector<8x32xf32>
      %c0_35 = arith.constant 0 : index
      %c0_36 = arith.constant 0 : index
      %c6 = arith.constant 6 : index
      %c0_37 = arith.constant 0 : index
      %83 = vector.load %arg5[%c0_35, %c0_36, %c6, %c0_37] : memref<1x8x16x32xf32, #tpu.memory_space<vmem>>, vector<1x8x1x32xf32>
      %84 = vector.shape_cast %83 : vector<1x8x1x32xf32> to vector<8x32xf32>
      %85 = vector.shape_cast %82 : vector<8x32xf32> to vector<1x8x1x32xf32>
      tpu.vector_store %arg5[%c0_35, %c0_36, %c6, %c0_37], %85 {strides = array<i32>} : memref<1x8x16x32xf32, #tpu.memory_space<vmem>>, vector<1x8x1x32xf32>,
      %86 = vector.extract_strided_slice %81 {offsets = [8, 0], sizes = [8, 32], strides = [1, 1]} : vector<16x32xf32> to vector<8x32xf32>
      %c0_38 = arith.constant 0 : index
      %c0_39 = arith.constant 0 : index
      %c7 = arith.constant 7 : index
      %c0_40 = arith.constant 0 : index
      %87 = vector.load %arg5[%c0_38, %c0_39, %c7, %c0_40] : memref<1x8x16x32xf32, #tpu.memory_space<vmem>>, vector<1x8x1x32xf32>
      %88 = vector.shape_cast %87 : vector<1x8x1x32xf32> to vector<8x32xf32>
      %89 = vector.shape_cast %86 : vector<8x32xf32> to vector<1x8x1x32xf32>
      tpu.vector_store %arg5[%c0_38, %c0_39, %c7, %c0_40], %89 {strides = array<i32>} : memref<1x8x16x32xf32, #tpu.memory_space<vmem>>, vector<1x8x1x32xf32>,
      %90 = vector.extract_strided_slice %21 {offsets = [4, 0, 0], sizes = [1, 16, 32], strides = [1, 1, 1]} : vector<8x16x32xbf16> to vector<1x16x32xbf16>
      %91 = vector.shape_cast %90 : vector<1x16x32xbf16> to vector<16x32xbf16>
      %92 = arith.extf %91 : vector<16x32xbf16> to vector<16x32xf32>
      %93 = vector.broadcast %18 : vector<16x1xf32> to vector<16x32xf32>
      %94 = arith.subf %92, %93 : vector<16x32xf32>
      %95 = vector.broadcast %19 : vector<16x1xf32> to vector<16x32xf32>
      %96 = arith.mulf %94, %95 : vector<16x32xf32>
      %cst_41 = arith.constant 0.000000e+00 : f32
      %97 = vector.broadcast %cst_41 : f32 to vector<16x32xf32>
      %98 = arith.maximumf %96, %97 : vector<16x32xf32>
      %99 = vector.extract_strided_slice %98 {offsets = [0, 0], sizes = [8, 32], strides = [1, 1]} : vector<16x32xf32> to vector<8x32xf32>
      %c0_42 = arith.constant 0 : index
      %c0_43 = arith.constant 0 : index
      %c8 = arith.constant 8 : index
      %c0_44 = arith.constant 0 : index
      %100 = vector.load %arg5[%c0_42, %c0_43, %c8, %c0_44] : memref<1x8x16x32xf32, #tpu.memory_space<vmem>>, vector<1x8x1x32xf32>
      %101 = vector.shape_cast %100 : vector<1x8x1x32xf32> to vector<8x32xf32>
      %102 = vector.shape_cast %99 : vector<8x32xf32> to vector<1x8x1x32xf32>
      tpu.vector_store %arg5[%c0_42, %c0_43, %c8, %c0_44], %102 {strides = array<i32>} : memref<1x8x16x32xf32, #tpu.memory_space<vmem>>, vector<1x8x1x32xf32>,
      %103 = vector.extract_strided_slice %98 {offsets = [8, 0], sizes = [8, 32], strides = [1, 1]} : vector<16x32xf32> to vector<8x32xf32>
      %c0_45 = arith.constant 0 : index
      %c0_46 = arith.constant 0 : index
      %c9 = arith.constant 9 : index
      %c0_47 = arith.constant 0 : index
      %104 = vector.load %arg5[%c0_45, %c0_46, %c9, %c0_47] : memref<1x8x16x32xf32, #tpu.memory_space<vmem>>, vector<1x8x1x32xf32>
      %105 = vector.shape_cast %104 : vector<1x8x1x32xf32> to vector<8x32xf32>
      %106 = vector.shape_cast %103 : vector<8x32xf32> to vector<1x8x1x32xf32>
      tpu.vector_store %arg5[%c0_45, %c0_46, %c9, %c0_47], %106 {strides = array<i32>} : memref<1x8x16x32xf32, #tpu.memory_space<vmem>>, vector<1x8x1x32xf32>,
      %107 = vector.extract_strided_slice %21 {offsets = [5, 0, 0], sizes = [1, 16, 32], strides = [1, 1, 1]} : vector<8x16x32xbf16> to vector<1x16x32xbf16>
      %108 = vector.shape_cast %107 : vector<1x16x32xbf16> to vector<16x32xbf16>
      %109 = arith.extf %108 : vector<16x32xbf16> to vector<16x32xf32>
      %110 = vector.broadcast %18 : vector<16x1xf32> to vector<16x32xf32>
      %111 = arith.subf %109, %110 : vector<16x32xf32>
      %112 = vector.broadcast %19 : vector<16x1xf32> to vector<16x32xf32>
      %113 = arith.mulf %111, %112 : vector<16x32xf32>
      %cst_48 = arith.constant 0.000000e+00 : f32
      %114 = vector.broadcast %cst_48 : f32 to vector<16x32xf32>
      %115 = arith.maximumf %113, %114 : vector<16x32xf32>
      %116 = vector.extract_strided_slice %115 {offsets = [0, 0], sizes = [8, 32], strides = [1, 1]} : vector<16x32xf32> to vector<8x32xf32>
      %c0_49 = arith.constant 0 : index
      %c0_50 = arith.constant 0 : index
      %c10 = arith.constant 10 : index
      %c0_51 = arith.constant 0 : index
      %117 = vector.load %arg5[%c0_49, %c0_50, %c10, %c0_51] : memref<1x8x16x32xf32, #tpu.memory_space<vmem>>, vector<1x8x1x32xf32>
      %118 = vector.shape_cast %117 : vector<1x8x1x32xf32> to vector<8x32xf32>
      %119 = vector.shape_cast %116 : vector<8x32xf32> to vector<1x8x1x32xf32>
      tpu.vector_store %arg5[%c0_49, %c0_50, %c10, %c0_51], %119 {strides = array<i32>} : memref<1x8x16x32xf32, #tpu.memory_space<vmem>>, vector<1x8x1x32xf32>,
      %120 = vector.extract_strided_slice %115 {offsets = [8, 0], sizes = [8, 32], strides = [1, 1]} : vector<16x32xf32> to vector<8x32xf32>
      %c0_52 = arith.constant 0 : index
      %c0_53 = arith.constant 0 : index
      %c11 = arith.constant 11 : index
      %c0_54 = arith.constant 0 : index
      %121 = vector.load %arg5[%c0_52, %c0_53, %c11, %c0_54] : memref<1x8x16x32xf32, #tpu.memory_space<vmem>>, vector<1x8x1x32xf32>
      %122 = vector.shape_cast %121 : vector<1x8x1x32xf32> to vector<8x32xf32>
      %123 = vector.shape_cast %120 : vector<8x32xf32> to vector<1x8x1x32xf32>
      tpu.vector_store %arg5[%c0_52, %c0_53, %c11, %c0_54], %123 {strides = array<i32>} : memref<1x8x16x32xf32, #tpu.memory_space<vmem>>, vector<1x8x1x32xf32>,
      %124 = vector.extract_strided_slice %21 {offsets = [6, 0, 0], sizes = [1, 16, 32], strides = [1, 1, 1]} : vector<8x16x32xbf16> to vector<1x16x32xbf16>
      %125 = vector.shape_cast %124 : vector<1x16x32xbf16> to vector<16x32xbf16>
      %126 = arith.extf %125 : vector<16x32xbf16> to vector<16x32xf32>
      %127 = vector.broadcast %18 : vector<16x1xf32> to vector<16x32xf32>
      %128 = arith.subf %126, %127 : vector<16x32xf32>
      %129 = vector.broadcast %19 : vector<16x1xf32> to vector<16x32xf32>
      %130 = arith.mulf %128, %129 : vector<16x32xf32>
      %cst_55 = arith.constant 0.000000e+00 : f32
      %131 = vector.broadcast %cst_55 : f32 to vector<16x32xf32>
      %132 = arith.maximumf %130, %131 : vector<16x32xf32>
      %133 = vector.extract_strided_slice %132 {offsets = [0, 0], sizes = [8, 32], strides = [1, 1]} : vector<16x32xf32> to vector<8x32xf32>
      %c0_56 = arith.constant 0 : index
      %c0_57 = arith.constant 0 : index
      %c12 = arith.constant 12 : index
      %c0_58 = arith.constant 0 : index
      %134 = vector.load %arg5[%c0_56, %c0_57, %c12, %c0_58] : memref<1x8x16x32xf32, #tpu.memory_space<vmem>>, vector<1x8x1x32xf32>
      %135 = vector.shape_cast %134 : vector<1x8x1x32xf32> to vector<8x32xf32>
      %136 = vector.shape_cast %133 : vector<8x32xf32> to vector<1x8x1x32xf32>
      tpu.vector_store %arg5[%c0_56, %c0_57, %c12, %c0_58], %136 {strides = array<i32>} : memref<1x8x16x32xf32, #tpu.memory_space<vmem>>, vector<1x8x1x32xf32>,
      %137 = vector.extract_strided_slice %132 {offsets = [8, 0], sizes = [8, 32], strides = [1, 1]} : vector<16x32xf32> to vector<8x32xf32>
      %c0_59 = arith.constant 0 : index
      %c0_60 = arith.constant 0 : index
      %c13 = arith.constant 13 : index
      %c0_61 = arith.constant 0 : index
      %138 = vector.load %arg5[%c0_59, %c0_60, %c13, %c0_61] : memref<1x8x16x32xf32, #tpu.memory_space<vmem>>, vector<1x8x1x32xf32>
      %139 = vector.shape_cast %138 : vector<1x8x1x32xf32> to vector<8x32xf32>
      %140 = vector.shape_cast %137 : vector<8x32xf32> to vector<1x8x1x32xf32>
      tpu.vector_store %arg5[%c0_59, %c0_60, %c13, %c0_61], %140 {strides = array<i32>} : memref<1x8x16x32xf32, #tpu.memory_space<vmem>>, vector<1x8x1x32xf32>,
      %141 = vector.extract_strided_slice %21 {offsets = [7, 0, 0], sizes = [1, 16, 32], strides = [1, 1, 1]} : vector<8x16x32xbf16> to vector<1x16x32xbf16>
      %142 = vector.shape_cast %141 : vector<1x16x32xbf16> to vector<16x32xbf16>
      %143 = arith.extf %142 : vector<16x32xbf16> to vector<16x32xf32>
      %144 = vector.broadcast %18 : vector<16x1xf32> to vector<16x32xf32>
      %145 = arith.subf %143, %144 : vector<16x32xf32>
      %146 = vector.broadcast %19 : vector<16x1xf32> to vector<16x32xf32>
      %147 = arith.mulf %145, %146 : vector<16x32xf32>
      %cst_62 = arith.constant 0.000000e+00 : f32
      %148 = vector.broadcast %cst_62 : f32 to vector<16x32xf32>
      %149 = arith.maximumf %147, %148 : vector<16x32xf32>
      %150 = vector.extract_strided_slice %149 {offsets = [0, 0], sizes = [8, 32], strides = [1, 1]} : vector<16x32xf32> to vector<8x32xf32>
      %c0_63 = arith.constant 0 : index
      %c0_64 = arith.constant 0 : index
      %c14 = arith.constant 14 : index
      %c0_65 = arith.constant 0 : index
      %151 = vector.load %arg5[%c0_63, %c0_64, %c14, %c0_65] : memref<1x8x16x32xf32, #tpu.memory_space<vmem>>, vector<1x8x1x32xf32>
      %152 = vector.shape_cast %151 : vector<1x8x1x32xf32> to vector<8x32xf32>
      %153 = vector.shape_cast %150 : vector<8x32xf32> to vector<1x8x1x32xf32>
      tpu.vector_store %arg5[%c0_63, %c0_64, %c14, %c0_65], %153 {strides = array<i32>} : memref<1x8x16x32xf32, #tpu.memory_space<vmem>>, vector<1x8x1x32xf32>,
      %154 = vector.extract_strided_slice %149 {offsets = [8, 0], sizes = [8, 32], strides = [1, 1]} : vector<16x32xf32> to vector<8x32xf32>
      %c0_66 = arith.constant 0 : index
      %c0_67 = arith.constant 0 : index
      %c15 = arith.constant 15 : index
      %c0_68 = arith.constant 0 : index
      %155 = vector.load %arg5[%c0_66, %c0_67, %c15, %c0_68] : memref<1x8x16x32xf32, #tpu.memory_space<vmem>>, vector<1x8x1x32xf32>
      %156 = vector.shape_cast %155 : vector<1x8x1x32xf32> to vector<8x32xf32>
      %157 = vector.shape_cast %154 : vector<8x32xf32> to vector<1x8x1x32xf32>
      tpu.vector_store %arg5[%c0_66, %c0_67, %c15, %c0_68], %157 {strides = array<i32>} : memref<1x8x16x32xf32, #tpu.memory_space<vmem>>, vector<1x8x1x32xf32>,
    } else {
    }
    return
  }
  func.func @transform_0(%arg0: i32, %arg1: i32, %arg2: i32) -> (i32, i32, i32, i32) {
    %c0_i32 = arith.constant 0 : i32
    %c0_i32_0 = arith.constant 0 : i32
    %c0_i32_1 = arith.constant 0 : i32
    %c0_i32_2 = arith.constant 0 : i32
    return %arg0, %c0_i32, %c0_i32_0, %c0_i32_1 : i32, i32, i32, i32
  }
  func.func @transform_1(%arg0: i32, %arg1: i32, %arg2: i32) -> (i32, i32, i32) {
    %c0_i32 = arith.constant 0 : i32
    %c0_i32_0 = arith.constant 0 : i32
    %c0_i32_1 = arith.constant 0 : i32
    %c0_i32_2 = arith.constant 0 : i32
    return %c0_i32, %c0_i32_0, %c0_i32_1 : i32, i32, i32
  }
  func.func @transform_2(%arg0: i32, %arg1: i32, %arg2: i32) -> (i32, i32, i32, i32) {
    %0 = arith.muli %arg2, %arg1 : i32
    %c0_i32 = arith.constant 0 : i32
    %c0_i32_0 = arith.constant 0 : i32
    %c0_i32_1 = arith.constant 0 : i32
    return %arg0, %c0_i32, %0, %c0_i32_0 : i32, i32, i32, i32
  }
}

</mosaic_0001>

<llo_original>
// kernel: tpu_custom_call.1
$region0: #{tpu_custom_call.1}
  #allocation0 [shape = 'u32[]', space=smem, size = 0x4, offset = 0x4, fixed_abs, tag = 'smem constant byte address 0x4 - core index']
  #allocation1 [shape = 'u32[144,128]{1,0:T(1,128)}', space=vmem, size = 0x12000, scoped, tag = 'internal scratch']
  #allocation2 [shape = 'bf16[16,16,32]{2,1,0:T(16,128)(2,1)}', space=vmem, size = 0x10000, scoped, tag = 'scratch operand']
  #allocation3 [shape = 'f32[16,32]{1,0:T(8,128)}', space=vmem, size = 0x2000, scoped, tag = 'scratch operand']
  #allocation4 [shape = 'f32[16,32]{1,0:T(8,128)}', space=vmem, size = 0x2000, scoped, tag = 'scratch operand']
  #allocation5 [shape = 'f32[16,1]{1,0:T(8,128)}', space=vmem, size = 0x2000, scoped, tag = 'scratch operand']
  #allocation6 [shape = 'f32[16,1]{1,0:T(8,128)}', space=vmem, size = 0x2000, scoped, tag = 'scratch operand']
  #allocation9 [shape = 's32[]', space=sflag, size = 0x4, offset = 0, fixed_abs, tag = 'sflag constant byte address 0x0 - dummy sync flag']
  %s0 = inlined_call_operand.vmem [shape: bf16[2,18,4,34], index: 0, kind: input, shape index: {}]
  %s1 = inlined_call_operand.vmem [shape: bf16[9,16,4], index: 1, kind: input, shape index: {}]
  %s2 = inlined_call_operand.hbm [shape: f32[2,8,32,32], index: 2, kind: output, shape index: {}]
  %s3 = sld [smem:[#allocation0]]
  $region57: #{tpu_custom_call.1} parent=0
    _
  %s5 = ssub.s32 1, %s3
  %s6 = scalar_select 0, %s5, %s3
  $region1: #{tpu_custom_call.1} parent=0
    #allocation7 [shape = 'u8[131072]{0}', space=vmem, size = 0x20000, scoped, tag = 'output window, operand 0']
    #allocation8 [shape = 's32[2]{0}', space=sflag, size = 0x8, scoped, tag = 'scoped memory for tpu_custom_call.1']
    %7 = vsyncpa [#allocation8], 0
    %s8 = scalar_lea.sflag [#allocation8], 1
    %9 = vsyncpa %s8, 0
    loop: start=0, step=1, limit=10
    $region2: #{tpu_custom_call.1} parent=1 // loop_pre_header
      _
    $region3: #{tpu_custom_call.1} parent=1 // loop_header
      %s11 = sphi 0, %s15
      %p12 = scmp.ge.s32.totalorder %s11, 10
      %s18 = sphi 0, %s37
      %s19 = sphi 0, %s33
      %s20 = sphi 0, %s29
      %s21 = sphi 0, %s18
      %s22 = sphi 0, %s19
      %s23 = sphi 0, %s20
      %s24 = sphi 0, %s21
      %s25 = sphi 0, %s22
      %s26 = sphi 0, %s23
      %s40 = sphi 0, %s42
      %s43 = sphi 0, %s40
      %s44 = sphi 0, %s43
      %s60 = sphi 0, %s44
      %s64 = sphi 0, %s64
      %s66 = sphi 0, %s64
      %s67 = sphi 0, %s66
      %s81 = sphi 0, %s67
      %s91 = sphi 0, %s93
      %s94 = sphi 0, %s91
      %s95 = sphi 0, %s94
      %s111 = sphi 0, %s95
    $region4: #{tpu_custom_call.1} parent=1 // loop_header_branch
      %14 = sbr.rel (%p12) target = $region8
    $region5: #{tpu_custom_call.1} parent=1 // loop_body
      %s16 = ssub.s32 %s11, 1
      %s17 = ssub.s32 %s11, 2
      %s27 = sadd.s32 1, %s20
      %p28 = scmp.ge.s32.totalorder %s27, 2
      %s29 = scalar_select %p28, 0, %s27
      %s30 = sadd.s32 1, %s19
      %s31 = scalar_select %p28, %s30, %s19
      %p32 = scmp.ge.s32.totalorder %s31, 2
      %s33 = scalar_select %p32, 0, %s31
      %s34 = sadd.s32 1, %s18
      %s35 = scalar_select %p32, %s34, %s18
      %p36 = scmp.ge.s32.totalorder %s35, 2
      %s37 = scalar_select %p36, 0, %s35
      %s38 = ssub.s32 %s18, %s37
      %p39 = scmp.eq.s32.totalorder %s38, 0
      %s41 = sadd.s32 %s40, 1
      %s42 = scalar_select %p39, %s40, %s41
      %p45 = pneg %p39
      %p46 = scmp.eq.s32.totalorder %s11, 7
      %p47 = por %p45, %p46
      %p48 = scmp.ne.s32.totalorder %s40, %s43
      %p49 = scmp.eq.s32.totalorder %s11, 0
      %p50 = por %p48, %p49
      %p51 = scmp.ne.s32.totalorder %s40, %s43
      %p52 = scmp.eq.s32.totalorder %s16, 7
      %p53 = por %p51, %p52
      %p54 = scmp.ne.s32.totalorder %s43, %s44
      %p55 = scmp.eq.s32.totalorder %s16, 0
      %p56 = por %p54, %p55
      %p57 = scmp.ne.s32.totalorder %s43, %s44
      %p58 = scmp.eq.s32.totalorder %s17, 7
      %p59 = por %p57, %p58
      %p61 = scmp.ne.s32.totalorder %s44, %s60
      %p62 = scmp.eq.s32.totalorder %s17, 0
      %p63 = por %p61, %p62
      %s65 = sadd.s32 %s64, 1
      %p68 = scmp.eq.s32.totalorder %s11, 7
      %p69 = scmp.ne.s32.totalorder %s64, %s66
      %p70 = scmp.eq.s32.totalorder %s11, 0
      %p71 = por %p69, %p70
      %p72 = scmp.ne.s32.totalorder %s64, %s66
      %p73 = scmp.eq.s32.totalorder %s16, 7
      %p74 = por %p72, %p73
      %p75 = scmp.ne.s32.totalorder %s66, %s67
      %p76 = scmp.eq.s32.totalorder %s16, 0
      %p77 = por %p75, %p76
      %p78 = scmp.ne.s32.totalorder %s66, %s67
      %p79 = scmp.eq.s32.totalorder %s17, 7
      %p80 = por %p78, %p79
      %p82 = scmp.ne.s32.totalorder %s67, %s81
      %p83 = scmp.eq.s32.totalorder %s17, 0
      %p84 = por %p82, %p83
      %s85 = smul.u32 %s20, %s19
      %s86 = smul.u32 %s29, %s33
      %s87 = ssub.s32 %s18, %s37
      %s88 = ssub.s32 %s85, %s86
      %s89 = sor.u32 %s87, %s88
      %p90 = scmp.eq.s32.totalorder %s89, 0
      %s92 = sadd.s32 %s91, 1
      %s93 = scalar_select %p90, %s91, %s92
      %p96 = pneg %p90
      %p97 = scmp.eq.s32.totalorder %s11, 7
      %p98 = por %p96, %p97
      %p99 = scmp.ne.s32.totalorder %s91, %s94
      %p100 = scmp.eq.s32.totalorder %s11, 0
      %p101 = por %p99, %p100
      %p102 = scmp.ne.s32.totalorder %s91, %s94
      %p103 = scmp.eq.s32.totalorder %s16, 7
      %p104 = por %p102, %p103
      %p105 = scmp.ne.s32.totalorder %s94, %s95
      %p106 = scmp.eq.s32.totalorder %s16, 0
      %p107 = por %p105, %p106
      %p108 = scmp.ne.s32.totalorder %s94, %s95
      %p109 = scmp.eq.s32.totalorder %s17, 7
      %p110 = por %p108, %p109
      %p112 = scmp.ne.s32.totalorder %s95, %s111
      %p113 = scmp.eq.s32.totalorder %s17, 0
      %p114 = por %p112, %p113
      %p115 = scmp.le.s32.totalorder 1, %s11
      %p116 = scmp.lt.s32.totalorder %s11, 9
      %p117 = pnand %p115, %p116
      %p118 = pneg %p117
      // Predicated region
      $region9: #{tpu_custom_call.1} parent=5 // pred_check
        _
      $region10: #{tpu_custom_call.1} parent=5 // pred_check_branch
        %120 = sbr.rel (%p117) target = $region12
      $region11: #{tpu_custom_call.1} parent=5 // pred_region
        %s121 = ssub.s32 %s11, 1
        // Predicated region
        $region13: #{tpu_custom_call.1} parent=11 // pred_check
          %p122 = pneg %p77
        $region14: #{tpu_custom_call.1} parent=11 // pred_check_branch
          %124 = sbr.rel (%p122) target = $region16
        $region15: #{tpu_custom_call.1} parent=11 // pred_region
          _
        $region16: #{tpu_custom_call.1} parent=11 // pred_fallthru
          _
      $region12: #{tpu_custom_call.1} parent=5 // pred_fallthru
        _
      %p125 = scmp.lt.s32.totalorder %s11, 8
      // Predicated region
      $region17: #{tpu_custom_call.1} parent=5 // pred_check
        %p126 = pneg %p125
      $region18: #{tpu_custom_call.1} parent=5 // pred_check_branch
        %128 = sbr.rel (%p126) target = $region20
      $region19: #{tpu_custom_call.1} parent=5 // pred_region
        // Predicated region
        $region21: #{tpu_custom_call.1} parent=19 // pred_check
          %p129 = pneg %p50
        $region22: #{tpu_custom_call.1} parent=19 // pred_check_branch
          %131 = sbr.rel (%p129) target = $region24
        $region23: #{tpu_custom_call.1} parent=19 // pred_region
          %p132 = scmp.lt.s32.totalorder %s18, 1
          %s133 = scalar_select %p132, %s18, 1
          %s134 = smul.addr %s133, 18
          %s135 = smul.addr %s134, 2
          %s136 = scalar_lea.vmem %s0, %s135
        $region24: #{tpu_custom_call.1} parent=19 // pred_fallthru
          _
      $region20: #{tpu_custom_call.1} parent=5 // pred_fallthru
        _
      %p137 = scmp.le.s32.totalorder 1, %s11
      %p138 = scmp.lt.s32.totalorder %s11, 9
      %p139 = pnand %p137, %p138
      %p140 = pneg %p139
      // Predicated region
      $region25: #{tpu_custom_call.1} parent=5 // pred_check
        _
      $region26: #{tpu_custom_call.1} parent=5 // pred_check_branch
        %142 = sbr.rel (%p139) target = $region28
      $region27: #{tpu_custom_call.1} parent=5 // pred_region
        %s143 = ssub.s32 %s11, 1
        %p144 = scmp.lt.s32.totalorder %s21, 1
        %s145 = scalar_select %p144, %s21, 1
        %s146 = smul.addr %s145, 18
        %s147 = smul.addr %s146, 2
        %s148 = scalar_lea.vmem %s0, %s147
        %p149 = pneg %p56
        %p150 = pneg %p53
        %p151 = pneg %p77
        %p152 = pneg %p74
        %p153 = pneg %p107
        %p154 = pneg %p104
        %s155 = sand.u32 %s94, 1
        %s156 = scalar_lea.sflag [#allocation8], %s155
        %s157 = sand.u32 %s94, 1
        %s158 = smul.addr %s157, 128
        %s159 = scalar_lea.vmem [#allocation7], %s158
        %p160 = scmp.lt.s32.totalorder %s21, 1
        %s161 = scalar_select %p160, %s21, 1
        %s162 = smul.addr %s161, 18
        %s163 = smul.addr %s162, 2
        %s164 = scalar_lea.vmem %s0, %s163
        %s165 = smul.u32 %s23, %s22
        %s166 = smul.u32 2, %s165
        %s168 = smul.u32 %s23, 8
        %p169 = scmp.eq.s32.totalorder %s22, 0
        %p170 = scmp.eq.s32.totalorder %s23, 0
        %p171 = pnand %p169, %p170
        %p172 = pneg %p171
        // Predicated region
        $region29: #{tpu_custom_call.1} parent=27 // pred_check
          _
        $region30: #{tpu_custom_call.1} parent=27 // pred_check_branch
          %174 = sbr.rel (%p171) target = $region32
        $region31: #{tpu_custom_call.1} parent=27 // pred_region
          %vm175 = vcmask 261120
          %176 = vst.msk [vmem:[#allocation3] sm:$0xff] %vm175, 0.0
          %177 = vst.msk [vmem:[#allocation3 + $0x8] sm:$0xff] %vm175, 0.0
          %178 = vst.msk [vmem:[#allocation4] sm:$0xff] %vm175, 0.0
          %179 = vst.msk [vmem:[#allocation4 + $0x8] sm:$0xff] %vm175, 0.0
        $region32: #{tpu_custom_call.1} parent=27 // pred_fallthru
          _
        // Predicated region
        $region33: #{tpu_custom_call.1} parent=27 // pred_check
          %p180 = pneg %p169
        $region34: #{tpu_custom_call.1} parent=27 // pred_check_branch
          %182 = sbr.rel (%p180) target = $region36
        $region35: #{tpu_custom_call.1} parent=27 // pred_region
          %v183 = vld [vmem:[%s1] sm:$0xf]
          %v184 = vld [vmem:[%s1 + $0x4] sm:$0xf]
          %s185 = scalar_lea.vmem %s1, 8
          %v186 = vld [vmem:[%s185] sm:$0xf]
          %v187 = vld [vmem:[%s185 + $0x4] sm:$0xf]
          %s188 = scalar_lea.vmem %s1, 16
          %v189 = vld [vmem:[%s188] sm:$0xf]
          %v190 = vld [vmem:[%s188 + $0x4] sm:$0xf]
          %s191 = scalar_lea.vmem %s1, 24
          %v192 = vld [vmem:[%s191] sm:$0xf]
          %v193 = vld [vmem:[%s191 + $0x4] sm:$0xf]
          %s194 = scalar_lea.vmem %s1, 32
          %v195 = vld [vmem:[%s194] sm:$0xf]
          %v196 = vld [vmem:[%s194 + $0x4] sm:$0xf]
          %s197 = scalar_lea.vmem %s1, 40
          %v198 = vld [vmem:[%s197] sm:$0xf]
          %v199 = vld [vmem:[%s197 + $0x4] sm:$0xf]
          %s200 = scalar_lea.vmem %s1, 48
          %v201 = vld [vmem:[%s200] sm:$0xf]
          %v202 = vld [vmem:[%s200 + $0x4] sm:$0xf]
          %s203 = scalar_lea.vmem %s1, 56
          %v204 = vld [vmem:[%s203] sm:$0xf]
          %v205 = vld [vmem:[%s203 + $0x4] sm:$0xf]
          %s206 = scalar_lea.vmem %s1, 64
          %v207 = vld [vmem:[%s206] sm:$0xf]
          %v208 = vld [vmem:[%s206 + $0x4] sm:$0xf]
          %s209 = smul.addr %s168, 2
          %s210 = scalar_lea.vmem %s164, %s209
          %v211 = vld [vmem:[%s210] sm:$0x3]
          %v212 = vld [vmem:[%s210 + $0x2] sm:$0x3]
          %v213 = vld [vmem:[%s210 + $0x4] sm:$0x3]
          %v214 = vld [vmem:[%s210 + $0x6] sm:$0x3]
          %v215 = vld [vmem:[%s210 + $0x8] sm:$0x3]
          %v216 = vld [vmem:[%s210 + $0xa] sm:$0x3]
          %v217 = vld [vmem:[%s210 + $0xc] sm:$0x3]
          %v218 = vld [vmem:[%s210 + $0xe] sm:$0x3]
          %v219 = vld [vmem:[%s210 + $0x10] sm:$0x3]
          %v220 = vld [vmem:[%s210 + $0x12] sm:$0x3]
          %v223 = vunpack.c.l.b16 %v186
          %v224 = vunpack.c.l.b16 %v187
          %v225 = vpack.c.b16 %v224, %v223
          %v228 = vunpack.c.l.s4 1983009808
          %v229 = vunpack.c.0.s8 %v228
          %v230 = vlaneseq
          %v231 = vshrl.u32 %v230, 7
          %v232 = vsub.s32 %v229, %v231
          %v233 = vrot.slane %v211, %v232
          %234 = vrot.lane.b32.xlu0 %v233, 127
          %v235 = vpop.permute.xlu0 %234
          %vm236 = vcmask 31744
          %v238 = vsel %vm236, %v225, 0
          %vm240 = vcmask 1041408
          %v242 = vsel %vm240, %v235, 0
          %244 = vmatprep.subr.bf16.mxu0 0
          %245 = vmatpush1.bf16.msra.mxu0 %v242
          %246 = vmatprep.subr.bf16.mxu0 0
          %247 = vmatpush1.bf16.msra.mxu0 0
          %248 = vmatprep.subr.bf16.mxu0 0
          %249 = vmatpush1.bf16.msra.mxu0 0
          %250 = vmatprep.subr.bf16.mxu0 0
          %251 = vmatpush1.bf16.msra.mxu0 0
          %252 = vmatprep.subr.bf16.mxu0 0
          %253 = vmatpush1.bf16.msra.mxu0 0
          %254 = vmatprep.subr.bf16.mxu0 0
          %255 = vmatpush1.bf16.msra.mxu0 0
          %256 = vmatprep.subr.bf16.mxu0 0
          %257 = vmatpush1.bf16.msra.mxu0 0
          %258 = vmatprep.subr.bf16.mxu0 0
          %259 = vmatpush1.bf16.msra.mxu0 0
          %260 = vmatprep.subr.bf16.mxu0 0
          %261 = vmatpush1.bf16.msra.mxu0 0
          %262 = vmatprep.subr.bf16.mxu0 0
          %263 = vmatpush1.bf16.msra.mxu0 0
          %264 = vmatprep.subr.bf16.mxu0 0
          %265 = vmatpush1.bf16.msra.mxu0 0
          %266 = vmatprep.subr.bf16.mxu0 0
          %267 = vmatpush1.bf16.msra.mxu0 0
          %268 = vmatprep.subr.bf16.mxu0 0
          %269 = vmatpush1.bf16.msra.mxu0 0
          %270 = vmatprep.subr.bf16.mxu0 0
          %271 = vmatpush1.bf16.msra.mxu0 0
          %272 = vmatprep.subr.bf16.mxu0 0
          %273 = vmatpush1.bf16.msra.mxu0 0
          %274 = vmatprep.subr.bf16.mxu0 0
          %275 = vmatpush1.bf16.msra.mxu0 0
          %276 = vmatprep.mubr.bf16.mxu0 0
          %277 = vmatmul.mubr.bf16.gmra.mrb[0].mxu0 %v238
          %v278 = vpop.f32.mrb[0].mxu0
          %v279 = vadd.f32 0.0, %v278
          %v280 = vpop.f32.mrb[0].mxu0
          %v281 = vpop.f32.mrb[0].mxu0
          %v282 = vadd.f32 0.0, %v281
          %v283 = vpop.f32.mrb[0].mxu0
          %284 = vdwg.mxu0
          %v287 = vunpack.c.l.b16 %v183
          %v288 = vunpack.c.l.b16 %v184
          %v289 = vpack.c.b16 %v288, %v287
          %v291 = vsel %vm236, %v289, 0
          %v294 = vsel %vm240, %v211, 0
          %296 = vmatprep.subr.bf16.mxu0 0
          %297 = vmatpush1.bf16.msra.mxu0 %v294
          %298 = vmatprep.subr.bf16.mxu0 0
          %299 = vmatpush1.bf16.msra.mxu0 0
          %300 = vmatprep.subr.bf16.mxu0 0
          %301 = vmatpush1.bf16.msra.mxu0 0
          %302 = vmatprep.subr.bf16.mxu0 0
          %303 = vmatpush1.bf16.msra.mxu0 0
          %304 = vmatprep.subr.bf16.mxu0 0
          %305 = vmatpush1.bf16.msra.mxu0 0
          %306 = vmatprep.subr.bf16.mxu0 0
          %307 = vmatpush1.bf16.msra.mxu0 0
          %308 = vmatprep.subr.bf16.mxu0 0
          %309 = vmatpush1.bf16.msra.mxu0 0
          %310 = vmatprep.subr.bf16.mxu0 0
          %311 = vmatpush1.bf16.msra.mxu0 0
          %312 = vmatprep.subr.bf16.mxu0 0
          %313 = vmatpush1.bf16.msra.mxu0 0
          %314 = vmatprep.subr.bf16.mxu0 0
          %315 = vmatpush1.bf16.msra.mxu0 0
          %316 = vmatprep.subr.bf16.mxu0 0
          %317 = vmatpush1.bf16.msra.mxu0 0
          %318 = vmatprep.subr.bf16.mxu0 0
          %319 = vmatpush1.bf16.msra.mxu0 0
          %320 = vmatprep.subr.bf16.mxu0 0
          %321 = vmatpush1.bf16.msra.mxu0 0
          %322 = vmatprep.subr.bf16.mxu0 0
          %323 = vmatpush1.bf16.msra.mxu0 0
          %324 = vmatprep.subr.bf16.mxu0 0
          %325 = vmatpush1.bf16.msra.mxu0 0
          %326 = vmatprep.subr.bf16.mxu0 0
          %327 = vmatpush1.bf16.msra.mxu0 0
          %328 = vmatprep.mubr.bf16.mxu0 0
          %329 = vmatmul.mubr.bf16.gmra.mrb[0].mxu0 %v291
          %v330 = vpop.f32.mrb[0].mxu0
          %v331 = vadd.f32 %v279, %v330
          %v332 = vpop.f32.mrb[0].mxu0
          %v333 = vpop.f32.mrb[0].mxu0
          %v334 = vadd.f32 %v282, %v333
          %v335 = vpop.f32.mrb[0].mxu0
          %336 = vdwg.mxu0
          %v339 = vunpack.c.l.b16 %v189
          %v340 = vunpack.c.l.b16 %v190
          %v341 = vpack.c.b16 %v340, %v339
          %342 = vrot.lane.b32.xlu0 %v233, 126
          %v343 = vpop.permute.xlu0 %342
          %v345 = vsel %vm236, %v341, 0
          %v348 = vsel %vm240, %v343, 0
          %350 = vmatprep.subr.bf16.mxu0 0
          %351 = vmatpush1.bf16.msra.mxu0 %v348
          %352 = vmatprep.subr.bf16.mxu0 0
          %353 = vmatpush1.bf16.msra.mxu0 0
          %354 = vmatprep.subr.bf16.mxu0 0
          %355 = vmatpush1.bf16.msra.mxu0 0
          %356 = vmatprep.subr.bf16.mxu0 0
          %357 = vmatpush1.bf16.msra.mxu0 0
          %358 = vmatprep.subr.bf16.mxu0 0
          %359 = vmatpush1.bf16.msra.mxu0 0
          %360 = vmatprep.subr.bf16.mxu0 0
          %361 = vmatpush1.bf16.msra.mxu0 0
          %362 = vmatprep.subr.bf16.mxu0 0
          %363 = vmatpush1.bf16.msra.mxu0 0
          %364 = vmatprep.subr.bf16.mxu0 0
          %365 = vmatpush1.bf16.msra.mxu0 0
          %366 = vmatprep.subr.bf16.mxu0 0
          %367 = vmatpush1.bf16.msra.mxu0 0
          %368 = vmatprep.subr.bf16.mxu0 0
          %369 = vmatpush1.bf16.msra.mxu0 0
          %370 = vmatprep.subr.bf16.mxu0 0
          %371 = vmatpush1.bf16.msra.mxu0 0
          %372 = vmatprep.subr.bf16.mxu0 0
          %373 = vmatpush1.bf16.msra.mxu0 0
          %374 = vmatprep.subr.bf16.mxu0 0
          %375 = vmatpush1.bf16.msra.mxu0 0
          %376 = vmatprep.subr.bf16.mxu0 0
          %377 = vmatpush1.bf16.msra.mxu0 0
          %378 = vmatprep.subr.bf16.mxu0 0
          %379 = vmatpush1.bf16.msra.mxu0 0
          %380 = vmatprep.subr.bf16.mxu0 0
          %381 = vmatpush1.bf16.msra.mxu0 0
          %382 = vmatprep.mubr.bf16.mxu0 0
          %383 = vmatmul.mubr.bf16.gmra.mrb[0].mxu0 %v345
          %v384 = vpop.f32.mrb[0].mxu0
          %v385 = vadd.f32 0.0, %v384
          %v386 = vpop.f32.mrb[0].mxu0
          %v387 = vpop.f32.mrb[0].mxu0
          %v388 = vadd.f32 0.0, %v387
          %v389 = vpop.f32.mrb[0].mxu0
          %390 = vdwg.mxu0
          %v391 = vadd.f32 %v331, %v385
          %v392 = vadd.f32 %v334, %v388
          %v395 = vunpack.c.l.b16 %v192
          %v396 = vunpack.c.l.b16 %v193
          %v397 = vpack.c.b16 %v396, %v395
          %v399 = vsel %vm236, %v397, 0
          %v402 = vsel %vm240, %v212, 0
          %404 = vmatprep.subr.bf16.mxu0 0
          %405 = vmatpush1.bf16.msra.mxu0 %v402
          %406 = vmatprep.subr.bf16.mxu0 0
          %407 = vmatpush1.bf16.msra.mxu0 0
          %408 = vmatprep.subr.bf16.mxu0 0
          %409 = vmatpush1.bf16.msra.mxu0 0
          %410 = vmatprep.subr.bf16.mxu0 0
          %411 = vmatpush1.bf16.msra.mxu0 0
          %412 = vmatprep.subr.bf16.mxu0 0
          %413 = vmatpush1.bf16.msra.mxu0 0
          %414 = vmatprep.subr.bf16.mxu0 0
          %415 = vmatpush1.bf16.msra.mxu0 0
          %416 = vmatprep.subr.bf16.mxu0 0
          %417 = vmatpush1.bf16.msra.mxu0 0
          %418 = vmatprep.subr.bf16.mxu0 0
          %419 = vmatpush1.bf16.msra.mxu0 0
          %420 = vmatprep.subr.bf16.mxu0 0
          %421 = vmatpush1.bf16.msra.mxu0 0
          %422 = vmatprep.subr.bf16.mxu0 0
          %423 = vmatpush1.bf16.msra.mxu0 0
          %424 = vmatprep.subr.bf16.mxu0 0
          %425 = vmatpush1.bf16.msra.mxu0 0
          %426 = vmatprep.subr.bf16.mxu0 0
          %427 = vmatpush1.bf16.msra.mxu0 0
          %428 = vmatprep.subr.bf16.mxu0 0
          %429 = vmatpush1.bf16.msra.mxu0 0
          %430 = vmatprep.subr.bf16.mxu0 0
          %431 = vmatpush1.bf16.msra.mxu0 0
          %432 = vmatprep.subr.bf16.mxu0 0
          %433 = vmatpush1.bf16.msra.mxu0 0
          %434 = vmatprep.subr.bf16.mxu0 0
          %435 = vmatpush1.bf16.msra.mxu0 0
          %436 = vmatprep.mubr.bf16.mxu0 0
          %437 = vmatmul.mubr.bf16.gmra.mrb[0].mxu0 %v399
          %v438 = vpop.f32.mrb[0].mxu0
          %v439 = vadd.f32 0.0, %v438
          %v440 = vpop.f32.mrb[0].mxu0
          %v441 = vpop.f32.mrb[0].mxu0
          %v442 = vadd.f32 0.0, %v441
          %v443 = vpop.f32.mrb[0].mxu0
          %444 = vdwg.mxu0
          %v445 = vadd.f32 %v391, %v439
          %v446 = vadd.f32 %v392, %v442
          %v449 = vunpack.c.l.b16 %v195
          %v450 = vunpack.c.l.b16 %v196
          %v451 = vpack.c.b16 %v450, %v449
          %v454 = vunpack.c.l.s4 1983009808
          %v455 = vunpack.c.0.s8 %v454
          %v456 = vlaneseq
          %v457 = vshrl.u32 %v456, 7
          %v458 = vsub.s32 %v455, %v457
          %v459 = vrot.slane %v212, %v458
          %460 = vrot.lane.b32.xlu0 %v459, 127
          %v461 = vpop.permute.xlu0 %460
          %v463 = vsel %vm236, %v451, 0
          %v466 = vsel %vm240, %v461, 0
          %468 = vmatprep.subr.bf16.mxu0 0
          %469 = vmatpush1.bf16.msra.mxu0 %v466
          %470 = vmatprep.subr.bf16.mxu0 0
          %471 = vmatpush1.bf16.msra.mxu0 0
          %472 = vmatprep.subr.bf16.mxu0 0
          %473 = vmatpush1.bf16.msra.mxu0 0
          %474 = vmatprep.subr.bf16.mxu0 0
          %475 = vmatpush1.bf16.msra.mxu0 0
          %476 = vmatprep.subr.bf16.mxu0 0
          %477 = vmatpush1.bf16.msra.mxu0 0
          %478 = vmatprep.subr.bf16.mxu0 0
          %479 = vmatpush1.bf16.msra.mxu0 0
          %480 = vmatprep.subr.bf16.mxu0 0
          %481 = vmatpush1.bf16.msra.mxu0 0
          %482 = vmatprep.subr.bf16.mxu0 0
          %483 = vmatpush1.bf16.msra.mxu0 0
          %484 = vmatprep.subr.bf16.mxu0 0
          %485 = vmatpush1.bf16.msra.mxu0 0
          %486 = vmatprep.subr.bf16.mxu0 0
          %487 = vmatpush1.bf16.msra.mxu0 0
          %488 = vmatprep.subr.bf16.mxu0 0
          %489 = vmatpush1.bf16.msra.mxu0 0
          %490 = vmatprep.subr.bf16.mxu0 0
          %491 = vmatpush1.bf16.msra.mxu0 0
          %492 = vmatprep.subr.bf16.mxu0 0
          %493 = vmatpush1.bf16.msra.mxu0 0
          %494 = vmatprep.subr.bf16.mxu0 0
          %495 = vmatpush1.bf16.msra.mxu0 0
          %496 = vmatprep.subr.bf16.mxu0 0
          %497 = vmatpush1.bf16.msra.mxu0 0
          %498 = vmatprep.subr.bf16.mxu0 0
          %499 = vmatpush1.bf16.msra.mxu0 0
          %500 = vmatprep.mubr.bf16.mxu0 0
          %501 = vmatmul.mubr.bf16.gmra.mrb[0].mxu0 %v463
          %v502 = vpop.f32.mrb[0].mxu0
          %v503 = vadd.f32 0.0, %v502
          %v504 = vpop.f32.mrb[0].mxu0
          %v505 = vpop.f32.mrb[0].mxu0
          %v506 = vadd.f32 0.0, %v505
          %v507 = vpop.f32.mrb[0].mxu0
          %508 = vdwg.mxu0
          %v509 = vadd.f32 %v445, %v503
          %v510 = vadd.f32 %v446, %v506
          %v513 = vunpack.c.l.b16 %v198
          %v514 = vunpack.c.l.b16 %v199
          %v515 = vpack.c.b16 %v514, %v513
          %516 = vrot.lane.b32.xlu0 %v459, 126
          %v517 = vpop.permute.xlu0 %516
          %v519 = vsel %vm236, %v515, 0
          %v522 = vsel %vm240, %v517, 0
          %524 = vmatprep.subr.bf16.mxu0 0
          %525 = vmatpush1.bf16.msra.mxu0 %v522
          %526 = vmatprep.subr.bf16.mxu0 0
          %527 = vmatpush1.bf16.msra.mxu0 0
          %528 = vmatprep.subr.bf16.mxu0 0
          %529 = vmatpush1.bf16.msra.mxu0 0
          %530 = vmatprep.subr.bf16.mxu0 0
          %531 = vmatpush1.bf16.msra.mxu0 0
          %532 = vmatprep.subr.bf16.mxu0 0
          %533 = vmatpush1.bf16.msra.mxu0 0
          %534 = vmatprep.subr.bf16.mxu0 0
          %535 = vmatpush1.bf16.msra.mxu0 0
          %536 = vmatprep.subr.bf16.mxu0 0
          %537 = vmatpush1.bf16.msra.mxu0 0
          %538 = vmatprep.subr.bf16.mxu0 0
          %539 = vmatpush1.bf16.msra.mxu0 0
          %540 = vmatprep.subr.bf16.mxu0 0
          %541 = vmatpush1.bf16.msra.mxu0 0
          %542 = vmatprep.subr.bf16.mxu0 0
          %543 = vmatpush1.bf16.msra.mxu0 0
          %544 = vmatprep.subr.bf16.mxu0 0
          %545 = vmatpush1.bf16.msra.mxu0 0
          %546 = vmatprep.subr.bf16.mxu0 0
          %547 = vmatpush1.bf16.msra.mxu0 0
          %548 = vmatprep.subr.bf16.mxu0 0
          %549 = vmatpush1.bf16.msra.mxu0 0
          %550 = vmatprep.subr.bf16.mxu0 0
          %551 = vmatpush1.bf16.msra.mxu0 0
          %552 = vmatprep.subr.bf16.mxu0 0
          %553 = vmatpush1.bf16.msra.mxu0 0
          %554 = vmatprep.subr.bf16.mxu0 0
          %555 = vmatpush1.bf16.msra.mxu0 0
          %556 = vmatprep.mubr.bf16.mxu0 0
          %557 = vmatmul.mubr.bf16.gmra.mrb[0].mxu0 %v519
          %v558 = vpop.f32.mrb[0].mxu0
          %v559 = vadd.f32 0.0, %v558
          %v560 = vpop.f32.mrb[0].mxu0
          %v561 = vpop.f32.mrb[0].mxu0
          %v562 = vadd.f32 0.0, %v561
          %v563 = vpop.f32.mrb[0].mxu0
          %564 = vdwg.mxu0
          %v565 = vadd.f32 %v509, %v559
          %v566 = vadd.f32 %v510, %v562
          %v569 = vunpack.c.l.b16 %v201
          %v570 = vunpack.c.l.b16 %v202
          %v571 = vpack.c.b16 %v570, %v569
          %v573 = vsel %vm236, %v571, 0
          %v576 = vsel %vm240, %v213, 0
          %578 = vmatprep.subr.bf16.mxu0 0
          %579 = vmatpush1.bf16.msra.mxu0 %v576
          %580 = vmatprep.subr.bf16.mxu0 0
          %581 = vmatpush1.bf16.msra.mxu0 0
          %582 = vmatprep.subr.bf16.mxu0 0
          %583 = vmatpush1.bf16.msra.mxu0 0
          %584 = vmatprep.subr.bf16.mxu0 0
          %585 = vmatpush1.bf16.msra.mxu0 0
          %586 = vmatprep.subr.bf16.mxu0 0
          %587 = vmatpush1.bf16.msra.mxu0 0
          %588 = vmatprep.subr.bf16.mxu0 0
          %589 = vmatpush1.bf16.msra.mxu0 0
          %590 = vmatprep.subr.bf16.mxu0 0
          %591 = vmatpush1.bf16.msra.mxu0 0
          %592 = vmatprep.subr.bf16.mxu0 0
          %593 = vmatpush1.bf16.msra.mxu0 0
          %594 = vmatprep.subr.bf16.mxu0 0
          %595 = vmatpush1.bf16.msra.mxu0 0
          %596 = vmatprep.subr.bf16.mxu0 0
          %597 = vmatpush1.bf16.msra.mxu0 0
          %598 = vmatprep.subr.bf16.mxu0 0
          %599 = vmatpush1.bf16.msra.mxu0 0
          %600 = vmatprep.subr.bf16.mxu0 0
          %601 = vmatpush1.bf16.msra.mxu0 0
          %602 = vmatprep.subr.bf16.mxu0 0
          %603 = vmatpush1.bf16.msra.mxu0 0
          %604 = vmatprep.subr.bf16.mxu0 0
          %605 = vmatpush1.bf16.msra.mxu0 0
          %606 = vmatprep.subr.bf16.mxu0 0
          %607 = vmatpush1.bf16.msra.mxu0 0
          %608 = vmatprep.subr.bf16.mxu0 0
          %609 = vmatpush1.bf16.msra.mxu0 0
          %610 = vmatprep.mubr.bf16.mxu0 0
          %611 = vmatmul.mubr.bf16.gmra.mrb[0].mxu0 %v573
          %v612 = vpop.f32.mrb[0].mxu0
          %v613 = vadd.f32 0.0, %v612
          %v614 = vpop.f32.mrb[0].mxu0
          %v615 = vpop.f32.mrb[0].mxu0
          %v616 = vadd.f32 0.0, %v615
          %v617 = vpop.f32.mrb[0].mxu0
          %618 = vdwg.mxu0
          %v619 = vadd.f32 %v565, %v613
          %v620 = vadd.f32 %v566, %v616
          %v623 = vunpack.c.l.b16 %v204
          %v624 = vunpack.c.l.b16 %v205
          %v625 = vpack.c.b16 %v624, %v623
          %v628 = vunpack.c.l.s4 1983009808
          %v629 = vunpack.c.0.s8 %v628
          %v630 = vlaneseq
          %v631 = vshrl.u32 %v630, 7
          %v632 = vsub.s32 %v629, %v631
          %v633 = vrot.slane %v213, %v632
          %634 = vrot.lane.b32.xlu0 %v633, 127
          %v635 = vpop.permute.xlu0 %634
          %v637 = vsel %vm236, %v625, 0
          %v640 = vsel %vm240, %v635, 0
          %642 = vmatprep.subr.bf16.mxu0 0
          %643 = vmatpush1.bf16.msra.mxu0 %v640
          %644 = vmatprep.subr.bf16.mxu0 0
          %645 = vmatpush1.bf16.msra.mxu0 0
          %646 = vmatprep.subr.bf16.mxu0 0
          %647 = vmatpush1.bf16.msra.mxu0 0
          %648 = vmatprep.subr.bf16.mxu0 0
          %649 = vmatpush1.bf16.msra.mxu0 0
          %650 = vmatprep.subr.bf16.mxu0 0
          %651 = vmatpush1.bf16.msra.mxu0 0
          %652 = vmatprep.subr.bf16.mxu0 0
          %653 = vmatpush1.bf16.msra.mxu0 0
          %654 = vmatprep.subr.bf16.mxu0 0
          %655 = vmatpush1.bf16.msra.mxu0 0
          %656 = vmatprep.subr.bf16.mxu0 0
          %657 = vmatpush1.bf16.msra.mxu0 0
          %658 = vmatprep.subr.bf16.mxu0 0
          %659 = vmatpush1.bf16.msra.mxu0 0
          %660 = vmatprep.subr.bf16.mxu0 0
          %661 = vmatpush1.bf16.msra.mxu0 0
          %662 = vmatprep.subr.bf16.mxu0 0
          %663 = vmatpush1.bf16.msra.mxu0 0
          %664 = vmatprep.subr.bf16.mxu0 0
          %665 = vmatpush1.bf16.msra.mxu0 0
          %666 = vmatprep.subr.bf16.mxu0 0
          %667 = vmatpush1.bf16.msra.mxu0 0
          %668 = vmatprep.subr.bf16.mxu0 0
          %669 = vmatpush1.bf16.msra.mxu0 0
          %670 = vmatprep.subr.bf16.mxu0 0
          %671 = vmatpush1.bf16.msra.mxu0 0
          %672 = vmatprep.subr.bf16.mxu0 0
          %673 = vmatpush1.bf16.msra.mxu0 0
          %674 = vmatprep.mubr.bf16.mxu0 0
          %675 = vmatmul.mubr.bf16.gmra.mrb[0].mxu0 %v637
          %v676 = vpop.f32.mrb[0].mxu0
          %v677 = vadd.f32 0.0, %v676
          %v678 = vpop.f32.mrb[0].mxu0
          %v679 = vpop.f32.mrb[0].mxu0
          %v680 = vadd.f32 0.0, %v679
          %v681 = vpop.f32.mrb[0].mxu0
          %682 = vdwg.mxu0
          %v683 = vadd.f32 %v619, %v677
          %v684 = vadd.f32 %v620, %v680
          %v687 = vunpack.c.l.b16 %v207
          %v688 = vunpack.c.l.b16 %v208
          %v689 = vpack.c.b16 %v688, %v687
          %690 = vrot.lane.b32.xlu0 %v633, 126
          %v691 = vpop.permute.xlu0 %690
          %v693 = vsel %vm236, %v689, 0
          %v696 = vsel %vm240, %v691, 0
          %698 = vmatprep.subr.bf16.mxu0 0
          %699 = vmatpush1.bf16.msra.mxu0 %v696
          %700 = vmatprep.subr.bf16.mxu0 0
          %701 = vmatpush1.bf16.msra.mxu0 0
          %702 = vmatprep.subr.bf16.mxu0 0
          %703 = vmatpush1.bf16.msra.mxu0 0
          %704 = vmatprep.subr.bf16.mxu0 0
          %705 = vmatpush1.bf16.msra.mxu0 0
          %706 = vmatprep.subr.bf16.mxu0 0
          %707 = vmatpush1.bf16.msra.mxu0 0
          %708 = vmatprep.subr.bf16.mxu0 0
          %709 = vmatpush1.bf16.msra.mxu0 0
          %710 = vmatprep.subr.bf16.mxu0 0
          %711 = vmatpush1.bf16.msra.mxu0 0
          %712 = vmatprep.subr.bf16.mxu0 0
          %713 = vmatpush1.bf16.msra.mxu0 0
          %714 = vmatprep.subr.bf16.mxu0 0
          %715 = vmatpush1.bf16.msra.mxu0 0
          %716 = vmatprep.subr.bf16.mxu0 0
          %717 = vmatpush1.bf16.msra.mxu0 0
          %718 = vmatprep.subr.bf16.mxu0 0
          %719 = vmatpush1.bf16.msra.mxu0 0
          %720 = vmatprep.subr.bf16.mxu0 0
          %721 = vmatpush1.bf16.msra.mxu0 0
          %722 = vmatprep.subr.bf16.mxu0 0
          %723 = vmatpush1.bf16.msra.mxu0 0
          %724 = vmatprep.subr.bf16.mxu0 0
          %725 = vmatpush1.bf16.msra.mxu0 0
          %726 = vmatprep.subr.bf16.mxu0 0
          %727 = vmatpush1.bf16.msra.mxu0 0
          %728 = vmatprep.subr.bf16.mxu0 0
          %729 = vmatpush1.bf16.msra.mxu0 0
          %730 = vmatprep.mubr.bf16.mxu0 0
          %731 = vmatmul.mubr.bf16.gmra.mrb[0].mxu0 %v693
          %v732 = vpop.f32.mrb[0].mxu0
          %v733 = vadd.f32 0.0, %v732
          %v734 = vpop.f32.mrb[0].mxu0
          %v735 = vpop.f32.mrb[0].mxu0
          %v736 = vadd.f32 0.0, %v735
          %v737 = vpop.f32.mrb[0].mxu0
          %738 = vdwg.mxu0
          %v739 = vadd.f32 %v683, %v733
          %v740 = vadd.f32 %v684, %v736
          %v741 = vadd.f32 %v739, 0.0
          %v742 = vadd.f32 %v740, 0.0
          %v743 = vmul.f32 %v739, %v739
          %v744 = vmul.f32 %v740, %v740
          %v745 = vadd.f32 %v743, 0.0
          %v746 = vadd.f32 %v744, 0.0
          %v747 = vpack.c.bf16 %v740, %v739
          %s748 = smul.addr %s168, 8
          %s749 = scalar_lea.vmem [#allocation2], %s748
          %vm750 = vcmask 261120
          %751 = vst.msk [vmem:[%s749] sm:$0xff] %vm750, %v747
          %752 = vmatprep.subr.bf16.mxu0 0
          %753 = vmatpush1.bf16.msra.mxu0 %v466
          %754 = vmatprep.subr.bf16.mxu0 0
          %755 = vmatpush1.bf16.msra.mxu0 0
          %756 = vmatprep.subr.bf16.mxu0 0
          %757 = vmatpush1.bf16.msra.mxu0 0
          %758 = vmatprep.subr.bf16.mxu0 0
          %759 = vmatpush1.bf16.msra.mxu0 0
          %760 = vmatprep.subr.bf16.mxu0 0
          %761 = vmatpush1.bf16.msra.mxu0 0
          %762 = vmatprep.subr.bf16.mxu0 0
          %763 = vmatpush1.bf16.msra.mxu0 0
          %764 = vmatprep.subr.bf16.mxu0 0
          %765 = vmatpush1.bf16.msra.mxu0 0
          %766 = vmatprep.subr.bf16.mxu0 0
          %767 = vmatpush1.bf16.msra.mxu0 0
          %768 = vmatprep.subr.bf16.mxu0 0
          %769 = vmatpush1.bf16.msra.mxu0 0
          %770 = vmatprep.subr.bf16.mxu0 0
          %771 = vmatpush1.bf16.msra.mxu0 0
          %772 = vmatprep.subr.bf16.mxu0 0
          %773 = vmatpush1.bf16.msra.mxu0 0
          %774 = vmatprep.subr.bf16.mxu0 0
          %775 = vmatpush1.bf16.msra.mxu0 0
          %776 = vmatprep.subr.bf16.mxu0 0
          %777 = vmatpush1.bf16.msra.mxu0 0
          %778 = vmatprep.subr.bf16.mxu0 0
          %779 = vmatpush1.bf16.msra.mxu0 0
          %780 = vmatprep.subr.bf16.mxu0 0
          %781 = vmatpush1.bf16.msra.mxu0 0
          %782 = vmatprep.subr.bf16.mxu0 0
          %783 = vmatpush1.bf16.msra.mxu0 0
          %784 = vmatprep.mubr.bf16.mxu0 0
          %785 = vmatmul.mubr.bf16.gmra.mrb[0].mxu0 %v238
          %v786 = vpop.f32.mrb[0].mxu0
          %v787 = vadd.f32 0.0, %v786
          %v788 = vpop.f32.mrb[0].mxu0
          %v789 = vpop.f32.mrb[0].mxu0
          %v790 = vadd.f32 0.0, %v789
          %v791 = vpop.f32.mrb[0].mxu0
          %792 = vdwg.mxu0
          %793 = vmatprep.subr.bf16.mxu0 0
          %794 = vmatpush1.bf16.msra.mxu0 %v402
          %795 = vmatprep.subr.bf16.mxu0 0
          %796 = vmatpush1.bf16.msra.mxu0 0
          %797 = vmatprep.subr.bf16.mxu0 0
          %798 = vmatpush1.bf16.msra.mxu0 0
          %799 = vmatprep.subr.bf16.mxu0 0
          %800 = vmatpush1.bf16.msra.mxu0 0
          %801 = vmatprep.subr.bf16.mxu0 0
          %802 = vmatpush1.bf16.msra.mxu0 0
          %803 = vmatprep.subr.bf16.mxu0 0
          %804 = vmatpush1.bf16.msra.mxu0 0
          %805 = vmatprep.subr.bf16.mxu0 0
          %806 = vmatpush1.bf16.msra.mxu0 0
          %807 = vmatprep.subr.bf16.mxu0 0
          %808 = vmatpush1.bf16.msra.mxu0 0
          %809 = vmatprep.subr.bf16.mxu0 0
          %810 = vmatpush1.bf16.msra.mxu0 0
          %811 = vmatprep.subr.bf16.mxu0 0
          %812 = vmatpush1.bf16.msra.mxu0 0
          %813 = vmatprep.subr.bf16.mxu0 0
          %814 = vmatpush1.bf16.msra.mxu0 0
          %815 = vmatprep.subr.bf16.mxu0 0
          %816 = vmatpush1.bf16.msra.mxu0 0
          %817 = vmatprep.subr.bf16.mxu0 0
          %818 = vmatpush1.bf16.msra.mxu0 0
          %819 = vmatprep.subr.bf16.mxu0 0
          %820 = vmatpush1.bf16.msra.mxu0 0
          %821 = vmatprep.subr.bf16.mxu0 0
          %822 = vmatpush1.bf16.msra.mxu0 0
          %823 = vmatprep.subr.bf16.mxu0 0
          %824 = vmatpush1.bf16.msra.mxu0 0
          %825 = vmatprep.mubr.bf16.mxu0 0
          %826 = vmatmul.mubr.bf16.gmra.mrb[0].mxu0 %v291
          %v827 = vpop.f32.mrb[0].mxu0
          %v828 = vadd.f32 %v787, %v827
          %v829 = vpop.f32.mrb[0].mxu0
          %v830 = vpop.f32.mrb[0].mxu0
          %v831 = vadd.f32 %v790, %v830
          %v832 = vpop.f32.mrb[0].mxu0
          %833 = vdwg.mxu0
          %834 = vmatprep.subr.bf16.mxu0 0
          %835 = vmatpush1.bf16.msra.mxu0 %v522
          %836 = vmatprep.subr.bf16.mxu0 0
          %837 = vmatpush1.bf16.msra.mxu0 0
          %838 = vmatprep.subr.bf16.mxu0 0
          %839 = vmatpush1.bf16.msra.mxu0 0
          %840 = vmatprep.subr.bf16.mxu0 0
          %841 = vmatpush1.bf16.msra.mxu0 0
          %842 = vmatprep.subr.bf16.mxu0 0
          %843 = vmatpush1.bf16.msra.mxu0 0
          %844 = vmatprep.subr.bf16.mxu0 0
          %845 = vmatpush1.bf16.msra.mxu0 0
          %846 = vmatprep.subr.bf16.mxu0 0
          %847 = vmatpush1.bf16.msra.mxu0 0
          %848 = vmatprep.subr.bf16.mxu0 0
          %849 = vmatpush1.bf16.msra.mxu0 0
          %850 = vmatprep.subr.bf16.mxu0 0
          %851 = vmatpush1.bf16.msra.mxu0 0
          %852 = vmatprep.subr.bf16.mxu0 0
          %853 = vmatpush1.bf16.msra.mxu0 0
          %854 = vmatprep.subr.bf16.mxu0 0
          %855 = vmatpush1.bf16.msra.mxu0 0
          %856 = vmatprep.subr.bf16.mxu0 0
          %857 = vmatpush1.bf16.msra.mxu0 0
          %858 = vmatprep.subr.bf16.mxu0 0
          %859 = vmatpush1.bf16.msra.mxu0 0
          %860 = vmatprep.subr.bf16.mxu0 0
          %861 = vmatpush1.bf16.msra.mxu0 0
          %862 = vmatprep.subr.bf16.mxu0 0
          %863 = vmatpush1.bf16.msra.mxu0 0
          %864 = vmatprep.subr.bf16.mxu0 0
          %865 = vmatpush1.bf16.msra.mxu0 0
          %866 = vmatprep.mubr.bf16.mxu0 0
          %867 = vmatmul.mubr.bf16.gmra.mrb[0].mxu0 %v345
          %v868 = vpop.f32.mrb[0].mxu0
          %v869 = vadd.f32 0.0, %v868
          %v870 = vpop.f32.mrb[0].mxu0
          %v871 = vpop.f32.mrb[0].mxu0
          %v872 = vadd.f32 0.0, %v871
          %v873 = vpop.f32.mrb[0].mxu0
          %874 = vdwg.mxu0
          %v875 = vadd.f32 %v828, %v869
          %v876 = vadd.f32 %v831, %v872
          %877 = vmatprep.subr.bf16.mxu0 0
          %878 = vmatpush1.bf16.msra.mxu0 %v576
          %879 = vmatprep.subr.bf16.mxu0 0
          %880 = vmatpush1.bf16.msra.mxu0 0
          %881 = vmatprep.subr.bf16.mxu0 0
          %882 = vmatpush1.bf16.msra.mxu0 0
          %883 = vmatprep.subr.bf16.mxu0 0
          %884 = vmatpush1.bf16.msra.mxu0 0
          %885 = vmatprep.subr.bf16.mxu0 0
          %886 = vmatpush1.bf16.msra.mxu0 0
          %887 = vmatprep.subr.bf16.mxu0 0
          %888 = vmatpush1.bf16.msra.mxu0 0
          %889 = vmatprep.subr.bf16.mxu0 0
          %890 = vmatpush1.bf16.msra.mxu0 0
          %891 = vmatprep.subr.bf16.mxu0 0
          %892 = vmatpush1.bf16.msra.mxu0 0
          %893 = vmatprep.subr.bf16.mxu0 0
          %894 = vmatpush1.bf16.msra.mxu0 0
          %895 = vmatprep.subr.bf16.mxu0 0
          %896 = vmatpush1.bf16.msra.mxu0 0
          %897 = vmatprep.subr.bf16.mxu0 0
          %898 = vmatpush1.bf16.msra.mxu0 0
          %899 = vmatprep.subr.bf16.mxu0 0
          %900 = vmatpush1.bf16.msra.mxu0 0
          %901 = vmatprep.subr.bf16.mxu0 0
          %902 = vmatpush1.bf16.msra.mxu0 0
          %903 = vmatprep.subr.bf16.mxu0 0
          %904 = vmatpush1.bf16.msra.mxu0 0
          %905 = vmatprep.subr.bf16.mxu0 0
          %906 = vmatpush1.bf16.msra.mxu0 0
          %907 = vmatprep.subr.bf16.mxu0 0
          %908 = vmatpush1.bf16.msra.mxu0 0
          %909 = vmatprep.mubr.bf16.mxu0 0
          %910 = vmatmul.mubr.bf16.gmra.mrb[0].mxu0 %v399
          %v911 = vpop.f32.mrb[0].mxu0
          %v912 = vadd.f32 0.0, %v911
          %v913 = vpop.f32.mrb[0].mxu0
          %v914 = vpop.f32.mrb[0].mxu0
          %v915 = vadd.f32 0.0, %v914
          %v916 = vpop.f32.mrb[0].mxu0
          %917 = vdwg.mxu0
          %v918 = vadd.f32 %v875, %v912
          %v919 = vadd.f32 %v876, %v915
          %920 = vmatprep.subr.bf16.mxu0 0
          %921 = vmatpush1.bf16.msra.mxu0 %v640
          %922 = vmatprep.subr.bf16.mxu0 0
          %923 = vmatpush1.bf16.msra.mxu0 0
          %924 = vmatprep.subr.bf16.mxu0 0
          %925 = vmatpush1.bf16.msra.mxu0 0
          %926 = vmatprep.subr.bf16.mxu0 0
          %927 = vmatpush1.bf16.msra.mxu0 0
          %928 = vmatprep.subr.bf16.mxu0 0
          %929 = vmatpush1.bf16.msra.mxu0 0
          %930 = vmatprep.subr.bf16.mxu0 0
          %931 = vmatpush1.bf16.msra.mxu0 0
          %932 = vmatprep.subr.bf16.mxu0 0
          %933 = vmatpush1.bf16.msra.mxu0 0
          %934 = vmatprep.subr.bf16.mxu0 0
          %935 = vmatpush1.bf16.msra.mxu0 0
          %936 = vmatprep.subr.bf16.mxu0 0
          %937 = vmatpush1.bf16.msra.mxu0 0
          %938 = vmatprep.subr.bf16.mxu0 0
          %939 = vmatpush1.bf16.msra.mxu0 0
          %940 = vmatprep.subr.bf16.mxu0 0
          %941 = vmatpush1.bf16.msra.mxu0 0
          %942 = vmatprep.subr.bf16.mxu0 0
          %943 = vmatpush1.bf16.msra.mxu0 0
          %944 = vmatprep.subr.bf16.mxu0 0
          %945 = vmatpush1.bf16.msra.mxu0 0
          %946 = vmatprep.subr.bf16.mxu0 0
          %947 = vmatpush1.bf16.msra.mxu0 0
          %948 = vmatprep.subr.bf16.mxu0 0
          %949 = vmatpush1.bf16.msra.mxu0 0
          %950 = vmatprep.subr.bf16.mxu0 0
          %951 = vmatpush1.bf16.msra.mxu0 0
          %952 = vmatprep.mubr.bf16.mxu0 0
          %953 = vmatmul.mubr.bf16.gmra.mrb[0].mxu0 %v463
          %v954 = vpop.f32.mrb[0].mxu0
          %v955 = vadd.f32 0.0, %v954
          %v956 = vpop.f32.mrb[0].mxu0
          %v957 = vpop.f32.mrb[0].mxu0
          %v958 = vadd.f32 0.0, %v957
          %v959 = vpop.f32.mrb[0].mxu0
          %960 = vdwg.mxu0
          %v961 = vadd.f32 %v918, %v955
          %v962 = vadd.f32 %v919, %v958
          %963 = vmatprep.subr.bf16.mxu0 0
          %964 = vmatpush1.bf16.msra.mxu0 %v696
          %965 = vmatprep.subr.bf16.mxu0 0
          %966 = vmatpush1.bf16.msra.mxu0 0
          %967 = vmatprep.subr.bf16.mxu0 0
          %968 = vmatpush1.bf16.msra.mxu0 0
          %969 = vmatprep.subr.bf16.mxu0 0
          %970 = vmatpush1.bf16.msra.mxu0 0
          %971 = vmatprep.subr.bf16.mxu0 0
          %972 = vmatpush1.bf16.msra.mxu0 0
          %973 = vmatprep.subr.bf16.mxu0 0
          %974 = vmatpush1.bf16.msra.mxu0 0
          %975 = vmatprep.subr.bf16.mxu0 0
          %976 = vmatpush1.bf16.msra.mxu0 0
          %977 = vmatprep.subr.bf16.mxu0 0
          %978 = vmatpush1.bf16.msra.mxu0 0
          %979 = vmatprep.subr.bf16.mxu0 0
          %980 = vmatpush1.bf16.msra.mxu0 0
          %981 = vmatprep.subr.bf16.mxu0 0
          %982 = vmatpush1.bf16.msra.mxu0 0
          %983 = vmatprep.subr.bf16.mxu0 0
          %984 = vmatpush1.bf16.msra.mxu0 0
          %985 = vmatprep.subr.bf16.mxu0 0
          %986 = vmatpush1.bf16.msra.mxu0 0
          %987 = vmatprep.subr.bf16.mxu0 0
          %988 = vmatpush1.bf16.msra.mxu0 0
          %989 = vmatprep.subr.bf16.mxu0 0
          %990 = vmatpush1.bf16.msra.mxu0 0
          %991 = vmatprep.subr.bf16.mxu0 0
          %992 = vmatpush1.bf16.msra.mxu0 0
          %993 = vmatprep.subr.bf16.mxu0 0
          %994 = vmatpush1.bf16.msra.mxu0 0
          %995 = vmatprep.mubr.bf16.mxu0 0
          %996 = vmatmul.mubr.bf16.gmra.mrb[0].mxu0 %v519
          %v997 = vpop.f32.mrb[0].mxu0
          %v998 = vadd.f32 0.0, %v997
          %v999 = vpop.f32.mrb[0].mxu0
          %v1000 = vpop.f32.mrb[0].mxu0
          %v1001 = vadd.f32 0.0, %v1000
          %v1002 = vpop.f32.mrb[0].mxu0
          %1003 = vdwg.mxu0
          %v1004 = vadd.f32 %v961, %v998
          %v1005 = vadd.f32 %v962, %v1001
          %v1007 = vsel %vm240, %v214, 0
          %1009 = vmatprep.subr.bf16.mxu0 0
          %1010 = vmatpush1.bf16.msra.mxu0 %v1007
          %1011 = vmatprep.subr.bf16.mxu0 0
          %1012 = vmatpush1.bf16.msra.mxu0 0
          %1013 = vmatprep.subr.bf16.mxu0 0
          %1014 = vmatpush1.bf16.msra.mxu0 0
          %1015 = vmatprep.subr.bf16.mxu0 0
          %1016 = vmatpush1.bf16.msra.mxu0 0
          %1017 = vmatprep.subr.bf16.mxu0 0
          %1018 = vmatpush1.bf16.msra.mxu0 0
          %1019 = vmatprep.subr.bf16.mxu0 0
          %1020 = vmatpush1.bf16.msra.mxu0 0
          %1021 = vmatprep.subr.bf16.mxu0 0
          %1022 = vmatpush1.bf16.msra.mxu0 0
          %1023 = vmatprep.subr.bf16.mxu0 0
          %1024 = vmatpush1.bf16.msra.mxu0 0
          %1025 = vmatprep.subr.bf16.mxu0 0
          %1026 = vmatpush1.bf16.msra.mxu0 0
          %1027 = vmatprep.subr.bf16.mxu0 0
          %1028 = vmatpush1.bf16.msra.mxu0 0
          %1029 = vmatprep.subr.bf16.mxu0 0
          %1030 = vmatpush1.bf16.msra.mxu0 0
          %1031 = vmatprep.subr.bf16.mxu0 0
          %1032 = vmatpush1.bf16.msra.mxu0 0
          %1033 = vmatprep.subr.bf16.mxu0 0
          %1034 = vmatpush1.bf16.msra.mxu0 0
          %1035 = vmatprep.subr.bf16.mxu0 0
          %1036 = vmatpush1.bf16.msra.mxu0 0
          %1037 = vmatprep.subr.bf16.mxu0 0
          %1038 = vmatpush1.bf16.msra.mxu0 0
          %1039 = vmatprep.subr.bf16.mxu0 0
          %1040 = vmatpush1.bf16.msra.mxu0 0
          %1041 = vmatprep.mubr.bf16.mxu0 0
          %1042 = vmatmul.mubr.bf16.gmra.mrb[0].mxu0 %v573
          %v1043 = vpop.f32.mrb[0].mxu0
          %v1044 = vadd.f32 0.0, %v1043
          %v1045 = vpop.f32.mrb[0].mxu0
          %v1046 = vpop.f32.mrb[0].mxu0
          %v1047 = vadd.f32 0.0, %v1046
          %v1048 = vpop.f32.mrb[0].mxu0
          %1049 = vdwg.mxu0
          %v1050 = vadd.f32 %v1004, %v1044
          %v1051 = vadd.f32 %v1005, %v1047
          %v1054 = vunpack.c.l.s4 1983009808
          %v1055 = vunpack.c.0.s8 %v1054
          %v1056 = vlaneseq
          %v1057 = vshrl.u32 %v1056, 7
          %v1058 = vsub.s32 %v1055, %v1057
          %v1059 = vrot.slane %v214, %v1058
          %1060 = vrot.lane.b32.xlu0 %v1059, 127
          %v1061 = vpop.permute.xlu0 %1060
          %v1063 = vsel %vm240, %v1061, 0
          %1065 = vmatprep.subr.bf16.mxu0 0
          %1066 = vmatpush1.bf16.msra.mxu0 %v1063
          %1067 = vmatprep.subr.bf16.mxu0 0
          %1068 = vmatpush1.bf16.msra.mxu0 0
          %1069 = vmatprep.subr.bf16.mxu0 0
          %1070 = vmatpush1.bf16.msra.mxu0 0
          %1071 = vmatprep.subr.bf16.mxu0 0
          %1072 = vmatpush1.bf16.msra.mxu0 0
          %1073 = vmatprep.subr.bf16.mxu0 0
          %1074 = vmatpush1.bf16.msra.mxu0 0
          %1075 = vmatprep.subr.bf16.mxu0 0
          %1076 = vmatpush1.bf16.msra.mxu0 0
          %1077 = vmatprep.subr.bf16.mxu0 0
          %1078 = vmatpush1.bf16.msra.mxu0 0
          %1079 = vmatprep.subr.bf16.mxu0 0
          %1080 = vmatpush1.bf16.msra.mxu0 0
          %1081 = vmatprep.subr.bf16.mxu0 0
          %1082 = vmatpush1.bf16.msra.mxu0 0
          %1083 = vmatprep.subr.bf16.mxu0 0
          %1084 = vmatpush1.bf16.msra.mxu0 0
          %1085 = vmatprep.subr.bf16.mxu0 0
          %1086 = vmatpush1.bf16.msra.mxu0 0
          %1087 = vmatprep.subr.bf16.mxu0 0
          %1088 = vmatpush1.bf16.msra.mxu0 0
          %1089 = vmatprep.subr.bf16.mxu0 0
          %1090 = vmatpush1.bf16.msra.mxu0 0
          %1091 = vmatprep.subr.bf16.mxu0 0
          %1092 = vmatpush1.bf16.msra.mxu0 0
          %1093 = vmatprep.subr.bf16.mxu0 0
          %1094 = vmatpush1.bf16.msra.mxu0 0
          %1095 = vmatprep.subr.bf16.mxu0 0
          %1096 = vmatpush1.bf16.msra.mxu0 0
          %1097 = vmatprep.mubr.bf16.mxu0 0
          %1098 = vmatmul.mubr.bf16.gmra.mrb[0].mxu0 %v637
          %v1099 = vpop.f32.mrb[0].mxu0
          %v1100 = vadd.f32 0.0, %v1099
          %v1101 = vpop.f32.mrb[0].mxu0
          %v1102 = vpop.f32.mrb[0].mxu0
          %v1103 = vadd.f32 0.0, %v1102
          %v1104 = vpop.f32.mrb[0].mxu0
          %1105 = vdwg.mxu0
          %v1106 = vadd.f32 %v1050, %v1100
          %v1107 = vadd.f32 %v1051, %v1103
          %1108 = vrot.lane.b32.xlu0 %v1059, 126
          %v1109 = vpop.permute.xlu0 %1108
          %v1111 = vsel %vm240, %v1109, 0
          %1113 = vmatprep.subr.bf16.mxu0 0
          %1114 = vmatpush1.bf16.msra.mxu0 %v1111
          %1115 = vmatprep.subr.bf16.mxu0 0
          %1116 = vmatpush1.bf16.msra.mxu0 0
          %1117 = vmatprep.subr.bf16.mxu0 0
          %1118 = vmatpush1.bf16.msra.mxu0 0
          %1119 = vmatprep.subr.bf16.mxu0 0
          %1120 = vmatpush1.bf16.msra.mxu0 0
          %1121 = vmatprep.subr.bf16.mxu0 0
          %1122 = vmatpush1.bf16.msra.mxu0 0
          %1123 = vmatprep.subr.bf16.mxu0 0
          %1124 = vmatpush1.bf16.msra.mxu0 0
          %1125 = vmatprep.subr.bf16.mxu0 0
          %1126 = vmatpush1.bf16.msra.mxu0 0
          %1127 = vmatprep.subr.bf16.mxu0 0
          %1128 = vmatpush1.bf16.msra.mxu0 0
          %1129 = vmatprep.subr.bf16.mxu0 0
          %1130 = vmatpush1.bf16.msra.mxu0 0
          %1131 = vmatprep.subr.bf16.mxu0 0
          %1132 = vmatpush1.bf16.msra.mxu0 0
          %1133 = vmatprep.subr.bf16.mxu0 0
          %1134 = vmatpush1.bf16.msra.mxu0 0
          %1135 = vmatprep.subr.bf16.mxu0 0
          %1136 = vmatpush1.bf16.msra.mxu0 0
          %1137 = vmatprep.subr.bf16.mxu0 0
          %1138 = vmatpush1.bf16.msra.mxu0 0
          %1139 = vmatprep.subr.bf16.mxu0 0
          %1140 = vmatpush1.bf16.msra.mxu0 0
          %1141 = vmatprep.subr.bf16.mxu0 0
          %1142 = vmatpush1.bf16.msra.mxu0 0
          %1143 = vmatprep.subr.bf16.mxu0 0
          %1144 = vmatpush1.bf16.msra.mxu0 0
          %1145 = vmatprep.mubr.bf16.mxu0 0
          %1146 = vmatmul.mubr.bf16.gmra.mrb[0].mxu0 %v693
          %v1147 = vpop.f32.mrb[0].mxu0
          %v1148 = vadd.f32 0.0, %v1147
          %v1149 = vpop.f32.mrb[0].mxu0
          %v1150 = vpop.f32.mrb[0].mxu0
          %v1151 = vadd.f32 0.0, %v1150
          %v1152 = vpop.f32.mrb[0].mxu0
          %1153 = vdwg.mxu0
          %v1154 = vadd.f32 %v1106, %v1148
          %v1155 = vadd.f32 %v1107, %v1151
          %v1156 = vadd.f32 %v741, %v1154
          %v1157 = vadd.f32 %v742, %v1155
          %v1158 = vmul.f32 %v1154, %v1154
          %v1159 = vmul.f32 %v1155, %v1155
          %v1160 = vadd.f32 %v745, %v1158
          %v1161 = vadd.f32 %v746, %v1159
          %v1162 = vpack.c.bf16 %v1155, %v1154
          %s1163 = sadd.s32 %s168, 1
          %s1164 = smul.addr %s1163, 8
          %s1165 = scalar_lea.vmem [#allocation2], %s1164
          %1166 = vst.msk [vmem:[%s1165] sm:$0xff] %vm750, %v1162
          %1167 = vmatprep.subr.bf16.mxu0 0
          %1168 = vmatpush1.bf16.msra.mxu0 %v640
          %1169 = vmatprep.subr.bf16.mxu0 0
          %1170 = vmatpush1.bf16.msra.mxu0 0
          %1171 = vmatprep.subr.bf16.mxu0 0
          %1172 = vmatpush1.bf16.msra.mxu0 0
          %1173 = vmatprep.subr.bf16.mxu0 0
          %1174 = vmatpush1.bf16.msra.mxu0 0
          %1175 = vmatprep.subr.bf16.mxu0 0
          %1176 = vmatpush1.bf16.msra.mxu0 0
          %1177 = vmatprep.subr.bf16.mxu0 0
          %1178 = vmatpush1.bf16.msra.mxu0 0
          %1179 = vmatprep.subr.bf16.mxu0 0
          %1180 = vmatpush1.bf16.msra.mxu0 0
          %1181 = vmatprep.subr.bf16.mxu0 0
          %1182 = vmatpush1.bf16.msra.mxu0 0
          %1183 = vmatprep.subr.bf16.mxu0 0
          %1184 = vmatpush1.bf16.msra.mxu0 0
          %1185 = vmatprep.subr.bf16.mxu0 0
          %1186 = vmatpush1.bf16.msra.mxu0 0
          %1187 = vmatprep.subr.bf16.mxu0 0
          %1188 = vmatpush1.bf16.msra.mxu0 0
          %1189 = vmatprep.subr.bf16.mxu0 0
          %1190 = vmatpush1.bf16.msra.mxu0 0
          %1191 = vmatprep.subr.bf16.mxu0 0
          %1192 = vmatpush1.bf16.msra.mxu0 0
          %1193 = vmatprep.subr.bf16.mxu0 0
          %1194 = vmatpush1.bf16.msra.mxu0 0
          %1195 = vmatprep.subr.bf16.mxu0 0
          %1196 = vmatpush1.bf16.msra.mxu0 0
          %1197 = vmatprep.subr.bf16.mxu0 0
          %1198 = vmatpush1.bf16.msra.mxu0 0
          %1199 = vmatprep.mubr.bf16.mxu0 0
          %1200 = vmatmul.mubr.bf16.gmra.mrb[0].mxu0 %v238
          %v1201 = vpop.f32.mrb[0].mxu0
          %v1202 = vadd.f32 0.0, %v1201
          %v1203 = vpop.f32.mrb[0].mxu0
          %v1204 = vpop.f32.mrb[0].mxu0
          %v1205 = vadd.f32 0.0, %v1204
          %v1206 = vpop.f32.mrb[0].mxu0
          %1207 = vdwg.mxu0
          %1208 = vmatprep.subr.bf16.mxu0 0
          %1209 = vmatpush1.bf16.msra.mxu0 %v576
          %1210 = vmatprep.subr.bf16.mxu0 0
          %1211 = vmatpush1.bf16.msra.mxu0 0
          %1212 = vmatprep.subr.bf16.mxu0 0
          %1213 = vmatpush1.bf16.msra.mxu0 0
          %1214 = vmatprep.subr.bf16.mxu0 0
          %1215 = vmatpush1.bf16.msra.mxu0 0
          %1216 = vmatprep.subr.bf16.mxu0 0
          %1217 = vmatpush1.bf16.msra.mxu0 0
          %1218 = vmatprep.subr.bf16.mxu0 0
          %1219 = vmatpush1.bf16.msra.mxu0 0
          %1220 = vmatprep.subr.bf16.mxu0 0
          %1221 = vmatpush1.bf16.msra.mxu0 0
          %1222 = vmatprep.subr.bf16.mxu0 0
          %1223 = vmatpush1.bf16.msra.mxu0 0
          %1224 = vmatprep.subr.bf16.mxu0 0
          %1225 = vmatpush1.bf16.msra.mxu0 0
          %1226 = vmatprep.subr.bf16.mxu0 0
          %1227 = vmatpush1.bf16.msra.mxu0 0
          %1228 = vmatprep.subr.bf16.mxu0 0
          %1229 = vmatpush1.bf16.msra.mxu0 0
          %1230 = vmatprep.subr.bf16.mxu0 0
          %1231 = vmatpush1.bf16.msra.mxu0 0
          %1232 = vmatprep.subr.bf16.mxu0 0
          %1233 = vmatpush1.bf16.msra.mxu0 0
          %1234 = vmatprep.subr.bf16.mxu0 0
          %1235 = vmatpush1.bf16.msra.mxu0 0
          %1236 = vmatprep.subr.bf16.mxu0 0
          %1237 = vmatpush1.bf16.msra.mxu0 0
          %1238 = vmatprep.subr.bf16.mxu0 0
          %1239 = vmatpush1.bf16.msra.mxu0 0
          %1240 = vmatprep.mubr.bf16.mxu0 0
          %1241 = vmatmul.mubr.bf16.gmra.mrb[0].mxu0 %v291
          %v1242 = vpop.f32.mrb[0].mxu0
          %v1243 = vadd.f32 %v1202, %v1242
          %v1244 = vpop.f32.mrb[0].mxu0
          %v1245 = vpop.f32.mrb[0].mxu0
          %v1246 = vadd.f32 %v1205, %v1245
          %v1247 = vpop.f32.mrb[0].mxu0
          %1248 = vdwg.mxu0
          %1249 = vmatprep.subr.bf16.mxu0 0
          %1250 = vmatpush1.bf16.msra.mxu0 %v696
          %1251 = vmatprep.subr.bf16.mxu0 0
          %1252 = vmatpush1.bf16.msra.mxu0 0
          %1253 = vmatprep.subr.bf16.mxu0 0
          %1254 = vmatpush1.bf16.msra.mxu0 0
          %1255 = vmatprep.subr.bf16.mxu0 0
          %1256 = vmatpush1.bf16.msra.mxu0 0
          %1257 = vmatprep.subr.bf16.mxu0 0
          %1258 = vmatpush1.bf16.msra.mxu0 0
          %1259 = vmatprep.subr.bf16.mxu0 0
          %1260 = vmatpush1.bf16.msra.mxu0 0
          %1261 = vmatprep.subr.bf16.mxu0 0
          %1262 = vmatpush1.bf16.msra.mxu0 0
          %1263 = vmatprep.subr.bf16.mxu0 0
          %1264 = vmatpush1.bf16.msra.mxu0 0
          %1265 = vmatprep.subr.bf16.mxu0 0
          %1266 = vmatpush1.bf16.msra.mxu0 0
          %1267 = vmatprep.subr.bf16.mxu0 0
          %1268 = vmatpush1.bf16.msra.mxu0 0
          %1269 = vmatprep.subr.bf16.mxu0 0
          %1270 = vmatpush1.bf16.msra.mxu0 0
          %1271 = vmatprep.subr.bf16.mxu0 0
          %1272 = vmatpush1.bf16.msra.mxu0 0
          %1273 = vmatprep.subr.bf16.mxu0 0
          %1274 = vmatpush1.bf16.msra.mxu0 0
          %1275 = vmatprep.subr.bf16.mxu0 0
          %1276 = vmatpush1.bf16.msra.mxu0 0
          %1277 = vmatprep.subr.bf16.mxu0 0
          %1278 = vmatpush1.bf16.msra.mxu0 0
          %1279 = vmatprep.subr.bf16.mxu0 0
          %1280 = vmatpush1.bf16.msra.mxu0 0
          %1281 = vmatprep.mubr.bf16.mxu0 0
          %1282 = vmatmul.mubr.bf16.gmra.mrb[0].mxu0 %v345
          %v1283 = vpop.f32.mrb[0].mxu0
          %v1284 = vadd.f32 0.0, %v1283
          %v1285 = vpop.f32.mrb[0].mxu0
          %v1286 = vpop.f32.mrb[0].mxu0
          %v1287 = vadd.f32 0.0, %v1286
          %v1288 = vpop.f32.mrb[0].mxu0
          %1289 = vdwg.mxu0
          %v1290 = vadd.f32 %v1243, %v1284
          %v1291 = vadd.f32 %v1246, %v1287
          %1292 = vmatprep.subr.bf16.mxu0 0
          %1293 = vmatpush1.bf16.msra.mxu0 %v1007
          %1294 = vmatprep.subr.bf16.mxu0 0
          %1295 = vmatpush1.bf16.msra.mxu0 0
          %1296 = vmatprep.subr.bf16.mxu0 0
          %1297 = vmatpush1.bf16.msra.mxu0 0
          %1298 = vmatprep.subr.bf16.mxu0 0
          %1299 = vmatpush1.bf16.msra.mxu0 0
          %1300 = vmatprep.subr.bf16.mxu0 0
          %1301 = vmatpush1.bf16.msra.mxu0 0
          %1302 = vmatprep.subr.bf16.mxu0 0
          %1303 = vmatpush1.bf16.msra.mxu0 0
          %1304 = vmatprep.subr.bf16.mxu0 0
          %1305 = vmatpush1.bf16.msra.mxu0 0
          %1306 = vmatprep.subr.bf16.mxu0 0
          %1307 = vmatpush1.bf16.msra.mxu0 0
          %1308 = vmatprep.subr.bf16.mxu0 0
          %1309 = vmatpush1.bf16.msra.mxu0 0
          %1310 = vmatprep.subr.bf16.mxu0 0
          %1311 = vmatpush1.bf16.msra.mxu0 0
          %1312 = vmatprep.subr.bf16.mxu0 0
          %1313 = vmatpush1.bf16.msra.mxu0 0
          %1314 = vmatprep.subr.bf16.mxu0 0
          %1315 = vmatpush1.bf16.msra.mxu0 0
          %1316 = vmatprep.subr.bf16.mxu0 0
          %1317 = vmatpush1.bf16.msra.mxu0 0
          %1318 = vmatprep.subr.bf16.mxu0 0
          %1319 = vmatpush1.bf16.msra.mxu0 0
          %1320 = vmatprep.subr.bf16.mxu0 0
          %1321 = vmatpush1.bf16.msra.mxu0 0
          %1322 = vmatprep.subr.bf16.mxu0 0
          %1323 = vmatpush1.bf16.msra.mxu0 0
          %1324 = vmatprep.mubr.bf16.mxu0 0
          %1325 = vmatmul.mubr.bf16.gmra.mrb[0].mxu0 %v399
          %v1326 = vpop.f32.mrb[0].mxu0
          %v1327 = vadd.f32 0.0, %v1326
          %v1328 = vpop.f32.mrb[0].mxu0
          %v1329 = vpop.f32.mrb[0].mxu0
          %v1330 = vadd.f32 0.0, %v1329
          %v1331 = vpop.f32.mrb[0].mxu0
          %1332 = vdwg.mxu0
          %v1333 = vadd.f32 %v1290, %v1327
          %v1334 = vadd.f32 %v1291, %v1330
          %1335 = vmatprep.subr.bf16.mxu0 0
          %1336 = vmatpush1.bf16.msra.mxu0 %v1063
          %1337 = vmatprep.subr.bf16.mxu0 0
          %1338 = vmatpush1.bf16.msra.mxu0 0
          %1339 = vmatprep.subr.bf16.mxu0 0
          %1340 = vmatpush1.bf16.msra.mxu0 0
          %1341 = vmatprep.subr.bf16.mxu0 0
          %1342 = vmatpush1.bf16.msra.mxu0 0
          %1343 = vmatprep.subr.bf16.mxu0 0
          %1344 = vmatpush1.bf16.msra.mxu0 0
          %1345 = vmatprep.subr.bf16.mxu0 0
          %1346 = vmatpush1.bf16.msra.mxu0 0
          %1347 = vmatprep.subr.bf16.mxu0 0
          %1348 = vmatpush1.bf16.msra.mxu0 0
          %1349 = vmatprep.subr.bf16.mxu0 0
          %1350 = vmatpush1.bf16.msra.mxu0 0
          %1351 = vmatprep.subr.bf16.mxu0 0
          %1352 = vmatpush1.bf16.msra.mxu0 0
          %1353 = vmatprep.subr.bf16.mxu0 0
          %1354 = vmatpush1.bf16.msra.mxu0 0
          %1355 = vmatprep.subr.bf16.mxu0 0
          %1356 = vmatpush1.bf16.msra.mxu0 0
          %1357 = vmatprep.subr.bf16.mxu0 0
          %1358 = vmatpush1.bf16.msra.mxu0 0
          %1359 = vmatprep.subr.bf16.mxu0 0
          %1360 = vmatpush1.bf16.msra.mxu0 0
          %1361 = vmatprep.subr.bf16.mxu0 0
          %1362 = vmatpush1.bf16.msra.mxu0 0
          %1363 = vmatprep.subr.bf16.mxu0 0
          %1364 = vmatpush1.bf16.msra.mxu0 0
          %1365 = vmatprep.subr.bf16.mxu0 0
          %1366 = vmatpush1.bf16.msra.mxu0 0
          %1367 = vmatprep.mubr.bf16.mxu0 0
          %1368 = vmatmul.mubr.bf16.gmra.mrb[0].mxu0 %v463
          %v1369 = vpop.f32.mrb[0].mxu0
          %v1370 = vadd.f32 0.0, %v1369
          %v1371 = vpop.f32.mrb[0].mxu0
          %v1372 = vpop.f32.mrb[0].mxu0
          %v1373 = vadd.f32 0.0, %v1372
          %v1374 = vpop.f32.mrb[0].mxu0
          %1375 = vdwg.mxu0
          %v1376 = vadd.f32 %v1333, %v1370
          %v1377 = vadd.f32 %v1334, %v1373
          %1378 = vmatprep.subr.bf16.mxu0 0
          %1379 = vmatpush1.bf16.msra.mxu0 %v1111
          %1380 = vmatprep.subr.bf16.mxu0 0
          %1381 = vmatpush1.bf16.msra.mxu0 0
          %1382 = vmatprep.subr.bf16.mxu0 0
          %1383 = vmatpush1.bf16.msra.mxu0 0
          %1384 = vmatprep.subr.bf16.mxu0 0
          %1385 = vmatpush1.bf16.msra.mxu0 0
          %1386 = vmatprep.subr.bf16.mxu0 0
          %1387 = vmatpush1.bf16.msra.mxu0 0
          %1388 = vmatprep.subr.bf16.mxu0 0
          %1389 = vmatpush1.bf16.msra.mxu0 0
          %1390 = vmatprep.subr.bf16.mxu0 0
          %1391 = vmatpush1.bf16.msra.mxu0 0
          %1392 = vmatprep.subr.bf16.mxu0 0
          %1393 = vmatpush1.bf16.msra.mxu0 0
          %1394 = vmatprep.subr.bf16.mxu0 0
          %1395 = vmatpush1.bf16.msra.mxu0 0
          %1396 = vmatprep.subr.bf16.mxu0 0
          %1397 = vmatpush1.bf16.msra.mxu0 0
          %1398 = vmatprep.subr.bf16.mxu0 0
          %1399 = vmatpush1.bf16.msra.mxu0 0
          %1400 = vmatprep.subr.bf16.mxu0 0
          %1401 = vmatpush1.bf16.msra.mxu0 0
          %1402 = vmatprep.subr.bf16.mxu0 0
          %1403 = vmatpush1.bf16.msra.mxu0 0
          %1404 = vmatprep.subr.bf16.mxu0 0
          %1405 = vmatpush1.bf16.msra.mxu0 0
          %1406 = vmatprep.subr.bf16.mxu0 0
          %1407 = vmatpush1.bf16.msra.mxu0 0
          %1408 = vmatprep.subr.bf16.mxu0 0
          %1409 = vmatpush1.bf16.msra.mxu0 0
          %1410 = vmatprep.mubr.bf16.mxu0 0
          %1411 = vmatmul.mubr.bf16.gmra.mrb[0].mxu0 %v519
          %v1412 = vpop.f32.mrb[0].mxu0
          %v1413 = vadd.f32 0.0, %v1412
          %v1414 = vpop.f32.mrb[0].mxu0
          %v1415 = vpop.f32.mrb[0].mxu0
          %v1416 = vadd.f32 0.0, %v1415
          %v1417 = vpop.f32.mrb[0].mxu0
          %1418 = vdwg.mxu0
          %v1419 = vadd.f32 %v1376, %v1413
          %v1420 = vadd.f32 %v1377, %v1416
          %v1422 = vsel %vm240, %v215, 0
          %1424 = vmatprep.subr.bf16.mxu0 0
          %1425 = vmatpush1.bf16.msra.mxu0 %v1422
          %1426 = vmatprep.subr.bf16.mxu0 0
          %1427 = vmatpush1.bf16.msra.mxu0 0
          %1428 = vmatprep.subr.bf16.mxu0 0
          %1429 = vmatpush1.bf16.msra.mxu0 0
          %1430 = vmatprep.subr.bf16.mxu0 0
          %1431 = vmatpush1.bf16.msra.mxu0 0
          %1432 = vmatprep.subr.bf16.mxu0 0
          %1433 = vmatpush1.bf16.msra.mxu0 0
          %1434 = vmatprep.subr.bf16.mxu0 0
          %1435 = vmatpush1.bf16.msra.mxu0 0
          %1436 = vmatprep.subr.bf16.mxu0 0
          %1437 = vmatpush1.bf16.msra.mxu0 0
          %1438 = vmatprep.subr.bf16.mxu0 0
          %1439 = vmatpush1.bf16.msra.mxu0 0
          %1440 = vmatprep.subr.bf16.mxu0 0
          %1441 = vmatpush1.bf16.msra.mxu0 0
          %1442 = vmatprep.subr.bf16.mxu0 0
          %1443 = vmatpush1.bf16.msra.mxu0 0
          %1444 = vmatprep.subr.bf16.mxu0 0
          %1445 = vmatpush1.bf16.msra.mxu0 0
          %1446 = vmatprep.subr.bf16.mxu0 0
          %1447 = vmatpush1.bf16.msra.mxu0 0
          %1448 = vmatprep.subr.bf16.mxu0 0
          %1449 = vmatpush1.bf16.msra.mxu0 0
          %1450 = vmatprep.subr.bf16.mxu0 0
          %1451 = vmatpush1.bf16.msra.mxu0 0
          %1452 = vmatprep.subr.bf16.mxu0 0
          %1453 = vmatpush1.bf16.msra.mxu0 0
          %1454 = vmatprep.subr.bf16.mxu0 0
          %1455 = vmatpush1.bf16.msra.mxu0 0
          %1456 = vmatprep.mubr.bf16.mxu0 0
          %1457 = vmatmul.mubr.bf16.gmra.mrb[0].mxu0 %v573
          %v1458 = vpop.f32.mrb[0].mxu0
          %v1459 = vadd.f32 0.0, %v1458
          %v1460 = vpop.f32.mrb[0].mxu0
          %v1461 = vpop.f32.mrb[0].mxu0
          %v1462 = vadd.f32 0.0, %v1461
          %v1463 = vpop.f32.mrb[0].mxu0
          %1464 = vdwg.mxu0
          %v1465 = vadd.f32 %v1419, %v1459
          %v1466 = vadd.f32 %v1420, %v1462
          %v1469 = vunpack.c.l.s4 1983009808
          %v1470 = vunpack.c.0.s8 %v1469
          %v1471 = vlaneseq
          %v1472 = vshrl.u32 %v1471, 7
          %v1473 = vsub.s32 %v1470, %v1472
          %v1474 = vrot.slane %v215, %v1473
          %1475 = vrot.lane.b32.xlu0 %v1474, 127
          %v1476 = vpop.permute.xlu0 %1475
          %v1478 = vsel %vm240, %v1476, 0
          %1480 = vmatprep.subr.bf16.mxu0 0
          %1481 = vmatpush1.bf16.msra.mxu0 %v1478
          %1482 = vmatprep.subr.bf16.mxu0 0
          %1483 = vmatpush1.bf16.msra.mxu0 0
          %1484 = vmatprep.subr.bf16.mxu0 0
          %1485 = vmatpush1.bf16.msra.mxu0 0
          %1486 = vmatprep.subr.bf16.mxu0 0
          %1487 = vmatpush1.bf16.msra.mxu0 0
          %1488 = vmatprep.subr.bf16.mxu0 0
          %1489 = vmatpush1.bf16.msra.mxu0 0
          %1490 = vmatprep.subr.bf16.mxu0 0
          %1491 = vmatpush1.bf16.msra.mxu0 0
          %1492 = vmatprep.subr.bf16.mxu0 0
          %1493 = vmatpush1.bf16.msra.mxu0 0
          %1494 = vmatprep.subr.bf16.mxu0 0
          %1495 = vmatpush1.bf16.msra.mxu0 0
          %1496 = vmatprep.subr.bf16.mxu0 0
          %1497 = vmatpush1.bf16.msra.mxu0 0
          %1498 = vmatprep.subr.bf16.mxu0 0
          %1499 = vmatpush1.bf16.msra.mxu0 0
          %1500 = vmatprep.subr.bf16.mxu0 0
          %1501 = vmatpush1.bf16.msra.mxu0 0
          %1502 = vmatprep.subr.bf16.mxu0 0
          %1503 = vmatpush1.bf16.msra.mxu0 0
          %1504 = vmatprep.subr.bf16.mxu0 0
          %1505 = vmatpush1.bf16.msra.mxu0 0
          %1506 = vmatprep.subr.bf16.mxu0 0
          %1507 = vmatpush1.bf16.msra.mxu0 0
          %1508 = vmatprep.subr.bf16.mxu0 0
          %1509 = vmatpush1.bf16.msra.mxu0 0
          %1510 = vmatprep.subr.bf16.mxu0 0
          %1511 = vmatpush1.bf16.msra.mxu0 0
          %1512 = vmatprep.mubr.bf16.mxu0 0
          %1513 = vmatmul.mubr.bf16.gmra.mrb[0].mxu0 %v637
          %v1514 = vpop.f32.mrb[0].mxu0
          %v1515 = vadd.f32 0.0, %v1514
          %v1516 = vpop.f32.mrb[0].mxu0
          %v1517 = vpop.f32.mrb[0].mxu0
          %v1518 = vadd.f32 0.0, %v1517
          %v1519 = vpop.f32.mrb[0].mxu0
          %1520 = vdwg.mxu0
          %v1521 = vadd.f32 %v1465, %v1515
          %v1522 = vadd.f32 %v1466, %v1518
          %1523 = vrot.lane.b32.xlu0 %v1474, 126
          %v1524 = vpop.permute.xlu0 %1523
          %v1526 = vsel %vm240, %v1524, 0
          %1528 = vmatprep.subr.bf16.mxu0 0
          %1529 = vmatpush1.bf16.msra.mxu0 %v1526
          %1530 = vmatprep.subr.bf16.mxu0 0
          %1531 = vmatpush1.bf16.msra.mxu0 0
          %1532 = vmatprep.subr.bf16.mxu0 0
          %1533 = vmatpush1.bf16.msra.mxu0 0
          %1534 = vmatprep.subr.bf16.mxu0 0
          %1535 = vmatpush1.bf16.msra.mxu0 0
          %1536 = vmatprep.subr.bf16.mxu0 0
          %1537 = vmatpush1.bf16.msra.mxu0 0
          %1538 = vmatprep.subr.bf16.mxu0 0
          %1539 = vmatpush1.bf16.msra.mxu0 0
          %1540 = vmatprep.subr.bf16.mxu0 0
          %1541 = vmatpush1.bf16.msra.mxu0 0
          %1542 = vmatprep.subr.bf16.mxu0 0
          %1543 = vmatpush1.bf16.msra.mxu0 0
          %1544 = vmatprep.subr.bf16.mxu0 0
          %1545 = vmatpush1.bf16.msra.mxu0 0
          %1546 = vmatprep.subr.bf16.mxu0 0
          %1547 = vmatpush1.bf16.msra.mxu0 0
          %1548 = vmatprep.subr.bf16.mxu0 0
          %1549 = vmatpush1.bf16.msra.mxu0 0
          %1550 = vmatprep.subr.bf16.mxu0 0
          %1551 = vmatpush1.bf16.msra.mxu0 0
          %1552 = vmatprep.subr.bf16.mxu0 0
          %1553 = vmatpush1.bf16.msra.mxu0 0
          %1554 = vmatprep.subr.bf16.mxu0 0
          %1555 = vmatpush1.bf16.msra.mxu0 0
          %1556 = vmatprep.subr.bf16.mxu0 0
          %1557 = vmatpush1.bf16.msra.mxu0 0
          %1558 = vmatprep.subr.bf16.mxu0 0
          %1559 = vmatpush1.bf16.msra.mxu0 0
          %1560 = vmatprep.mubr.bf16.mxu0 0
          %1561 = vmatmul.mubr.bf16.gmra.mrb[0].mxu0 %v693
          %v1562 = vpop.f32.mrb[0].mxu0
          %v1563 = vadd.f32 0.0, %v1562
          %v1564 = vpop.f32.mrb[0].mxu0
          %v1565 = vpop.f32.mrb[0].mxu0
          %v1566 = vadd.f32 0.0, %v1565
          %v1567 = vpop.f32.mrb[0].mxu0
          %1568 = vdwg.mxu0
          %v1569 = vadd.f32 %v1521, %v1563
          %v1570 = vadd.f32 %v1522, %v1566
          %v1571 = vadd.f32 %v1156, %v1569
          %v1572 = vadd.f32 %v1157, %v1570
          %v1573 = vmul.f32 %v1569, %v1569
          %v1574 = vmul.f32 %v1570, %v1570
          %v1575 = vadd.f32 %v1160, %v1573
          %v1576 = vadd.f32 %v1161, %v1574
          %v1577 = vpack.c.bf16 %v1570, %v1569
          %s1578 = sadd.s32 %s168, 2
          %s1579 = smul.addr %s1578, 8
          %s1580 = scalar_lea.vmem [#allocation2], %s1579
          %1581 = vst.msk [vmem:[%s1580] sm:$0xff] %vm750, %v1577
          %1582 = vmatprep.subr.bf16.mxu0 0
          %1583 = vmatpush1.bf16.msra.mxu0 %v1063
          %1584 = vmatprep.subr.bf16.mxu0 0
          %1585 = vmatpush1.bf16.msra.mxu0 0
          %1586 = vmatprep.subr.bf16.mxu0 0
          %1587 = vmatpush1.bf16.msra.mxu0 0
          %1588 = vmatprep.subr.bf16.mxu0 0
          %1589 = vmatpush1.bf16.msra.mxu0 0
          %1590 = vmatprep.subr.bf16.mxu0 0
          %1591 = vmatpush1.bf16.msra.mxu0 0
          %1592 = vmatprep.subr.bf16.mxu0 0
          %1593 = vmatpush1.bf16.msra.mxu0 0
          %1594 = vmatprep.subr.bf16.mxu0 0
          %1595 = vmatpush1.bf16.msra.mxu0 0
          %1596 = vmatprep.subr.bf16.mxu0 0
          %1597 = vmatpush1.bf16.msra.mxu0 0
          %1598 = vmatprep.subr.bf16.mxu0 0
          %1599 = vmatpush1.bf16.msra.mxu0 0
          %1600 = vmatprep.subr.bf16.mxu0 0
          %1601 = vmatpush1.bf16.msra.mxu0 0
          %1602 = vmatprep.subr.bf16.mxu0 0
          %1603 = vmatpush1.bf16.msra.mxu0 0
          %1604 = vmatprep.subr.bf16.mxu0 0
          %1605 = vmatpush1.bf16.msra.mxu0 0
          %1606 = vmatprep.subr.bf16.mxu0 0
          %1607 = vmatpush1.bf16.msra.mxu0 0
          %1608 = vmatprep.subr.bf16.mxu0 0
          %1609 = vmatpush1.bf16.msra.mxu0 0
          %1610 = vmatprep.subr.bf16.mxu0 0
          %1611 = vmatpush1.bf16.msra.mxu0 0
          %1612 = vmatprep.subr.bf16.mxu0 0
          %1613 = vmatpush1.bf16.msra.mxu0 0
          %1614 = vmatprep.mubr.bf16.mxu0 0
          %1615 = vmatmul.mubr.bf16.gmra.mrb[0].mxu0 %v238
          %v1616 = vpop.f32.mrb[0].mxu0
          %v1617 = vadd.f32 0.0, %v1616
          %v1618 = vpop.f32.mrb[0].mxu0
          %v1619 = vpop.f32.mrb[0].mxu0
          %v1620 = vadd.f32 0.0, %v1619
          %v1621 = vpop.f32.mrb[0].mxu0
          %1622 = vdwg.mxu0
          %1623 = vmatprep.subr.bf16.mxu0 0
          %1624 = vmatpush1.bf16.msra.mxu0 %v1007
          %1625 = vmatprep.subr.bf16.mxu0 0
          %1626 = vmatpush1.bf16.msra.mxu0 0
          %1627 = vmatprep.subr.bf16.mxu0 0
          %1628 = vmatpush1.bf16.msra.mxu0 0
          %1629 = vmatprep.subr.bf16.mxu0 0
          %1630 = vmatpush1.bf16.msra.mxu0 0
          %1631 = vmatprep.subr.bf16.mxu0 0
          %1632 = vmatpush1.bf16.msra.mxu0 0
          %1633 = vmatprep.subr.bf16.mxu0 0
          %1634 = vmatpush1.bf16.msra.mxu0 0
          %1635 = vmatprep.subr.bf16.mxu0 0
          %1636 = vmatpush1.bf16.msra.mxu0 0
          %1637 = vmatprep.subr.bf16.mxu0 0
          %1638 = vmatpush1.bf16.msra.mxu0 0
          %1639 = vmatprep.subr.bf16.mxu0 0
          %1640 = vmatpush1.bf16.msra.mxu0 0
          %1641 = vmatprep.subr.bf16.mxu0 0
          %1642 = vmatpush1.bf16.msra.mxu0 0
          %1643 = vmatprep.subr.bf16.mxu0 0
          %1644 = vmatpush1.bf16.msra.mxu0 0
          %1645 = vmatprep.subr.bf16.mxu0 0
          %1646 = vmatpush1.bf16.msra.mxu0 0
          %1647 = vmatprep.subr.bf16.mxu0 0
          %1648 = vmatpush1.bf16.msra.mxu0 0
          %1649 = vmatprep.subr.bf16.mxu0 0
          %1650 = vmatpush1.bf16.msra.mxu0 0
          %1651 = vmatprep.subr.bf16.mxu0 0
          %1652 = vmatpush1.bf16.msra.mxu0 0
          %1653 = vmatprep.subr.bf16.mxu0 0
          %1654 = vmatpush1.bf16.msra.mxu0 0
          %1655 = vmatprep.mubr.bf16.mxu0 0
          %1656 = vmatmul.mubr.bf16.gmra.mrb[0].mxu0 %v291
          %v1657 = vpop.f32.mrb[0].mxu0
          %v1658 = vadd.f32 %v1617, %v1657
          %v1659 = vpop.f32.mrb[0].mxu0
          %v1660 = vpop.f32.mrb[0].mxu0
          %v1661 = vadd.f32 %v1620, %v1660
          %v1662 = vpop.f32.mrb[0].mxu0
          %1663 = vdwg.mxu0
          %1664 = vmatprep.subr.bf16.mxu0 0
          %1665 = vmatpush1.bf16.msra.mxu0 %v1111
          %1666 = vmatprep.subr.bf16.mxu0 0
          %1667 = vmatpush1.bf16.msra.mxu0 0
          %1668 = vmatprep.subr.bf16.mxu0 0
          %1669 = vmatpush1.bf16.msra.mxu0 0
          %1670 = vmatprep.subr.bf16.mxu0 0
          %1671 = vmatpush1.bf16.msra.mxu0 0
          %1672 = vmatprep.subr.bf16.mxu0 0
          %1673 = vmatpush1.bf16.msra.mxu0 0
          %1674 = vmatprep.subr.bf16.mxu0 0
          %1675 = vmatpush1.bf16.msra.mxu0 0
          %1676 = vmatprep.subr.bf16.mxu0 0
          %1677 = vmatpush1.bf16.msra.mxu0 0
          %1678 = vmatprep.subr.bf16.mxu0 0
          %1679 = vmatpush1.bf16.msra.mxu0 0
          %1680 = vmatprep.subr.bf16.mxu0 0
          %1681 = vmatpush1.bf16.msra.mxu0 0
          %1682 = vmatprep.subr.bf16.mxu0 0
          %1683 = vmatpush1.bf16.msra.mxu0 0
          %1684 = vmatprep.subr.bf16.mxu0 0
          %1685 = vmatpush1.bf16.msra.mxu0 0
          %1686 = vmatprep.subr.bf16.mxu0 0
          %1687 = vmatpush1.bf16.msra.mxu0 0
          %1688 = vmatprep.subr.bf16.mxu0 0
          %1689 = vmatpush1.bf16.msra.mxu0 0
          %1690 = vmatprep.subr.bf16.mxu0 0
          %1691 = vmatpush1.bf16.msra.mxu0 0
          %1692 = vmatprep.subr.bf16.mxu0 0
          %1693 = vmatpush1.bf16.msra.mxu0 0
          %1694 = vmatprep.subr.bf16.mxu0 0
          %1695 = vmatpush1.bf16.msra.mxu0 0
          %1696 = vmatprep.mubr.bf16.mxu0 0
          %1697 = vmatmul.mubr.bf16.gmra.mrb[0].mxu0 %v345
          %v1698 = vpop.f32.mrb[0].mxu0
          %v1699 = vadd.f32 0.0, %v1698
          %v1700 = vpop.f32.mrb[0].mxu0
          %v1701 = vpop.f32.mrb[0].mxu0
          %v1702 = vadd.f32 0.0, %v1701
          %v1703 = vpop.f32.mrb[0].mxu0
          %1704 = vdwg.mxu0
          %v1705 = vadd.f32 %v1658, %v1699
          %v1706 = vadd.f32 %v1661, %v1702
          %1707 = vmatprep.subr.bf16.mxu0 0
          %1708 = vmatpush1.bf16.msra.mxu0 %v1422
          %1709 = vmatprep.subr.bf16.mxu0 0
          %1710 = vmatpush1.bf16.msra.mxu0 0
          %1711 = vmatprep.subr.bf16.mxu0 0
          %1712 = vmatpush1.bf16.msra.mxu0 0
          %1713 = vmatprep.subr.bf16.mxu0 0
          %1714 = vmatpush1.bf16.msra.mxu0 0
          %1715 = vmatprep.subr.bf16.mxu0 0
          %1716 = vmatpush1.bf16.msra.mxu0 0
          %1717 = vmatprep.subr.bf16.mxu0 0
          %1718 = vmatpush1.bf16.msra.mxu0 0
          %1719 = vmatprep.subr.bf16.mxu0 0
          %1720 = vmatpush1.bf16.msra.mxu0 0
          %1721 = vmatprep.subr.bf16.mxu0 0
          %1722 = vmatpush1.bf16.msra.mxu0 0
          %1723 = vmatprep.subr.bf16.mxu0 0
          %1724 = vmatpush1.bf16.msra.mxu0 0
          %1725 = vmatprep.subr.bf16.mxu0 0
          %1726 = vmatpush1.bf16.msra.mxu0 0
          %1727 = vmatprep.subr.bf16.mxu0 0
          %1728 = vmatpush1.bf16.msra.mxu0 0
          %1729 = vmatprep.subr.bf16.mxu0 0
          %1730 = vmatpush1.bf16.msra.mxu0 0
          %1731 = vmatprep.subr.bf16.mxu0 0
          %1732 = vmatpush1.bf16.msra.mxu0 0
          %1733 = vmatprep.subr.bf16.mxu0 0
          %1734 = vmatpush1.bf16.msra.mxu0 0
          %1735 = vmatprep.subr.bf16.mxu0 0
          %1736 = vmatpush1.bf16.msra.mxu0 0
          %1737 = vmatprep.subr.bf16.mxu0 0
          %1738 = vmatpush1.bf16.msra.mxu0 0
          %1739 = vmatprep.mubr.bf16.mxu0 0
          %1740 = vmatmul.mubr.bf16.gmra.mrb[0].mxu0 %v399
          %v1741 = vpop.f32.mrb[0].mxu0
          %v1742 = vadd.f32 0.0, %v1741
          %v1743 = vpop.f32.mrb[0].mxu0
          %v1744 = vpop.f32.mrb[0].mxu0
          %v1745 = vadd.f32 0.0, %v1744
          %v1746 = vpop.f32.mrb[0].mxu0
          %1747 = vdwg.mxu0
          %v1748 = vadd.f32 %v1705, %v1742
          %v1749 = vadd.f32 %v1706, %v1745
          %1750 = vmatprep.subr.bf16.mxu0 0
          %1751 = vmatpush1.bf16.msra.mxu0 %v1478
          %1752 = vmatprep.subr.bf16.mxu0 0
          %1753 = vmatpush1.bf16.msra.mxu0 0
          %1754 = vmatprep.subr.bf16.mxu0 0
          %1755 = vmatpush1.bf16.msra.mxu0 0
          %1756 = vmatprep.subr.bf16.mxu0 0
          %1757 = vmatpush1.bf16.msra.mxu0 0
          %1758 = vmatprep.subr.bf16.mxu0 0
          %1759 = vmatpush1.bf16.msra.mxu0 0
          %1760 = vmatprep.subr.bf16.mxu0 0
          %1761 = vmatpush1.bf16.msra.mxu0 0
          %1762 = vmatprep.subr.bf16.mxu0 0
          %1763 = vmatpush1.bf16.msra.mxu0 0
          %1764 = vmatprep.subr.bf16.mxu0 0
          %1765 = vmatpush1.bf16.msra.mxu0 0
          %1766 = vmatprep.subr.bf16.mxu0 0
          %1767 = vmatpush1.bf16.msra.mxu0 0
          %1768 = vmatprep.subr.bf16.mxu0 0
          %1769 = vmatpush1.bf16.msra.mxu0 0
          %1770 = vmatprep.subr.bf16.mxu0 0
          %1771 = vmatpush1.bf16.msra.mxu0 0
          %1772 = vmatprep.subr.bf16.mxu0 0
          %1773 = vmatpush1.bf16.msra.mxu0 0
          %1774 = vmatprep.subr.bf16.mxu0 0
          %1775 = vmatpush1.bf16.msra.mxu0 0
          %1776 = vmatprep.subr.bf16.mxu0 0
          %1777 = vmatpush1.bf16.msra.mxu0 0
          %1778 = vmatprep.subr.bf16.mxu0 0
          %1779 = vmatpush1.bf16.msra.mxu0 0
          %1780 = vmatprep.subr.bf16.mxu0 0
          %1781 = vmatpush1.bf16.msra.mxu0 0
          %1782 = vmatprep.mubr.bf16.mxu0 0
          %1783 = vmatmul.mubr.bf16.gmra.mrb[0].mxu0 %v463
          %v1784 = vpop.f32.mrb[0].mxu0
          %v1785 = vadd.f32 0.0, %v1784
          %v1786 = vpop.f32.mrb[0].mxu0
          %v1787 = vpop.f32.mrb[0].mxu0
          %v1788 = vadd.f32 0.0, %v1787
          %v1789 = vpop.f32.mrb[0].mxu0
          %1790 = vdwg.mxu0
          %v1791 = vadd.f32 %v1748, %v1785
          %v1792 = vadd.f32 %v1749, %v1788
          %1793 = vmatprep.subr.bf16.mxu0 0
          %1794 = vmatpush1.bf16.msra.mxu0 %v1526
          %1795 = vmatprep.subr.bf16.mxu0 0
          %1796 = vmatpush1.bf16.msra.mxu0 0
          %1797 = vmatprep.subr.bf16.mxu0 0
          %1798 = vmatpush1.bf16.msra.mxu0 0
          %1799 = vmatprep.subr.bf16.mxu0 0
          %1800 = vmatpush1.bf16.msra.mxu0 0
          %1801 = vmatprep.subr.bf16.mxu0 0
          %1802 = vmatpush1.bf16.msra.mxu0 0
          %1803 = vmatprep.subr.bf16.mxu0 0
          %1804 = vmatpush1.bf16.msra.mxu0 0
          %1805 = vmatprep.subr.bf16.mxu0 0
          %1806 = vmatpush1.bf16.msra.mxu0 0
          %1807 = vmatprep.subr.bf16.mxu0 0
          %1808 = vmatpush1.bf16.msra.mxu0 0
          %1809 = vmatprep.subr.bf16.mxu0 0
          %1810 = vmatpush1.bf16.msra.mxu0 0
          %1811 = vmatprep.subr.bf16.mxu0 0
          %1812 = vmatpush1.bf16.msra.mxu0 0
          %1813 = vmatprep.subr.bf16.mxu0 0
          %1814 = vmatpush1.bf16.msra.mxu0 0
          %1815 = vmatprep.subr.bf16.mxu0 0
          %1816 = vmatpush1.bf16.msra.mxu0 0
          %1817 = vmatprep.subr.bf16.mxu0 0
          %1818 = vmatpush1.bf16.msra.mxu0 0
          %1819 = vmatprep.subr.bf16.mxu0 0
          %1820 = vmatpush1.bf16.msra.mxu0 0
          %1821 = vmatprep.subr.bf16.mxu0 0
          %1822 = vmatpush1.bf16.msra.mxu0 0
          %1823 = vmatprep.subr.bf16.mxu0 0
          %1824 = vmatpush1.bf16.msra.mxu0 0
          %1825 = vmatprep.mubr.bf16.mxu0 0
          %1826 = vmatmul.mubr.bf16.gmra.mrb[0].mxu0 %v519
          %v1827 = vpop.f32.mrb[0].mxu0
          %v1828 = vadd.f32 0.0, %v1827
          %v1829 = vpop.f32.mrb[0].mxu0
          %v1830 = vpop.f32.mrb[0].mxu0
          %v1831 = vadd.f32 0.0, %v1830
          %v1832 = vpop.f32.mrb[0].mxu0
          %1833 = vdwg.mxu0
          %v1834 = vadd.f32 %v1791, %v1828
          %v1835 = vadd.f32 %v1792, %v1831
          %v1837 = vsel %vm240, %v216, 0
          %1839 = vmatprep.subr.bf16.mxu0 0
          %1840 = vmatpush1.bf16.msra.mxu0 %v1837
          %1841 = vmatprep.subr.bf16.mxu0 0
          %1842 = vmatpush1.bf16.msra.mxu0 0
          %1843 = vmatprep.subr.bf16.mxu0 0
          %1844 = vmatpush1.bf16.msra.mxu0 0
          %1845 = vmatprep.subr.bf16.mxu0 0
          %1846 = vmatpush1.bf16.msra.mxu0 0
          %1847 = vmatprep.subr.bf16.mxu0 0
          %1848 = vmatpush1.bf16.msra.mxu0 0
          %1849 = vmatprep.subr.bf16.mxu0 0
          %1850 = vmatpush1.bf16.msra.mxu0 0
          %1851 = vmatprep.subr.bf16.mxu0 0
          %1852 = vmatpush1.bf16.msra.mxu0 0
          %1853 = vmatprep.subr.bf16.mxu0 0
          %1854 = vmatpush1.bf16.msra.mxu0 0
          %1855 = vmatprep.subr.bf16.mxu0 0
          %1856 = vmatpush1.bf16.msra.mxu0 0
          %1857 = vmatprep.subr.bf16.mxu0 0
          %1858 = vmatpush1.bf16.msra.mxu0 0
          %1859 = vmatprep.subr.bf16.mxu0 0
          %1860 = vmatpush1.bf16.msra.mxu0 0
          %1861 = vmatprep.subr.bf16.mxu0 0
          %1862 = vmatpush1.bf16.msra.mxu0 0
          %1863 = vmatprep.subr.bf16.mxu0 0
          %1864 = vmatpush1.bf16.msra.mxu0 0
          %1865 = vmatprep.subr.bf16.mxu0 0
          %1866 = vmatpush1.bf16.msra.mxu0 0
          %1867 = vmatprep.subr.bf16.mxu0 0
          %1868 = vmatpush1.bf16.msra.mxu0 0
          %1869 = vmatprep.subr.bf16.mxu0 0
          %1870 = vmatpush1.bf16.msra.mxu0 0
          %1871 = vmatprep.mubr.bf16.mxu0 0
          %1872 = vmatmul.mubr.bf16.gmra.mrb[0].mxu0 %v573
          %v1873 = vpop.f32.mrb[0].mxu0
          %v1874 = vadd.f32 0.0, %v1873
          %v1875 = vpop.f32.mrb[0].mxu0
          %v1876 = vpop.f32.mrb[0].mxu0
          %v1877 = vadd.f32 0.0, %v1876
          %v1878 = vpop.f32.mrb[0].mxu0
          %1879 = vdwg.mxu0
          %v1880 = vadd.f32 %v1834, %v1874
          %v1881 = vadd.f32 %v1835, %v1877
          %v1884 = vunpack.c.l.s4 1983009808
          %v1885 = vunpack.c.0.s8 %v1884
          %v1886 = vlaneseq
          %v1887 = vshrl.u32 %v1886, 7
          %v1888 = vsub.s32 %v1885, %v1887
          %v1889 = vrot.slane %v216, %v1888
          %1890 = vrot.lane.b32.xlu0 %v1889, 127
          %v1891 = vpop.permute.xlu0 %1890
          %v1893 = vsel %vm240, %v1891, 0
          %1895 = vmatprep.subr.bf16.mxu0 0
          %1896 = vmatpush1.bf16.msra.mxu0 %v1893
          %1897 = vmatprep.subr.bf16.mxu0 0
          %1898 = vmatpush1.bf16.msra.mxu0 0
          %1899 = vmatprep.subr.bf16.mxu0 0
          %1900 = vmatpush1.bf16.msra.mxu0 0
          %1901 = vmatprep.subr.bf16.mxu0 0
          %1902 = vmatpush1.bf16.msra.mxu0 0
          %1903 = vmatprep.subr.bf16.mxu0 0
          %1904 = vmatpush1.bf16.msra.mxu0 0
          %1905 = vmatprep.subr.bf16.mxu0 0
          %1906 = vmatpush1.bf16.msra.mxu0 0
          %1907 = vmatprep.subr.bf16.mxu0 0
          %1908 = vmatpush1.bf16.msra.mxu0 0
          %1909 = vmatprep.subr.bf16.mxu0 0
          %1910 = vmatpush1.bf16.msra.mxu0 0
          %1911 = vmatprep.subr.bf16.mxu0 0
          %1912 = vmatpush1.bf16.msra.mxu0 0
          %1913 = vmatprep.subr.bf16.mxu0 0
          %1914 = vmatpush1.bf16.msra.mxu0 0
          %1915 = vmatprep.subr.bf16.mxu0 0
          %1916 = vmatpush1.bf16.msra.mxu0 0
          %1917 = vmatprep.subr.bf16.mxu0 0
          %1918 = vmatpush1.bf16.msra.mxu0 0
          %1919 = vmatprep.subr.bf16.mxu0 0
          %1920 = vmatpush1.bf16.msra.mxu0 0
          %1921 = vmatprep.subr.bf16.mxu0 0
          %1922 = vmatpush1.bf16.msra.mxu0 0
          %1923 = vmatprep.subr.bf16.mxu0 0
          %1924 = vmatpush1.bf16.msra.mxu0 0
          %1925 = vmatprep.subr.bf16.mxu0 0
          %1926 = vmatpush1.bf16.msra.mxu0 0
          %1927 = vmatprep.mubr.bf16.mxu0 0
          %1928 = vmatmul.mubr.bf16.gmra.mrb[0].mxu0 %v637
          %v1929 = vpop.f32.mrb[0].mxu0
          %v1930 = vadd.f32 0.0, %v1929
          %v1931 = vpop.f32.mrb[0].mxu0
          %v1932 = vpop.f32.mrb[0].mxu0
          %v1933 = vadd.f32 0.0, %v1932
          %v1934 = vpop.f32.mrb[0].mxu0
          %1935 = vdwg.mxu0
          %v1936 = vadd.f32 %v1880, %v1930
          %v1937 = vadd.f32 %v1881, %v1933
          %1938 = vrot.lane.b32.xlu0 %v1889, 126
          %v1939 = vpop.permute.xlu0 %1938
          %v1941 = vsel %vm240, %v1939, 0
          %1943 = vmatprep.subr.bf16.mxu0 0
          %1944 = vmatpush1.bf16.msra.mxu0 %v1941
          %1945 = vmatprep.subr.bf16.mxu0 0
          %1946 = vmatpush1.bf16.msra.mxu0 0
          %1947 = vmatprep.subr.bf16.mxu0 0
          %1948 = vmatpush1.bf16.msra.mxu0 0
          %1949 = vmatprep.subr.bf16.mxu0 0
          %1950 = vmatpush1.bf16.msra.mxu0 0
          %1951 = vmatprep.subr.bf16.mxu0 0
          %1952 = vmatpush1.bf16.msra.mxu0 0
          %1953 = vmatprep.subr.bf16.mxu0 0
          %1954 = vmatpush1.bf16.msra.mxu0 0
          %1955 = vmatprep.subr.bf16.mxu0 0
          %1956 = vmatpush1.bf16.msra.mxu0 0
          %1957 = vmatprep.subr.bf16.mxu0 0
          %1958 = vmatpush1.bf16.msra.mxu0 0
          %1959 = vmatprep.subr.bf16.mxu0 0
          %1960 = vmatpush1.bf16.msra.mxu0 0
          %1961 = vmatprep.subr.bf16.mxu0 0
          %1962 = vmatpush1.bf16.msra.mxu0 0
          %1963 = vmatprep.subr.bf16.mxu0 0
          %1964 = vmatpush1.bf16.msra.mxu0 0
          %1965 = vmatprep.subr.bf16.mxu0 0
          %1966 = vmatpush1.bf16.msra.mxu0 0
          %1967 = vmatprep.subr.bf16.mxu0 0
          %1968 = vmatpush1.bf16.msra.mxu0 0
          %1969 = vmatprep.subr.bf16.mxu0 0
          %1970 = vmatpush1.bf16.msra.mxu0 0
          %1971 = vmatprep.subr.bf16.mxu0 0
          %1972 = vmatpush1.bf16.msra.mxu0 0
          %1973 = vmatprep.subr.bf16.mxu0 0
          %1974 = vmatpush1.bf16.msra.mxu0 0
          %1975 = vmatprep.mubr.bf16.mxu0 0
          %1976 = vmatmul.mubr.bf16.gmra.mrb[0].mxu0 %v693
          %v1977 = vpop.f32.mrb[0].mxu0
          %v1978 = vadd.f32 0.0, %v1977
          %v1979 = vpop.f32.mrb[0].mxu0
          %v1980 = vpop.f32.mrb[0].mxu0
          %v1981 = vadd.f32 0.0, %v1980
          %v1982 = vpop.f32.mrb[0].mxu0
          %1983 = vdwg.mxu0
          %v1984 = vadd.f32 %v1936, %v1978
          %v1985 = vadd.f32 %v1937, %v1981
          %v1986 = vadd.f32 %v1571, %v1984
          %v1987 = vadd.f32 %v1572, %v1985
          %v1988 = vmul.f32 %v1984, %v1984
          %v1989 = vmul.f32 %v1985, %v1985
          %v1990 = vadd.f32 %v1575, %v1988
          %v1991 = vadd.f32 %v1576, %v1989
          %v1992 = vpack.c.bf16 %v1985, %v1984
          %s1993 = sadd.s32 %s168, 3
          %s1994 = smul.addr %s1993, 8
          %s1995 = scalar_lea.vmem [#allocation2], %s1994
          %1996 = vst.msk [vmem:[%s1995] sm:$0xff] %vm750, %v1992
          %1997 = vmatprep.subr.bf16.mxu0 0
          %1998 = vmatpush1.bf16.msra.mxu0 %v1478
          %1999 = vmatprep.subr.bf16.mxu0 0
          %2000 = vmatpush1.bf16.msra.mxu0 0
          %2001 = vmatprep.subr.bf16.mxu0 0
          %2002 = vmatpush1.bf16.msra.mxu0 0
          %2003 = vmatprep.subr.bf16.mxu0 0
          %2004 = vmatpush1.bf16.msra.mxu0 0
          %2005 = vmatprep.subr.bf16.mxu0 0
          %2006 = vmatpush1.bf16.msra.mxu0 0
          %2007 = vmatprep.subr.bf16.mxu0 0
          %2008 = vmatpush1.bf16.msra.mxu0 0
          %2009 = vmatprep.subr.bf16.mxu0 0
          %2010 = vmatpush1.bf16.msra.mxu0 0
          %2011 = vmatprep.subr.bf16.mxu0 0
          %2012 = vmatpush1.bf16.msra.mxu0 0
          %2013 = vmatprep.subr.bf16.mxu0 0
          %2014 = vmatpush1.bf16.msra.mxu0 0
          %2015 = vmatprep.subr.bf16.mxu0 0
          %2016 = vmatpush1.bf16.msra.mxu0 0
          %2017 = vmatprep.subr.bf16.mxu0 0
          %2018 = vmatpush1.bf16.msra.mxu0 0
          %2019 = vmatprep.subr.bf16.mxu0 0
          %2020 = vmatpush1.bf16.msra.mxu0 0
          %2021 = vmatprep.subr.bf16.mxu0 0
          %2022 = vmatpush1.bf16.msra.mxu0 0
          %2023 = vmatprep.subr.bf16.mxu0 0
          %2024 = vmatpush1.bf16.msra.mxu0 0
          %2025 = vmatprep.subr.bf16.mxu0 0
          %2026 = vmatpush1.bf16.msra.mxu0 0
          %2027 = vmatprep.subr.bf16.mxu0 0
          %2028 = vmatpush1.bf16.msra.mxu0 0
          %2029 = vmatprep.mubr.bf16.mxu0 0
          %2030 = vmatmul.mubr.bf16.gmra.mrb[0].mxu0 %v238
          %v2031 = vpop.f32.mrb[0].mxu0
          %v2032 = vadd.f32 0.0, %v2031
          %v2033 = vpop.f32.mrb[0].mxu0
          %v2034 = vpop.f32.mrb[0].mxu0
          %v2035 = vadd.f32 0.0, %v2034
          %v2036 = vpop.f32.mrb[0].mxu0
          %2037 = vdwg.mxu0
          %2038 = vmatprep.subr.bf16.mxu0 0
          %2039 = vmatpush1.bf16.msra.mxu0 %v1422
          %2040 = vmatprep.subr.bf16.mxu0 0
          %2041 = vmatpush1.bf16.msra.mxu0 0
          %2042 = vmatprep.subr.bf16.mxu0 0
          %2043 = vmatpush1.bf16.msra.mxu0 0
          %2044 = vmatprep.subr.bf16.mxu0 0
          %2045 = vmatpush1.bf16.msra.mxu0 0
          %2046 = vmatprep.subr.bf16.mxu0 0
          %2047 = vmatpush1.bf16.msra.mxu0 0
          %2048 = vmatprep.subr.bf16.mxu0 0
          %2049 = vmatpush1.bf16.msra.mxu0 0
          %2050 = vmatprep.subr.bf16.mxu0 0
          %2051 = vmatpush1.bf16.msra.mxu0 0
          %2052 = vmatprep.subr.bf16.mxu0 0
          %2053 = vmatpush1.bf16.msra.mxu0 0
          %2054 = vmatprep.subr.bf16.mxu0 0
          %2055 = vmatpush1.bf16.msra.mxu0 0
          %2056 = vmatprep.subr.bf16.mxu0 0
          %2057 = vmatpush1.bf16.msra.mxu0 0
          %2058 = vmatprep.subr.bf16.mxu0 0
          %2059 = vmatpush1.bf16.msra.mxu0 0
          %2060 = vmatprep.subr.bf16.mxu0 0
          %2061 = vmatpush1.bf16.msra.mxu0 0
          %2062 = vmatprep.subr.bf16.mxu0 0
          %2063 = vmatpush1.bf16.msra.mxu0 0
          %2064 = vmatprep.subr.bf16.mxu0 0
          %2065 = vmatpush1.bf16.msra.mxu0 0
          %2066 = vmatprep.subr.bf16.mxu0 0
          %2067 = vmatpush1.bf16.msra.mxu0 0
          %2068 = vmatprep.subr.bf16.mxu0 0
          %2069 = vmatpush1.bf16.msra.mxu0 0
          %2070 = vmatprep.mubr.bf16.mxu0 0
          %2071 = vmatmul.mubr.bf16.gmra.mrb[0].mxu0 %v291
          %v2072 = vpop.f32.mrb[0].mxu0
          %v2073 = vadd.f32 %v2032, %v2072
          %v2074 = vpop.f32.mrb[0].mxu0
          %v2075 = vpop.f32.mrb[0].mxu0
          %v2076 = vadd.f32 %v2035, %v2075
          %v2077 = vpop.f32.mrb[0].mxu0
          %2078 = vdwg.mxu0
          %2079 = vmatprep.subr.bf16.mxu0 0
          %2080 = vmatpush1.bf16.msra.mxu0 %v1526
          %2081 = vmatprep.subr.bf16.mxu0 0
          %2082 = vmatpush1.bf16.msra.mxu0 0
          %2083 = vmatprep.subr.bf16.mxu0 0
          %2084 = vmatpush1.bf16.msra.mxu0 0
          %2085 = vmatprep.subr.bf16.mxu0 0
          %2086 = vmatpush1.bf16.msra.mxu0 0
          %2087 = vmatprep.subr.bf16.mxu0 0
          %2088 = vmatpush1.bf16.msra.mxu0 0
          %2089 = vmatprep.subr.bf16.mxu0 0
          %2090 = vmatpush1.bf16.msra.mxu0 0
          %2091 = vmatprep.subr.bf16.mxu0 0
          %2092 = vmatpush1.bf16.msra.mxu0 0
          %2093 = vmatprep.subr.bf16.mxu0 0
          %2094 = vmatpush1.bf16.msra.mxu0 0
          %2095 = vmatprep.subr.bf16.mxu0 0
          %2096 = vmatpush1.bf16.msra.mxu0 0
          %2097 = vmatprep.subr.bf16.mxu0 0
          %2098 = vmatpush1.bf16.msra.mxu0 0
          %2099 = vmatprep.subr.bf16.mxu0 0
          %2100 = vmatpush1.bf16.msra.mxu0 0
          %2101 = vmatprep.subr.bf16.mxu0 0
          %2102 = vmatpush1.bf16.msra.mxu0 0
          %2103 = vmatprep.subr.bf16.mxu0 0
          %2104 = vmatpush1.bf16.msra.mxu0 0
          %2105 = vmatprep.subr.bf16.mxu0 0
          %2106 = vmatpush1.bf16.msra.mxu0 0
          %2107 = vmatprep.subr.bf16.mxu0 0
          %2108 = vmatpush1.bf16.msra.mxu0 0
          %2109 = vmatprep.subr.bf16.mxu0 0
          %2110 = vmatpush1.bf16.msra.mxu0 0
          %2111 = vmatprep.mubr.bf16.mxu0 0
          %2112 = vmatmul.mubr.bf16.gmra.mrb[0].mxu0 %v345
          %v2113 = vpop.f32.mrb[0].mxu0
          %v2114 = vadd.f32 0.0, %v2113
          %v2115 = vpop.f32.mrb[0].mxu0
          %v2116 = vpop.f32.mrb[0].mxu0
          %v2117 = vadd.f32 0.0, %v2116
          %v2118 = vpop.f32.mrb[0].mxu0
          %2119 = vdwg.mxu0
          %v2120 = vadd.f32 %v2073, %v2114
          %v2121 = vadd.f32 %v2076, %v2117
          %2122 = vmatprep.subr.bf16.mxu0 0
          %2123 = vmatpush1.bf16.msra.mxu0 %v1837
          %2124 = vmatprep.subr.bf16.mxu0 0
          %2125 = vmatpush1.bf16.msra.mxu0 0
          %2126 = vmatprep.subr.bf16.mxu0 0
          %2127 = vmatpush1.bf16.msra.mxu0 0
          %2128 = vmatprep.subr.bf16.mxu0 0
          %2129 = vmatpush1.bf16.msra.mxu0 0
          %2130 = vmatprep.subr.bf16.mxu0 0
          %2131 = vmatpush1.bf16.msra.mxu0 0
          %2132 = vmatprep.subr.bf16.mxu0 0
          %2133 = vmatpush1.bf16.msra.mxu0 0
          %2134 = vmatprep.subr.bf16.mxu0 0
          %2135 = vmatpush1.bf16.msra.mxu0 0
          %2136 = vmatprep.subr.bf16.mxu0 0
          %2137 = vmatpush1.bf16.msra.mxu0 0
          %2138 = vmatprep.subr.bf16.mxu0 0
          %2139 = vmatpush1.bf16.msra.mxu0 0
          %2140 = vmatprep.subr.bf16.mxu0 0
          %2141 = vmatpush1.bf16.msra.mxu0 0
          %2142 = vmatprep.subr.bf16.mxu0 0
          %2143 = vmatpush1.bf16.msra.mxu0 0
          %2144 = vmatprep.subr.bf16.mxu0 0
          %2145 = vmatpush1.bf16.msra.mxu0 0
          %2146 = vmatprep.subr.bf16.mxu0 0
          %2147 = vmatpush1.bf16.msra.mxu0 0
          %2148 = vmatprep.subr.bf16.mxu0 0
          %2149 = vmatpush1.bf16.msra.mxu0 0
          %2150 = vmatprep.subr.bf16.mxu0 0
          %2151 = vmatpush1.bf16.msra.mxu0 0
          %2152 = vmatprep.subr.bf16.mxu0 0
          %2153 = vmatpush1.bf16.msra.mxu0 0
          %2154 = vmatprep.mubr.bf16.mxu0 0
          %2155 = vmatmul.mubr.bf16.gmra.mrb[0].mxu0 %v399
          %v2156 = vpop.f32.mrb[0].mxu0
          %v2157 = vadd.f32 0.0, %v2156
          %v2158 = vpop.f32.mrb[0].mxu0
          %v2159 = vpop.f32.mrb[0].mxu0
          %v2160 = vadd.f32 0.0, %v2159
          %v2161 = vpop.f32.mrb[0].mxu0
          %2162 = vdwg.mxu0
          %v2163 = vadd.f32 %v2120, %v2157
          %v2164 = vadd.f32 %v2121, %v2160
          %2165 = vmatprep.subr.bf16.mxu0 0
          %2166 = vmatpush1.bf16.msra.mxu0 %v1893
          %2167 = vmatprep.subr.bf16.mxu0 0
          %2168 = vmatpush1.bf16.msra.mxu0 0
          %2169 = vmatprep.subr.bf16.mxu0 0
          %2170 = vmatpush1.bf16.msra.mxu0 0
          %2171 = vmatprep.subr.bf16.mxu0 0
          %2172 = vmatpush1.bf16.msra.mxu0 0
          %2173 = vmatprep.subr.bf16.mxu0 0
          %2174 = vmatpush1.bf16.msra.mxu0 0
          %2175 = vmatprep.subr.bf16.mxu0 0
          %2176 = vmatpush1.bf16.msra.mxu0 0
          %2177 = vmatprep.subr.bf16.mxu0 0
          %2178 = vmatpush1.bf16.msra.mxu0 0
          %2179 = vmatprep.subr.bf16.mxu0 0
          %2180 = vmatpush1.bf16.msra.mxu0 0
          %2181 = vmatprep.subr.bf16.mxu0 0
          %2182 = vmatpush1.bf16.msra.mxu0 0
          %2183 = vmatprep.subr.bf16.mxu0 0
          %2184 = vmatpush1.bf16.msra.mxu0 0
          %2185 = vmatprep.subr.bf16.mxu0 0
          %2186 = vmatpush1.bf16.msra.mxu0 0
          %2187 = vmatprep.subr.bf16.mxu0 0
          %2188 = vmatpush1.bf16.msra.mxu0 0
          %2189 = vmatprep.subr.bf16.mxu0 0
          %2190 = vmatpush1.bf16.msra.mxu0 0
          %2191 = vmatprep.subr.bf16.mxu0 0
          %2192 = vmatpush1.bf16.msra.mxu0 0
          %2193 = vmatprep.subr.bf16.mxu0 0
          %2194 = vmatpush1.bf16.msra.mxu0 0
          %2195 = vmatprep.subr.bf16.mxu0 0
          %2196 = vmatpush1.bf16.msra.mxu0 0
          %2197 = vmatprep.mubr.bf16.mxu0 0
          %2198 = vmatmul.mubr.bf16.gmra.mrb[0].mxu0 %v463
          %v2199 = vpop.f32.mrb[0].mxu0
          %v2200 = vadd.f32 0.0, %v2199
          %v2201 = vpop.f32.mrb[0].mxu0
          %v2202 = vpop.f32.mrb[0].mxu0
          %v2203 = vadd.f32 0.0, %v2202
          %v2204 = vpop.f32.mrb[0].mxu0
          %2205 = vdwg.mxu0
          %v2206 = vadd.f32 %v2163, %v2200
          %v2207 = vadd.f32 %v2164, %v2203
          %2208 = vmatprep.subr.bf16.mxu0 0
          %2209 = vmatpush1.bf16.msra.mxu0 %v1941
          %2210 = vmatprep.subr.bf16.mxu0 0
          %2211 = vmatpush1.bf16.msra.mxu0 0
          %2212 = vmatprep.subr.bf16.mxu0 0
          %2213 = vmatpush1.bf16.msra.mxu0 0
          %2214 = vmatprep.subr.bf16.mxu0 0
          %2215 = vmatpush1.bf16.msra.mxu0 0
          %2216 = vmatprep.subr.bf16.mxu0 0
          %2217 = vmatpush1.bf16.msra.mxu0 0
          %2218 = vmatprep.subr.bf16.mxu0 0
          %2219 = vmatpush1.bf16.msra.mxu0 0
          %2220 = vmatprep.subr.bf16.mxu0 0
          %2221 = vmatpush1.bf16.msra.mxu0 0
          %2222 = vmatprep.subr.bf16.mxu0 0
          %2223 = vmatpush1.bf16.msra.mxu0 0
          %2224 = vmatprep.subr.bf16.mxu0 0
          %2225 = vmatpush1.bf16.msra.mxu0 0
          %2226 = vmatprep.subr.bf16.mxu0 0
          %2227 = vmatpush1.bf16.msra.mxu0 0
          %2228 = vmatprep.subr.bf16.mxu0 0
          %2229 = vmatpush1.bf16.msra.mxu0 0
          %2230 = vmatprep.subr.bf16.mxu0 0
          %2231 = vmatpush1.bf16.msra.mxu0 0
          %2232 = vmatprep.subr.bf16.mxu0 0
          %2233 = vmatpush1.bf16.msra.mxu0 0
          %2234 = vmatprep.subr.bf16.mxu0 0
          %2235 = vmatpush1.bf16.msra.mxu0 0
          %2236 = vmatprep.subr.bf16.mxu0 0
          %2237 = vmatpush1.bf16.msra.mxu0 0
          %2238 = vmatprep.subr.bf16.mxu0 0
          %2239 = vmatpush1.bf16.msra.mxu0 0
          %2240 = vmatprep.mubr.bf16.mxu0 0
          %2241 = vmatmul.mubr.bf16.gmra.mrb[0].mxu0 %v519
          %v2242 = vpop.f32.mrb[0].mxu0
          %v2243 = vadd.f32 0.0, %v2242
          %v2244 = vpop.f32.mrb[0].mxu0
          %v2245 = vpop.f32.mrb[0].mxu0
          %v2246 = vadd.f32 0.0, %v2245
          %v2247 = vpop.f32.mrb[0].mxu0
          %2248 = vdwg.mxu0
          %v2249 = vadd.f32 %v2206, %v2243
          %v2250 = vadd.f32 %v2207, %v2246
          %v2252 = vsel %vm240, %v217, 0
          %2254 = vmatprep.subr.bf16.mxu0 0
          %2255 = vmatpush1.bf16.msra.mxu0 %v2252
          %2256 = vmatprep.subr.bf16.mxu0 0
          %2257 = vmatpush1.bf16.msra.mxu0 0
          %2258 = vmatprep.subr.bf16.mxu0 0
          %2259 = vmatpush1.bf16.msra.mxu0 0
          %2260 = vmatprep.subr.bf16.mxu0 0
          %2261 = vmatpush1.bf16.msra.mxu0 0
          %2262 = vmatprep.subr.bf16.mxu0 0
          %2263 = vmatpush1.bf16.msra.mxu0 0
          %2264 = vmatprep.subr.bf16.mxu0 0
          %2265 = vmatpush1.bf16.msra.mxu0 0
          %2266 = vmatprep.subr.bf16.mxu0 0
          %2267 = vmatpush1.bf16.msra.mxu0 0
          %2268 = vmatprep.subr.bf16.mxu0 0
          %2269 = vmatpush1.bf16.msra.mxu0 0
          %2270 = vmatprep.subr.bf16.mxu0 0
          %2271 = vmatpush1.bf16.msra.mxu0 0
          %2272 = vmatprep.subr.bf16.mxu0 0
          %2273 = vmatpush1.bf16.msra.mxu0 0
          %2274 = vmatprep.subr.bf16.mxu0 0
          %2275 = vmatpush1.bf16.msra.mxu0 0
          %2276 = vmatprep.subr.bf16.mxu0 0
          %2277 = vmatpush1.bf16.msra.mxu0 0
          %2278 = vmatprep.subr.bf16.mxu0 0
          %2279 = vmatpush1.bf16.msra.mxu0 0
          %2280 = vmatprep.subr.bf16.mxu0 0
          %2281 = vmatpush1.bf16.msra.mxu0 0
          %2282 = vmatprep.subr.bf16.mxu0 0
          %2283 = vmatpush1.bf16.msra.mxu0 0
          %2284 = vmatprep.subr.bf16.mxu0 0
          %2285 = vmatpush1.bf16.msra.mxu0 0
          %2286 = vmatprep.mubr.bf16.mxu0 0
          %2287 = vmatmul.mubr.bf16.gmra.mrb[0].mxu0 %v573
          %v2288 = vpop.f32.mrb[0].mxu0
          %v2289 = vadd.f32 0.0, %v2288
          %v2290 = vpop.f32.mrb[0].mxu0
          %v2291 = vpop.f32.mrb[0].mxu0
          %v2292 = vadd.f32 0.0, %v2291
          %v2293 = vpop.f32.mrb[0].mxu0
          %2294 = vdwg.mxu0
          %v2295 = vadd.f32 %v2249, %v2289
          %v2296 = vadd.f32 %v2250, %v2292
          %v2299 = vunpack.c.l.s4 1983009808
          %v2300 = vunpack.c.0.s8 %v2299
          %v2301 = vlaneseq
          %v2302 = vshrl.u32 %v2301, 7
          %v2303 = vsub.s32 %v2300, %v2302
          %v2304 = vrot.slane %v217, %v2303
          %2305 = vrot.lane.b32.xlu0 %v2304, 127
          %v2306 = vpop.permute.xlu0 %2305
          %v2308 = vsel %vm240, %v2306, 0
          %2310 = vmatprep.subr.bf16.mxu0 0
          %2311 = vmatpush1.bf16.msra.mxu0 %v2308
          %2312 = vmatprep.subr.bf16.mxu0 0
          %2313 = vmatpush1.bf16.msra.mxu0 0
          %2314 = vmatprep.subr.bf16.mxu0 0
          %2315 = vmatpush1.bf16.msra.mxu0 0
          %2316 = vmatprep.subr.bf16.mxu0 0
          %2317 = vmatpush1.bf16.msra.mxu0 0
          %2318 = vmatprep.subr.bf16.mxu0 0
          %2319 = vmatpush1.bf16.msra.mxu0 0
          %2320 = vmatprep.subr.bf16.mxu0 0
          %2321 = vmatpush1.bf16.msra.mxu0 0
          %2322 = vmatprep.subr.bf16.mxu0 0
          %2323 = vmatpush1.bf16.msra.mxu0 0
          %2324 = vmatprep.subr.bf16.mxu0 0
          %2325 = vmatpush1.bf16.msra.mxu0 0
          %2326 = vmatprep.subr.bf16.mxu0 0
          %2327 = vmatpush1.bf16.msra.mxu0 0
          %2328 = vmatprep.subr.bf16.mxu0 0
          %2329 = vmatpush1.bf16.msra.mxu0 0
          %2330 = vmatprep.subr.bf16.mxu0 0
          %2331 = vmatpush1.bf16.msra.mxu0 0
          %2332 = vmatprep.subr.bf16.mxu0 0
          %2333 = vmatpush1.bf16.msra.mxu0 0
          %2334 = vmatprep.subr.bf16.mxu0 0
          %2335 = vmatpush1.bf16.msra.mxu0 0
          %2336 = vmatprep.subr.bf16.mxu0 0
          %2337 = vmatpush1.bf16.msra.mxu0 0
          %2338 = vmatprep.subr.bf16.mxu0 0
          %2339 = vmatpush1.bf16.msra.mxu0 0
          %2340 = vmatprep.subr.bf16.mxu0 0
          %2341 = vmatpush1.bf16.msra.mxu0 0
          %2342 = vmatprep.mubr.bf16.mxu0 0
          %2343 = vmatmul.mubr.bf16.gmra.mrb[0].mxu0 %v637
          %v2344 = vpop.f32.mrb[0].mxu0
          %v2345 = vadd.f32 0.0, %v2344
          %v2346 = vpop.f32.mrb[0].mxu0
          %v2347 = vpop.f32.mrb[0].mxu0
          %v2348 = vadd.f32 0.0, %v2347
          %v2349 = vpop.f32.mrb[0].mxu0
          %2350 = vdwg.mxu0
          %v2351 = vadd.f32 %v2295, %v2345
          %v2352 = vadd.f32 %v2296, %v2348
          %2353 = vrot.lane.b32.xlu0 %v2304, 126
          %v2354 = vpop.permute.xlu0 %2353
          %v2356 = vsel %vm240, %v2354, 0
          %2358 = vmatprep.subr.bf16.mxu0 0
          %2359 = vmatpush1.bf16.msra.mxu0 %v2356
          %2360 = vmatprep.subr.bf16.mxu0 0
          %2361 = vmatpush1.bf16.msra.mxu0 0
          %2362 = vmatprep.subr.bf16.mxu0 0
          %2363 = vmatpush1.bf16.msra.mxu0 0
          %2364 = vmatprep.subr.bf16.mxu0 0
          %2365 = vmatpush1.bf16.msra.mxu0 0
          %2366 = vmatprep.subr.bf16.mxu0 0
          %2367 = vmatpush1.bf16.msra.mxu0 0
          %2368 = vmatprep.subr.bf16.mxu0 0
          %2369 = vmatpush1.bf16.msra.mxu0 0
          %2370 = vmatprep.subr.bf16.mxu0 0
          %2371 = vmatpush1.bf16.msra.mxu0 0
          %2372 = vmatprep.subr.bf16.mxu0 0
          %2373 = vmatpush1.bf16.msra.mxu0 0
          %2374 = vmatprep.subr.bf16.mxu0 0
          %2375 = vmatpush1.bf16.msra.mxu0 0
          %2376 = vmatprep.subr.bf16.mxu0 0
          %2377 = vmatpush1.bf16.msra.mxu0 0
          %2378 = vmatprep.subr.bf16.mxu0 0
          %2379 = vmatpush1.bf16.msra.mxu0 0
          %2380 = vmatprep.subr.bf16.mxu0 0
          %2381 = vmatpush1.bf16.msra.mxu0 0
          %2382 = vmatprep.subr.bf16.mxu0 0
          %2383 = vmatpush1.bf16.msra.mxu0 0
          %2384 = vmatprep.subr.bf16.mxu0 0
          %2385 = vmatpush1.bf16.msra.mxu0 0
          %2386 = vmatprep.subr.bf16.mxu0 0
          %2387 = vmatpush1.bf16.msra.mxu0 0
          %2388 = vmatprep.subr.bf16.mxu0 0
          %2389 = vmatpush1.bf16.msra.mxu0 0
          %2390 = vmatprep.mubr.bf16.mxu0 0
          %2391 = vmatmul.mubr.bf16.gmra.mrb[0].mxu0 %v693
          %v2392 = vpop.f32.mrb[0].mxu0
          %v2393 = vadd.f32 0.0, %v2392
          %v2394 = vpop.f32.mrb[0].mxu0
          %v2395 = vpop.f32.mrb[0].mxu0
          %v2396 = vadd.f32 0.0, %v2395
          %v2397 = vpop.f32.mrb[0].mxu0
          %2398 = vdwg.mxu0
          %v2399 = vadd.f32 %v2351, %v2393
          %v2400 = vadd.f32 %v2352, %v2396
          %v2401 = vadd.f32 %v1986, %v2399
          %v2402 = vadd.f32 %v1987, %v2400
          %v2403 = vmul.f32 %v2399, %v2399
          %v2404 = vmul.f32 %v2400, %v2400
          %v2405 = vadd.f32 %v1990, %v2403
          %v2406 = vadd.f32 %v1991, %v2404
          %v2407 = vpack.c.bf16 %v2400, %v2399
          %s2408 = sadd.s32 %s168, 4
          %s2409 = smul.addr %s2408, 8
          %s2410 = scalar_lea.vmem [#allocation2], %s2409
          %2411 = vst.msk [vmem:[%s2410] sm:$0xff] %vm750, %v2407
          %2412 = vmatprep.subr.bf16.mxu0 0
          %2413 = vmatpush1.bf16.msra.mxu0 %v1893
          %2414 = vmatprep.subr.bf16.mxu0 0
          %2415 = vmatpush1.bf16.msra.mxu0 0
          %2416 = vmatprep.subr.bf16.mxu0 0
          %2417 = vmatpush1.bf16.msra.mxu0 0
          %2418 = vmatprep.subr.bf16.mxu0 0
          %2419 = vmatpush1.bf16.msra.mxu0 0
          %2420 = vmatprep.subr.bf16.mxu0 0
          %2421 = vmatpush1.bf16.msra.mxu0 0
          %2422 = vmatprep.subr.bf16.mxu0 0
          %2423 = vmatpush1.bf16.msra.mxu0 0
          %2424 = vmatprep.subr.bf16.mxu0 0
          %2425 = vmatpush1.bf16.msra.mxu0 0
          %2426 = vmatprep.subr.bf16.mxu0 0
          %2427 = vmatpush1.bf16.msra.mxu0 0
          %2428 = vmatprep.subr.bf16.mxu0 0
          %2429 = vmatpush1.bf16.msra.mxu0 0
          %2430 = vmatprep.subr.bf16.mxu0 0
          %2431 = vmatpush1.bf16.msra.mxu0 0
          %2432 = vmatprep.subr.bf16.mxu0 0
          %2433 = vmatpush1.bf16.msra.mxu0 0
          %2434 = vmatprep.subr.bf16.mxu0 0
          %2435 = vmatpush1.bf16.msra.mxu0 0
          %2436 = vmatprep.subr.bf16.mxu0 0
          %2437 = vmatpush1.bf16.msra.mxu0 0
          %2438 = vmatprep.subr.bf16.mxu0 0
          %2439 = vmatpush1.bf16.msra.mxu0 0
          %2440 = vmatprep.subr.bf16.mxu0 0
          %2441 = vmatpush1.bf16.msra.mxu0 0
          %2442 = vmatprep.subr.bf16.mxu0 0
          %2443 = vmatpush1.bf16.msra.mxu0 0
          %2444 = vmatprep.mubr.bf16.mxu0 0
          %2445 = vmatmul.mubr.bf16.gmra.mrb[0].mxu0 %v238
          %v2446 = vpop.f32.mrb[0].mxu0
          %v2447 = vadd.f32 0.0, %v2446
          %v2448 = vpop.f32.mrb[0].mxu0
          %v2449 = vpop.f32.mrb[0].mxu0
          %v2450 = vadd.f32 0.0, %v2449
          %v2451 = vpop.f32.mrb[0].mxu0
          %2452 = vdwg.mxu0
          %2453 = vmatprep.subr.bf16.mxu0 0
          %2454 = vmatpush1.bf16.msra.mxu0 %v1837
          %2455 = vmatprep.subr.bf16.mxu0 0
          %2456 = vmatpush1.bf16.msra.mxu0 0
          %2457 = vmatprep.subr.bf16.mxu0 0
          %2458 = vmatpush1.bf16.msra.mxu0 0
          %2459 = vmatprep.subr.bf16.mxu0 0
          %2460 = vmatpush1.bf16.msra.mxu0 0
          %2461 = vmatprep.subr.bf16.mxu0 0
          %2462 = vmatpush1.bf16.msra.mxu0 0
          %2463 = vmatprep.subr.bf16.mxu0 0
          %2464 = vmatpush1.bf16.msra.mxu0 0
          %2465 = vmatprep.subr.bf16.mxu0 0
          %2466 = vmatpush1.bf16.msra.mxu0 0
          %2467 = vmatprep.subr.bf16.mxu0 0
          %2468 = vmatpush1.bf16.msra.mxu0 0
          %2469 = vmatprep.subr.bf16.mxu0 0
          %2470 = vmatpush1.bf16.msra.mxu0 0
          %2471 = vmatprep.subr.bf16.mxu0 0
          %2472 = vmatpush1.bf16.msra.mxu0 0
          %2473 = vmatprep.subr.bf16.mxu0 0
          %2474 = vmatpush1.bf16.msra.mxu0 0
          %2475 = vmatprep.subr.bf16.mxu0 0
          %2476 = vmatpush1.bf16.msra.mxu0 0
          %2477 = vmatprep.subr.bf16.mxu0 0
          %2478 = vmatpush1.bf16.msra.mxu0 0
          %2479 = vmatprep.subr.bf16.mxu0 0
          %2480 = vmatpush1.bf16.msra.mxu0 0
          %2481 = vmatprep.subr.bf16.mxu0 0
          %2482 = vmatpush1.bf16.msra.mxu0 0
          %2483 = vmatprep.subr.bf16.mxu0 0
          %2484 = vmatpush1.bf16.msra.mxu0 0
          %2485 = vmatprep.mubr.bf16.mxu0 0
          %2486 = vmatmul.mubr.bf16.gmra.mrb[0].mxu0 %v291
          %v2487 = vpop.f32.mrb[0].mxu0
          %v2488 = vadd.f32 %v2447, %v2487
          %v2489 = vpop.f32.mrb[0].mxu0
          %v2490 = vpop.f32.mrb[0].mxu0
          %v2491 = vadd.f32 %v2450, %v2490
          %v2492 = vpop.f32.mrb[0].mxu0
          %2493 = vdwg.mxu0
          %2494 = vmatprep.subr.bf16.mxu0 0
          %2495 = vmatpush1.bf16.msra.mxu0 %v1941
          %2496 = vmatprep.subr.bf16.mxu0 0
          %2497 = vmatpush1.bf16.msra.mxu0 0
          %2498 = vmatprep.subr.bf16.mxu0 0
          %2499 = vmatpush1.bf16.msra.mxu0 0
          %2500 = vmatprep.subr.bf16.mxu0 0
          %2501 = vmatpush1.bf16.msra.mxu0 0
          %2502 = vmatprep.subr.bf16.mxu0 0
          %2503 = vmatpush1.bf16.msra.mxu0 0
          %2504 = vmatprep.subr.bf16.mxu0 0
          %2505 = vmatpush1.bf16.msra.mxu0 0
          %2506 = vmatprep.subr.bf16.mxu0 0
          %2507 = vmatpush1.bf16.msra.mxu0 0
          %2508 = vmatprep.subr.bf16.mxu0 0
          %2509 = vmatpush1.bf16.msra.mxu0 0
          %2510 = vmatprep.subr.bf16.mxu0 0
          %2511 = vmatpush1.bf16.msra.mxu0 0
          %2512 = vmatprep.subr.bf16.mxu0 0
          %2513 = vmatpush1.bf16.msra.mxu0 0
          %2514 = vmatprep.subr.bf16.mxu0 0
          %2515 = vmatpush1.bf16.msra.mxu0 0
          %2516 = vmatprep.subr.bf16.mxu0 0
          %2517 = vmatpush1.bf16.msra.mxu0 0
          %2518 = vmatprep.subr.bf16.mxu0 0
          %2519 = vmatpush1.bf16.msra.mxu0 0
          %2520 = vmatprep.subr.bf16.mxu0 0
          %2521 = vmatpush1.bf16.msra.mxu0 0
          %2522 = vmatprep.subr.bf16.mxu0 0
          %2523 = vmatpush1.bf16.msra.mxu0 0
          %2524 = vmatprep.subr.bf16.mxu0 0
          %2525 = vmatpush1.bf16.msra.mxu0 0
          %2526 = vmatprep.mubr.bf16.mxu0 0
          %2527 = vmatmul.mubr.bf16.gmra.mrb[0].mxu0 %v345
          %v2528 = vpop.f32.mrb[0].mxu0
          %v2529 = vadd.f32 0.0, %v2528
          %v2530 = vpop.f32.mrb[0].mxu0
          %v2531 = vpop.f32.mrb[0].mxu0
          %v2532 = vadd.f32 0.0, %v2531
          %v2533 = vpop.f32.mrb[0].mxu0
          %2534 = vdwg.mxu0
          %v2535 = vadd.f32 %v2488, %v2529
          %v2536 = vadd.f32 %v2491, %v2532
          %2537 = vmatprep.subr.bf16.mxu0 0
          %2538 = vmatpush1.bf16.msra.mxu0 %v2252
          %2539 = vmatprep.subr.bf16.mxu0 0
          %2540 = vmatpush1.bf16.msra.mxu0 0
          %2541 = vmatprep.subr.bf16.mxu0 0
          %2542 = vmatpush1.bf16.msra.mxu0 0
          %2543 = vmatprep.subr.bf16.mxu0 0
          %2544 = vmatpush1.bf16.msra.mxu0 0
          %2545 = vmatprep.subr.bf16.mxu0 0
          %2546 = vmatpush1.bf16.msra.mxu0 0
          %2547 = vmatprep.subr.bf16.mxu0 0
          %2548 = vmatpush1.bf16.msra.mxu0 0
          %2549 = vmatprep.subr.bf16.mxu0 0
          %2550 = vmatpush1.bf16.msra.mxu0 0
          %2551 = vmatprep.subr.bf16.mxu0 0
          %2552 = vmatpush1.bf16.msra.mxu0 0
          %2553 = vmatprep.subr.bf16.mxu0 0
          %2554 = vmatpush1.bf16.msra.mxu0 0
          %2555 = vmatprep.subr.bf16.mxu0 0
          %2556 = vmatpush1.bf16.msra.mxu0 0
          %2557 = vmatprep.subr.bf16.mxu0 0
          %2558 = vmatpush1.bf16.msra.mxu0 0
          %2559 = vmatprep.subr.bf16.mxu0 0
          %2560 = vmatpush1.bf16.msra.mxu0 0
          %2561 = vmatprep.subr.bf16.mxu0 0
          %2562 = vmatpush1.bf16.msra.mxu0 0
          %2563 = vmatprep.subr.bf16.mxu0 0
          %2564 = vmatpush1.bf16.msra.mxu0 0
          %2565 = vmatprep.subr.bf16.mxu0 0
          %2566 = vmatpush1.bf16.msra.mxu0 0
          %2567 = vmatprep.subr.bf16.mxu0 0
          %2568 = vmatpush1.bf16.msra.mxu0 0
          %2569 = vmatprep.mubr.bf16.mxu0 0
          %2570 = vmatmul.mubr.bf16.gmra.mrb[0].mxu0 %v399
          %v2571 = vpop.f32.mrb[0].mxu0
          %v2572 = vadd.f32 0.0, %v2571
          %v2573 = vpop.f32.mrb[0].mxu0
          %v2574 = vpop.f32.mrb[0].mxu0
          %v2575 = vadd.f32 0.0, %v2574
          %v2576 = vpop.f32.mrb[0].mxu0
          %2577 = vdwg.mxu0
          %v2578 = vadd.f32 %v2535, %v2572
          %v2579 = vadd.f32 %v2536, %v2575
          %2580 = vmatprep.subr.bf16.mxu0 0
          %2581 = vmatpush1.bf16.msra.mxu0 %v2308
          %2582 = vmatprep.subr.bf16.mxu0 0
          %2583 = vmatpush1.bf16.msra.mxu0 0
          %2584 = vmatprep.subr.bf16.mxu0 0
          %2585 = vmatpush1.bf16.msra.mxu0 0
          %2586 = vmatprep.subr.bf16.mxu0 0
          %2587 = vmatpush1.bf16.msra.mxu0 0
          %2588 = vmatprep.subr.bf16.mxu0 0
          %2589 = vmatpush1.bf16.msra.mxu0 0
          %2590 = vmatprep.subr.bf16.mxu0 0
          %2591 = vmatpush1.bf16.msra.mxu0 0
          %2592 = vmatprep.subr.bf16.mxu0 0
          %2593 = vmatpush1.bf16.msra.mxu0 0
          %2594 = vmatprep.subr.bf16.mxu0 0
          %2595 = vmatpush1.bf16.msra.mxu0 0
          %2596 = vmatprep.subr.bf16.mxu0 0
          %2597 = vmatpush1.bf16.msra.mxu0 0
          %2598 = vmatprep.subr.bf16.mxu0 0
          %2599 = vmatpush1.bf16.msra.mxu0 0
          %2600 = vmatprep.subr.bf16.mxu0 0
          %2601 = vmatpush1.bf16.msra.mxu0 0
          %2602 = vmatprep.subr.bf16.mxu0 0
          %2603 = vmatpush1.bf16.msra.mxu0 0
          %2604 = vmatprep.subr.bf16.mxu0 0
          %2605 = vmatpush1.bf16.msra.mxu0 0
          %2606 = vmatprep.subr.bf16.mxu0 0
          %2607 = vmatpush1.bf16.msra.mxu0 0
          %2608 = vmatprep.subr.bf16.mxu0 0
          %2609 = vmatpush1.bf16.msra.mxu0 0
          %2610 = vmatprep.subr.bf16.mxu0 0
          %2611 = vmatpush1.bf16.msra.mxu0 0
          %2612 = vmatprep.mubr.bf16.mxu0 0
          %2613 = vmatmul.mubr.bf16.gmra.mrb[0].mxu0 %v463
          %v2614 = vpop.f32.mrb[0].mxu0
          %v2615 = vadd.f32 0.0, %v2614
          %v2616 = vpop.f32.mrb[0].mxu0
          %v2617 = vpop.f32.mrb[0].mxu0
          %v2618 = vadd.f32 0.0, %v2617
          %v2619 = vpop.f32.mrb[0].mxu0
          %2620 = vdwg.mxu0
          %v2621 = vadd.f32 %v2578, %v2615
          %v2622 = vadd.f32 %v2579, %v2618
          %2623 = vmatprep.subr.bf16.mxu0 0
          %2624 = vmatpush1.bf16.msra.mxu0 %v2356
          %2625 = vmatprep.subr.bf16.mxu0 0
          %2626 = vmatpush1.bf16.msra.mxu0 0
          %2627 = vmatprep.subr.bf16.mxu0 0
          %2628 = vmatpush1.bf16.msra.mxu0 0
          %2629 = vmatprep.subr.bf16.mxu0 0
          %2630 = vmatpush1.bf16.msra.mxu0 0
          %2631 = vmatprep.subr.bf16.mxu0 0
          %2632 = vmatpush1.bf16.msra.mxu0 0
          %2633 = vmatprep.subr.bf16.mxu0 0
          %2634 = vmatpush1.bf16.msra.mxu0 0
          %2635 = vmatprep.subr.bf16.mxu0 0
          %2636 = vmatpush1.bf16.msra.mxu0 0
          %2637 = vmatprep.subr.bf16.mxu0 0
          %2638 = vmatpush1.bf16.msra.mxu0 0
          %2639 = vmatprep.subr.bf16.mxu0 0
          %2640 = vmatpush1.bf16.msra.mxu0 0
          %2641 = vmatprep.subr.bf16.mxu0 0
          %2642 = vmatpush1.bf16.msra.mxu0 0
          %2643 = vmatprep.subr.bf16.mxu0 0
          %2644 = vmatpush1.bf16.msra.mxu0 0
          %2645 = vmatprep.subr.bf16.mxu0 0
          %2646 = vmatpush1.bf16.msra.mxu0 0
          %2647 = vmatprep.subr.bf16.mxu0 0
          %2648 = vmatpush1.bf16.msra.mxu0 0
          %2649 = vmatprep.subr.bf16.mxu0 0
          %2650 = vmatpush1.bf16.msra.mxu0 0
          %2651 = vmatprep.subr.bf16.mxu0 0
          %2652 = vmatpush1.bf16.msra.mxu0 0
          %2653 = vmatprep.subr.bf16.mxu0 0
          %2654 = vmatpush1.bf16.msra.mxu0 0
          %2655 = vmatprep.mubr.bf16.mxu0 0
          %2656 = vmatmul.mubr.bf16.gmra.mrb[0].mxu0 %v519
          %v2657 = vpop.f32.mrb[0].mxu0
          %v2658 = vadd.f32 0.0, %v2657
          %v2659 = vpop.f32.mrb[0].mxu0
          %v2660 = vpop.f32.mrb[0].mxu0
          %v2661 = vadd.f32 0.0, %v2660
          %v2662 = vpop.f32.mrb[0].mxu0
          %2663 = vdwg.mxu0
          %v2664 = vadd.f32 %v2621, %v2658
          %v2665 = vadd.f32 %v2622, %v2661
          %v2667 = vsel %vm240, %v218, 0
          %2669 = vmatprep.subr.bf16.mxu0 0
          %2670 = vmatpush1.bf16.msra.mxu0 %v2667
          %2671 = vmatprep.subr.bf16.mxu0 0
          %2672 = vmatpush1.bf16.msra.mxu0 0
          %2673 = vmatprep.subr.bf16.mxu0 0
          %2674 = vmatpush1.bf16.msra.mxu0 0
          %2675 = vmatprep.subr.bf16.mxu0 0
          %2676 = vmatpush1.bf16.msra.mxu0 0
          %2677 = vmatprep.subr.bf16.mxu0 0
          %2678 = vmatpush1.bf16.msra.mxu0 0
          %2679 = vmatprep.subr.bf16.mxu0 0
          %2680 = vmatpush1.bf16.msra.mxu0 0
          %2681 = vmatprep.subr.bf16.mxu0 0
          %2682 = vmatpush1.bf16.msra.mxu0 0
          %2683 = vmatprep.subr.bf16.mxu0 0
          %2684 = vmatpush1.bf16.msra.mxu0 0
          %2685 = vmatprep.subr.bf16.mxu0 0
          %2686 = vmatpush1.bf16.msra.mxu0 0
          %2687 = vmatprep.subr.bf16.mxu0 0
          %2688 = vmatpush1.bf16.msra.mxu0 0
          %2689 = vmatprep.subr.bf16.mxu0 0
          %2690 = vmatpush1.bf16.msra.mxu0 0
          %2691 = vmatprep.subr.bf16.mxu0 0
          %2692 = vmatpush1.bf16.msra.mxu0 0
          %2693 = vmatprep.subr.bf16.mxu0 0
          %2694 = vmatpush1.bf16.msra.mxu0 0
          %2695 = vmatprep.subr.bf16.mxu0 0
          %2696 = vmatpush1.bf16.msra.mxu0 0
          %2697 = vmatprep.subr.bf16.mxu0 0
          %2698 = vmatpush1.bf16.msra.mxu0 0
          %2699 = vmatprep.subr.bf16.mxu0 0
          %2700 = vmatpush1.bf16.msra.mxu0 0
          %2701 = vmatprep.mubr.bf16.mxu0 0
          %2702 = vmatmul.mubr.bf16.gmra.mrb[0].mxu0 %v573
          %v2703 = vpop.f32.mrb[0].mxu0
          %v2704 = vadd.f32 0.0, %v2703
          %v2705 = vpop.f32.mrb[0].mxu0
          %v2706 = vpop.f32.mrb[0].mxu0
          %v2707 = vadd.f32 0.0, %v2706
          %v2708 = vpop.f32.mrb[0].mxu0
          %2709 = vdwg.mxu0
          %v2710 = vadd.f32 %v2664, %v2704
          %v2711 = vadd.f32 %v2665, %v2707
          %v2714 = vunpack.c.l.s4 1983009808
          %v2715 = vunpack.c.0.s8 %v2714
          %v2716 = vlaneseq
          %v2717 = vshrl.u32 %v2716, 7
          %v2718 = vsub.s32 %v2715, %v2717
          %v2719 = vrot.slane %v218, %v2718
          %2720 = vrot.lane.b32.xlu0 %v2719, 127
          %v2721 = vpop.permute.xlu0 %2720
          %v2723 = vsel %vm240, %v2721, 0
          %2725 = vmatprep.subr.bf16.mxu0 0
          %2726 = vmatpush1.bf16.msra.mxu0 %v2723
          %2727 = vmatprep.subr.bf16.mxu0 0
          %2728 = vmatpush1.bf16.msra.mxu0 0
          %2729 = vmatprep.subr.bf16.mxu0 0
          %2730 = vmatpush1.bf16.msra.mxu0 0
          %2731 = vmatprep.subr.bf16.mxu0 0
          %2732 = vmatpush1.bf16.msra.mxu0 0
          %2733 = vmatprep.subr.bf16.mxu0 0
          %2734 = vmatpush1.bf16.msra.mxu0 0
          %2735 = vmatprep.subr.bf16.mxu0 0
          %2736 = vmatpush1.bf16.msra.mxu0 0
          %2737 = vmatprep.subr.bf16.mxu0 0
          %2738 = vmatpush1.bf16.msra.mxu0 0
          %2739 = vmatprep.subr.bf16.mxu0 0
          %2740 = vmatpush1.bf16.msra.mxu0 0
          %2741 = vmatprep.subr.bf16.mxu0 0
          %2742 = vmatpush1.bf16.msra.mxu0 0
          %2743 = vmatprep.subr.bf16.mxu0 0
          %2744 = vmatpush1.bf16.msra.mxu0 0
          %2745 = vmatprep.subr.bf16.mxu0 0
          %2746 = vmatpush1.bf16.msra.mxu0 0
          %2747 = vmatprep.subr.bf16.mxu0 0
          %2748 = vmatpush1.bf16.msra.mxu0 0
          %2749 = vmatprep.subr.bf16.mxu0 0
          %2750 = vmatpush1.bf16.msra.mxu0 0
          %2751 = vmatprep.subr.bf16.mxu0 0
          %2752 = vmatpush1.bf16.msra.mxu0 0
          %2753 = vmatprep.subr.bf16.mxu0 0
          %2754 = vmatpush1.bf16.msra.mxu0 0
          %2755 = vmatprep.subr.bf16.mxu0 0
          %2756 = vmatpush1.bf16.msra.mxu0 0
          %2757 = vmatprep.mubr.bf16.mxu0 0
          %2758 = vmatmul.mubr.bf16.gmra.mrb[0].mxu0 %v637
          %v2759 = vpop.f32.mrb[0].mxu0
          %v2760 = vadd.f32 0.0, %v2759
          %v2761 = vpop.f32.mrb[0].mxu0
          %v2762 = vpop.f32.mrb[0].mxu0
          %v2763 = vadd.f32 0.0, %v2762
          %v2764 = vpop.f32.mrb[0].mxu0
          %2765 = vdwg.mxu0
          %v2766 = vadd.f32 %v2710, %v2760
          %v2767 = vadd.f32 %v2711, %v2763
          %2768 = vrot.lane.b32.xlu0 %v2719, 126
          %v2769 = vpop.permute.xlu0 %2768
          %v2771 = vsel %vm240, %v2769, 0
          %2773 = vmatprep.subr.bf16.mxu0 0
          %2774 = vmatpush1.bf16.msra.mxu0 %v2771
          %2775 = vmatprep.subr.bf16.mxu0 0
          %2776 = vmatpush1.bf16.msra.mxu0 0
          %2777 = vmatprep.subr.bf16.mxu0 0
          %2778 = vmatpush1.bf16.msra.mxu0 0
          %2779 = vmatprep.subr.bf16.mxu0 0
          %2780 = vmatpush1.bf16.msra.mxu0 0
          %2781 = vmatprep.subr.bf16.mxu0 0
          %2782 = vmatpush1.bf16.msra.mxu0 0
          %2783 = vmatprep.subr.bf16.mxu0 0
          %2784 = vmatpush1.bf16.msra.mxu0 0
          %2785 = vmatprep.subr.bf16.mxu0 0
          %2786 = vmatpush1.bf16.msra.mxu0 0
          %2787 = vmatprep.subr.bf16.mxu0 0
          %2788 = vmatpush1.bf16.msra.mxu0 0
          %2789 = vmatprep.subr.bf16.mxu0 0
          %2790 = vmatpush1.bf16.msra.mxu0 0
          %2791 = vmatprep.subr.bf16.mxu0 0
          %2792 = vmatpush1.bf16.msra.mxu0 0
          %2793 = vmatprep.subr.bf16.mxu0 0
          %2794 = vmatpush1.bf16.msra.mxu0 0
          %2795 = vmatprep.subr.bf16.mxu0 0
          %2796 = vmatpush1.bf16.msra.mxu0 0
          %2797 = vmatprep.subr.bf16.mxu0 0
          %2798 = vmatpush1.bf16.msra.mxu0 0
          %2799 = vmatprep.subr.bf16.mxu0 0
          %2800 = vmatpush1.bf16.msra.mxu0 0
          %2801 = vmatprep.subr.bf16.mxu0 0
          %2802 = vmatpush1.bf16.msra.mxu0 0
          %2803 = vmatprep.subr.bf16.mxu0 0
          %2804 = vmatpush1.bf16.msra.mxu0 0
          %2805 = vmatprep.mubr.bf16.mxu0 0
          %2806 = vmatmul.mubr.bf16.gmra.mrb[0].mxu0 %v693
          %v2807 = vpop.f32.mrb[0].mxu0
          %v2808 = vadd.f32 0.0, %v2807
          %v2809 = vpop.f32.mrb[0].mxu0
          %v2810 = vpop.f32.mrb[0].mxu0
          %v2811 = vadd.f32 0.0, %v2810
          %v2812 = vpop.f32.mrb[0].mxu0
          %2813 = vdwg.mxu0
          %v2814 = vadd.f32 %v2766, %v2808
          %v2815 = vadd.f32 %v2767, %v2811
          %v2816 = vadd.f32 %v2401, %v2814
          %v2817 = vadd.f32 %v2402, %v2815
          %v2818 = vmul.f32 %v2814, %v2814
          %v2819 = vmul.f32 %v2815, %v2815
          %v2820 = vadd.f32 %v2405, %v2818
          %v2821 = vadd.f32 %v2406, %v2819
          %v2822 = vpack.c.bf16 %v2815, %v2814
          %s2823 = sadd.s32 %s168, 5
          %s2824 = smul.addr %s2823, 8
          %s2825 = scalar_lea.vmem [#allocation2], %s2824
          %2826 = vst.msk [vmem:[%s2825] sm:$0xff] %vm750, %v2822
          %2827 = vmatprep.subr.bf16.mxu0 0
          %2828 = vmatpush1.bf16.msra.mxu0 %v2308
          %2829 = vmatprep.subr.bf16.mxu0 0
          %2830 = vmatpush1.bf16.msra.mxu0 0
          %2831 = vmatprep.subr.bf16.mxu0 0
          %2832 = vmatpush1.bf16.msra.mxu0 0
          %2833 = vmatprep.subr.bf16.mxu0 0
          %2834 = vmatpush1.bf16.msra.mxu0 0
          %2835 = vmatprep.subr.bf16.mxu0 0
          %2836 = vmatpush1.bf16.msra.mxu0 0
          %2837 = vmatprep.subr.bf16.mxu0 0
          %2838 = vmatpush1.bf16.msra.mxu0 0
          %2839 = vmatprep.subr.bf16.mxu0 0
          %2840 = vmatpush1.bf16.msra.mxu0 0
          %2841 = vmatprep.subr.bf16.mxu0 0
          %2842 = vmatpush1.bf16.msra.mxu0 0
          %2843 = vmatprep.subr.bf16.mxu0 0
          %2844 = vmatpush1.bf16.msra.mxu0 0
          %2845 = vmatprep.subr.bf16.mxu0 0
          %2846 = vmatpush1.bf16.msra.mxu0 0
          %2847 = vmatprep.subr.bf16.mxu0 0
          %2848 = vmatpush1.bf16.msra.mxu0 0
          %2849 = vmatprep.subr.bf16.mxu0 0
          %2850 = vmatpush1.bf16.msra.mxu0 0
          %2851 = vmatprep.subr.bf16.mxu0 0
          %2852 = vmatpush1.bf16.msra.mxu0 0
          %2853 = vmatprep.subr.bf16.mxu0 0
          %2854 = vmatpush1.bf16.msra.mxu0 0
          %2855 = vmatprep.subr.bf16.mxu0 0
          %2856 = vmatpush1.bf16.msra.mxu0 0
          %2857 = vmatprep.subr.bf16.mxu0 0
          %2858 = vmatpush1.bf16.msra.mxu0 0
          %2859 = vmatprep.mubr.bf16.mxu0 0
          %2860 = vmatmul.mubr.bf16.gmra.mrb[0].mxu0 %v238
          %v2861 = vpop.f32.mrb[0].mxu0
          %v2862 = vadd.f32 0.0, %v2861
          %v2863 = vpop.f32.mrb[0].mxu0
          %v2864 = vpop.f32.mrb[0].mxu0
          %v2865 = vadd.f32 0.0, %v2864
          %v2866 = vpop.f32.mrb[0].mxu0
          %2867 = vdwg.mxu0
          %2868 = vmatprep.subr.bf16.mxu0 0
          %2869 = vmatpush1.bf16.msra.mxu0 %v2252
          %2870 = vmatprep.subr.bf16.mxu0 0
          %2871 = vmatpush1.bf16.msra.mxu0 0
          %2872 = vmatprep.subr.bf16.mxu0 0
          %2873 = vmatpush1.bf16.msra.mxu0 0
          %2874 = vmatprep.subr.bf16.mxu0 0
          %2875 = vmatpush1.bf16.msra.mxu0 0
          %2876 = vmatprep.subr.bf16.mxu0 0
          %2877 = vmatpush1.bf16.msra.mxu0 0
          %2878 = vmatprep.subr.bf16.mxu0 0
          %2879 = vmatpush1.bf16.msra.mxu0 0
          %2880 = vmatprep.subr.bf16.mxu0 0
          %2881 = vmatpush1.bf16.msra.mxu0 0
          %2882 = vmatprep.subr.bf16.mxu0 0
          %2883 = vmatpush1.bf16.msra.mxu0 0
          %2884 = vmatprep.subr.bf16.mxu0 0
          %2885 = vmatpush1.bf16.msra.mxu0 0
          %2886 = vmatprep.subr.bf16.mxu0 0
          %2887 = vmatpush1.bf16.msra.mxu0 0
          %2888 = vmatprep.subr.bf16.mxu0 0
          %2889 = vmatpush1.bf16.msra.mxu0 0
          %2890 = vmatprep.subr.bf16.mxu0 0
          %2891 = vmatpush1.bf16.msra.mxu0 0
          %2892 = vmatprep.subr.bf16.mxu0 0
          %2893 = vmatpush1.bf16.msra.mxu0 0
          %2894 = vmatprep.subr.bf16.mxu0 0
          %2895 = vmatpush1.bf16.msra.mxu0 0
          %2896 = vmatprep.subr.bf16.mxu0 0
          %2897 = vmatpush1.bf16.msra.mxu0 0
          %2898 = vmatprep.subr.bf16.mxu0 0
          %2899 = vmatpush1.bf16.msra.mxu0 0
          %2900 = vmatprep.mubr.bf16.mxu0 0
          %2901 = vmatmul.mubr.bf16.gmra.mrb[0].mxu0 %v291
          %v2902 = vpop.f32.mrb[0].mxu0
          %v2903 = vadd.f32 %v2862, %v2902
          %v2904 = vpop.f32.mrb[0].mxu0
          %v2905 = vpop.f32.mrb[0].mxu0
          %v2906 = vadd.f32 %v2865, %v2905
          %v2907 = vpop.f32.mrb[0].mxu0
          %2908 = vdwg.mxu0
          %2909 = vmatprep.subr.bf16.mxu0 0
          %2910 = vmatpush1.bf16.msra.mxu0 %v2356
          %2911 = vmatprep.subr.bf16.mxu0 0
          %2912 = vmatpush1.bf16.msra.mxu0 0
          %2913 = vmatprep.subr.bf16.mxu0 0
          %2914 = vmatpush1.bf16.msra.mxu0 0
          %2915 = vmatprep.subr.bf16.mxu0 0
          %2916 = vmatpush1.bf16.msra.mxu0 0
          %2917 = vmatprep.subr.bf16.mxu0 0
          %2918 = vmatpush1.bf16.msra.mxu0 0
          %2919 = vmatprep.subr.bf16.mxu0 0
          %2920 = vmatpush1.bf16.msra.mxu0 0
          %2921 = vmatprep.subr.bf16.mxu0 0
          %2922 = vmatpush1.bf16.msra.mxu0 0
          %2923 = vmatprep.subr.bf16.mxu0 0
          %2924 = vmatpush1.bf16.msra.mxu0 0
          %2925 = vmatprep.subr.bf16.mxu0 0
          %2926 = vmatpush1.bf16.msra.mxu0 0
          %2927 = vmatprep.subr.bf16.mxu0 0
          %2928 = vmatpush1.bf16.msra.mxu0 0
          %2929 = vmatprep.subr.bf16.mxu0 0
          %2930 = vmatpush1.bf16.msra.mxu0 0
          %2931 = vmatprep.subr.bf16.mxu0 0
          %2932 = vmatpush1.bf16.msra.mxu0 0
          %2933 = vmatprep.subr.bf16.mxu0 0
          %2934 = vmatpush1.bf16.msra.mxu0 0
          %2935 = vmatprep.subr.bf16.mxu0 0
          %2936 = vmatpush1.bf16.msra.mxu0 0
          %2937 = vmatprep.subr.bf16.mxu0 0
          %2938 = vmatpush1.bf16.msra.mxu0 0
          %2939 = vmatprep.subr.bf16.mxu0 0
          %2940 = vmatpush1.bf16.msra.mxu0 0
          %2941 = vmatprep.mubr.bf16.mxu0 0
          %2942 = vmatmul.mubr.bf16.gmra.mrb[0].mxu0 %v345
          %v2943 = vpop.f32.mrb[0].mxu0
          %v2944 = vadd.f32 0.0, %v2943
          %v2945 = vpop.f32.mrb[0].mxu0
          %v2946 = vpop.f32.mrb[0].mxu0
          %v2947 = vadd.f32 0.0, %v2946
          %v2948 = vpop.f32.mrb[0].mxu0
          %2949 = vdwg.mxu0
          %v2950 = vadd.f32 %v2903, %v2944
          %v2951 = vadd.f32 %v2906, %v2947
          %2952 = vmatprep.subr.bf16.mxu0 0
          %2953 = vmatpush1.bf16.msra.mxu0 %v2667
          %2954 = vmatprep.subr.bf16.mxu0 0
          %2955 = vmatpush1.bf16.msra.mxu0 0
          %2956 = vmatprep.subr.bf16.mxu0 0
          %2957 = vmatpush1.bf16.msra.mxu0 0
          %2958 = vmatprep.subr.bf16.mxu0 0
          %2959 = vmatpush1.bf16.msra.mxu0 0
          %2960 = vmatprep.subr.bf16.mxu0 0
          %2961 = vmatpush1.bf16.msra.mxu0 0
          %2962 = vmatprep.subr.bf16.mxu0 0
          %2963 = vmatpush1.bf16.msra.mxu0 0
          %2964 = vmatprep.subr.bf16.mxu0 0
          %2965 = vmatpush1.bf16.msra.mxu0 0
          %2966 = vmatprep.subr.bf16.mxu0 0
          %2967 = vmatpush1.bf16.msra.mxu0 0
          %2968 = vmatprep.subr.bf16.mxu0 0
          %2969 = vmatpush1.bf16.msra.mxu0 0
          %2970 = vmatprep.subr.bf16.mxu0 0
          %2971 = vmatpush1.bf16.msra.mxu0 0
          %2972 = vmatprep.subr.bf16.mxu0 0
          %2973 = vmatpush1.bf16.msra.mxu0 0
          %2974 = vmatprep.subr.bf16.mxu0 0
          %2975 = vmatpush1.bf16.msra.mxu0 0
          %2976 = vmatprep.subr.bf16.mxu0 0
          %2977 = vmatpush1.bf16.msra.mxu0 0
          %2978 = vmatprep.subr.bf16.mxu0 0
          %2979 = vmatpush1.bf16.msra.mxu0 0
          %2980 = vmatprep.subr.bf16.mxu0 0
          %2981 = vmatpush1.bf16.msra.mxu0 0
          %2982 = vmatprep.subr.bf16.mxu0 0
          %2983 = vmatpush1.bf16.msra.mxu0 0
          %2984 = vmatprep.mubr.bf16.mxu0 0
          %2985 = vmatmul.mubr.bf16.gmra.mrb[0].mxu0 %v399
          %v2986 = vpop.f32.mrb[0].mxu0
          %v2987 = vadd.f32 0.0, %v2986
          %v2988 = vpop.f32.mrb[0].mxu0
          %v2989 = vpop.f32.mrb[0].mxu0
          %v2990 = vadd.f32 0.0, %v2989
          %v2991 = vpop.f32.mrb[0].mxu0
          %2992 = vdwg.mxu0
          %v2993 = vadd.f32 %v2950, %v2987
          %v2994 = vadd.f32 %v2951, %v2990
          %2995 = vmatprep.subr.bf16.mxu0 0
          %2996 = vmatpush1.bf16.msra.mxu0 %v2723
          %2997 = vmatprep.subr.bf16.mxu0 0
          %2998 = vmatpush1.bf16.msra.mxu0 0
          %2999 = vmatprep.subr.bf16.mxu0 0
          %3000 = vmatpush1.bf16.msra.mxu0 0
          %3001 = vmatprep.subr.bf16.mxu0 0
          %3002 = vmatpush1.bf16.msra.mxu0 0
          %3003 = vmatprep.subr.bf16.mxu0 0
          %3004 = vmatpush1.bf16.msra.mxu0 0
          %3005 = vmatprep.subr.bf16.mxu0 0
          %3006 = vmatpush1.bf16.msra.mxu0 0
          %3007 = vmatprep.subr.bf16.mxu0 0
          %3008 = vmatpush1.bf16.msra.mxu0 0
          %3009 = vmatprep.subr.bf16.mxu0 0
          %3010 = vmatpush1.bf16.msra.mxu0 0
          %3011 = vmatprep.subr.bf16.mxu0 0
          %3012 = vmatpush1.bf16.msra.mxu0 0
          %3013 = vmatprep.subr.bf16.mxu0 0
          %3014 = vmatpush1.bf16.msra.mxu0 0
          %3015 = vmatprep.subr.bf16.mxu0 0
          %3016 = vmatpush1.bf16.msra.mxu0 0
          %3017 = vmatprep.subr.bf16.mxu0 0
          %3018 = vmatpush1.bf16.msra.mxu0 0
          %3019 = vmatprep.subr.bf16.mxu0 0
          %3020 = vmatpush1.bf16.msra.mxu0 0
          %3021 = vmatprep.subr.bf16.mxu0 0
          %3022 = vmatpush1.bf16.msra.mxu0 0
          %3023 = vmatprep.subr.bf16.mxu0 0
          %3024 = vmatpush1.bf16.msra.mxu0 0
          %3025 = vmatprep.subr.bf16.mxu0 0
          %3026 = vmatpush1.bf16.msra.mxu0 0
          %3027 = vmatprep.mubr.bf16.mxu0 0
          %3028 = vmatmul.mubr.bf16.gmra.mrb[0].mxu0 %v463
          %v3029 = vpop.f32.mrb[0].mxu0
          %v3030 = vadd.f32 0.0, %v3029
          %v3031 = vpop.f32.mrb[0].mxu0
          %v3032 = vpop.f32.mrb[0].mxu0
          %v3033 = vadd.f32 0.0, %v3032
          %v3034 = vpop.f32.mrb[0].mxu0
          %3035 = vdwg.mxu0
          %v3036 = vadd.f32 %v2993, %v3030
          %v3037 = vadd.f32 %v2994, %v3033
          %3038 = vmatprep.subr.bf16.mxu0 0
          %3039 = vmatpush1.bf16.msra.mxu0 %v2771
          %3040 = vmatprep.subr.bf16.mxu0 0
          %3041 = vmatpush1.bf16.msra.mxu0 0
          %3042 = vmatprep.subr.bf16.mxu0 0
          %3043 = vmatpush1.bf16.msra.mxu0 0
          %3044 = vmatprep.subr.bf16.mxu0 0
          %3045 = vmatpush1.bf16.msra.mxu0 0
          %3046 = vmatprep.subr.bf16.mxu0 0
          %3047 = vmatpush1.bf16.msra.mxu0 0
          %3048 = vmatprep.subr.bf16.mxu0 0
          %3049 = vmatpush1.bf16.msra.mxu0 0
          %3050 = vmatprep.subr.bf16.mxu0 0
          %3051 = vmatpush1.bf16.msra.mxu0 0
          %3052 = vmatprep.subr.bf16.mxu0 0
          %3053 = vmatpush1.bf16.msra.mxu0 0
          %3054 = vmatprep.subr.bf16.mxu0 0
          %3055 = vmatpush1.bf16.msra.mxu0 0
          %3056 = vmatprep.subr.bf16.mxu0 0
          %3057 = vmatpush1.bf16.msra.mxu0 0
          %3058 = vmatprep.subr.bf16.mxu0 0
          %3059 = vmatpush1.bf16.msra.mxu0 0
          %3060 = vmatprep.subr.bf16.mxu0 0
          %3061 = vmatpush1.bf16.msra.mxu0 0
          %3062 = vmatprep.subr.bf16.mxu0 0
          %3063 = vmatpush1.bf16.msra.mxu0 0
          %3064 = vmatprep.subr.bf16.mxu0 0
          %3065 = vmatpush1.bf16.msra.mxu0 0
          %3066 = vmatprep.subr.bf16.mxu0 0
          %3067 = vmatpush1.bf16.msra.mxu0 0
          %3068 = vmatprep.subr.bf16.mxu0 0
          %3069 = vmatpush1.bf16.msra.mxu0 0
          %3070 = vmatprep.mubr.bf16.mxu0 0
          %3071 = vmatmul.mubr.bf16.gmra.mrb[0].mxu0 %v519
          %v3072 = vpop.f32.mrb[0].mxu0
          %v3073 = vadd.f32 0.0, %v3072
          %v3074 = vpop.f32.mrb[0].mxu0
          %v3075 = vpop.f32.mrb[0].mxu0
          %v3076 = vadd.f32 0.0, %v3075
          %v3077 = vpop.f32.mrb[0].mxu0
          %3078 = vdwg.mxu0
          %v3079 = vadd.f32 %v3036, %v3073
          %v3080 = vadd.f32 %v3037, %v3076
          %v3082 = vsel %vm240, %v219, 0
          %3084 = vmatprep.subr.bf16.mxu0 0
          %3085 = vmatpush1.bf16.msra.mxu0 %v3082
          %3086 = vmatprep.subr.bf16.mxu0 0
          %3087 = vmatpush1.bf16.msra.mxu0 0
          %3088 = vmatprep.subr.bf16.mxu0 0
          %3089 = vmatpush1.bf16.msra.mxu0 0
          %3090 = vmatprep.subr.bf16.mxu0 0
          %3091 = vmatpush1.bf16.msra.mxu0 0
          %3092 = vmatprep.subr.bf16.mxu0 0
          %3093 = vmatpush1.bf16.msra.mxu0 0
          %3094 = vmatprep.subr.bf16.mxu0 0
          %3095 = vmatpush1.bf16.msra.mxu0 0
          %3096 = vmatprep.subr.bf16.mxu0 0
          %3097 = vmatpush1.bf16.msra.mxu0 0
          %3098 = vmatprep.subr.bf16.mxu0 0
          %3099 = vmatpush1.bf16.msra.mxu0 0
          %3100 = vmatprep.subr.bf16.mxu0 0
          %3101 = vmatpush1.bf16.msra.mxu0 0
          %3102 = vmatprep.subr.bf16.mxu0 0
          %3103 = vmatpush1.bf16.msra.mxu0 0
          %3104 = vmatprep.subr.bf16.mxu0 0
          %3105 = vmatpush1.bf16.msra.mxu0 0
          %3106 = vmatprep.subr.bf16.mxu0 0
          %3107 = vmatpush1.bf16.msra.mxu0 0
          %3108 = vmatprep.subr.bf16.mxu0 0
          %3109 = vmatpush1.bf16.msra.mxu0 0
          %3110 = vmatprep.subr.bf16.mxu0 0
          %3111 = vmatpush1.bf16.msra.mxu0 0
          %3112 = vmatprep.subr.bf16.mxu0 0
          %3113 = vmatpush1.bf16.msra.mxu0 0
          %3114 = vmatprep.subr.bf16.mxu0 0
          %3115 = vmatpush1.bf16.msra.mxu0 0
          %3116 = vmatprep.mubr.bf16.mxu0 0
          %3117 = vmatmul.mubr.bf16.gmra.mrb[0].mxu0 %v573
          %v3118 = vpop.f32.mrb[0].mxu0
          %v3119 = vadd.f32 0.0, %v3118
          %v3120 = vpop.f32.mrb[0].mxu0
          %v3121 = vpop.f32.mrb[0].mxu0
          %v3122 = vadd.f32 0.0, %v3121
          %v3123 = vpop.f32.mrb[0].mxu0
          %3124 = vdwg.mxu0
          %v3125 = vadd.f32 %v3079, %v3119
          %v3126 = vadd.f32 %v3080, %v3122
          %v3129 = vunpack.c.l.s4 1983009808
          %v3130 = vunpack.c.0.s8 %v3129
          %v3131 = vlaneseq
          %v3132 = vshrl.u32 %v3131, 7
          %v3133 = vsub.s32 %v3130, %v3132
          %v3134 = vrot.slane %v219, %v3133
          %3135 = vrot.lane.b32.xlu0 %v3134, 127
          %v3136 = vpop.permute.xlu0 %3135
          %v3138 = vsel %vm240, %v3136, 0
          %3140 = vmatprep.subr.bf16.mxu0 0
          %3141 = vmatpush1.bf16.msra.mxu0 %v3138
          %3142 = vmatprep.subr.bf16.mxu0 0
          %3143 = vmatpush1.bf16.msra.mxu0 0
          %3144 = vmatprep.subr.bf16.mxu0 0
          %3145 = vmatpush1.bf16.msra.mxu0 0
          %3146 = vmatprep.subr.bf16.mxu0 0
          %3147 = vmatpush1.bf16.msra.mxu0 0
          %3148 = vmatprep.subr.bf16.mxu0 0
          %3149 = vmatpush1.bf16.msra.mxu0 0
          %3150 = vmatprep.subr.bf16.mxu0 0
          %3151 = vmatpush1.bf16.msra.mxu0 0
          %3152 = vmatprep.subr.bf16.mxu0 0
          %3153 = vmatpush1.bf16.msra.mxu0 0
          %3154 = vmatprep.subr.bf16.mxu0 0
          %3155 = vmatpush1.bf16.msra.mxu0 0
          %3156 = vmatprep.subr.bf16.mxu0 0
          %3157 = vmatpush1.bf16.msra.mxu0 0
          %3158 = vmatprep.subr.bf16.mxu0 0
          %3159 = vmatpush1.bf16.msra.mxu0 0
          %3160 = vmatprep.subr.bf16.mxu0 0
          %3161 = vmatpush1.bf16.msra.mxu0 0
          %3162 = vmatprep.subr.bf16.mxu0 0
          %3163 = vmatpush1.bf16.msra.mxu0 0
          %3164 = vmatprep.subr.bf16.mxu0 0
          %3165 = vmatpush1.bf16.msra.mxu0 0
          %3166 = vmatprep.subr.bf16.mxu0 0
          %3167 = vmatpush1.bf16.msra.mxu0 0
          %3168 = vmatprep.subr.bf16.mxu0 0
          %3169 = vmatpush1.bf16.msra.mxu0 0
          %3170 = vmatprep.subr.bf16.mxu0 0
          %3171 = vmatpush1.bf16.msra.mxu0 0
          %3172 = vmatprep.mubr.bf16.mxu0 0
          %3173 = vmatmul.mubr.bf16.gmra.mrb[0].mxu0 %v637
          %v3174 = vpop.f32.mrb[0].mxu0
          %v3175 = vadd.f32 0.0, %v3174
          %v3176 = vpop.f32.mrb[0].mxu0
          %v3177 = vpop.f32.mrb[0].mxu0
          %v3178 = vadd.f32 0.0, %v3177
          %v3179 = vpop.f32.mrb[0].mxu0
          %3180 = vdwg.mxu0
          %v3181 = vadd.f32 %v3125, %v3175
          %v3182 = vadd.f32 %v3126, %v3178
          %3183 = vrot.lane.b32.xlu0 %v3134, 126
          %v3184 = vpop.permute.xlu0 %3183
          %v3186 = vsel %vm240, %v3184, 0
          %3188 = vmatprep.subr.bf16.mxu0 0
          %3189 = vmatpush1.bf16.msra.mxu0 %v3186
          %3190 = vmatprep.subr.bf16.mxu0 0
          %3191 = vmatpush1.bf16.msra.mxu0 0
          %3192 = vmatprep.subr.bf16.mxu0 0
          %3193 = vmatpush1.bf16.msra.mxu0 0
          %3194 = vmatprep.subr.bf16.mxu0 0
          %3195 = vmatpush1.bf16.msra.mxu0 0
          %3196 = vmatprep.subr.bf16.mxu0 0
          %3197 = vmatpush1.bf16.msra.mxu0 0
          %3198 = vmatprep.subr.bf16.mxu0 0
          %3199 = vmatpush1.bf16.msra.mxu0 0
          %3200 = vmatprep.subr.bf16.mxu0 0
          %3201 = vmatpush1.bf16.msra.mxu0 0
          %3202 = vmatprep.subr.bf16.mxu0 0
          %3203 = vmatpush1.bf16.msra.mxu0 0
          %3204 = vmatprep.subr.bf16.mxu0 0
          %3205 = vmatpush1.bf16.msra.mxu0 0
          %3206 = vmatprep.subr.bf16.mxu0 0
          %3207 = vmatpush1.bf16.msra.mxu0 0
          %3208 = vmatprep.subr.bf16.mxu0 0
          %3209 = vmatpush1.bf16.msra.mxu0 0
          %3210 = vmatprep.subr.bf16.mxu0 0
          %3211 = vmatpush1.bf16.msra.mxu0 0
          %3212 = vmatprep.subr.bf16.mxu0 0
          %3213 = vmatpush1.bf16.msra.mxu0 0
          %3214 = vmatprep.subr.bf16.mxu0 0
          %3215 = vmatpush1.bf16.msra.mxu0 0
          %3216 = vmatprep.subr.bf16.mxu0 0
          %3217 = vmatpush1.bf16.msra.mxu0 0
          %3218 = vmatprep.subr.bf16.mxu0 0
          %3219 = vmatpush1.bf16.msra.mxu0 0
          %3220 = vmatprep.mubr.bf16.mxu0 0
          %3221 = vmatmul.mubr.bf16.gmra.mrb[0].mxu0 %v693
          %v3222 = vpop.f32.mrb[0].mxu0
          %v3223 = vadd.f32 0.0, %v3222
          %v3224 = vpop.f32.mrb[0].mxu0
          %v3225 = vpop.f32.mrb[0].mxu0
          %v3226 = vadd.f32 0.0, %v3225
          %v3227 = vpop.f32.mrb[0].mxu0
          %3228 = vdwg.mxu0
          %v3229 = vadd.f32 %v3181, %v3223
          %v3230 = vadd.f32 %v3182, %v3226
          %v3231 = vadd.f32 %v2816, %v3229
          %v3232 = vadd.f32 %v2817, %v3230
          %v3233 = vmul.f32 %v3229, %v3229
          %v3234 = vmul.f32 %v3230, %v3230
          %v3235 = vadd.f32 %v2820, %v3233
          %v3236 = vadd.f32 %v2821, %v3234
          %v3237 = vpack.c.bf16 %v3230, %v3229
          %s3238 = sadd.s32 %s168, 6
          %s3239 = smul.addr %s3238, 8
          %s3240 = scalar_lea.vmem [#allocation2], %s3239
          %3241 = vst.msk [vmem:[%s3240] sm:$0xff] %vm750, %v3237
          %3242 = vmatprep.subr.bf16.mxu0 0
          %3243 = vmatpush1.bf16.msra.mxu0 %v2723
          %3244 = vmatprep.subr.bf16.mxu0 0
          %3245 = vmatpush1.bf16.msra.mxu0 0
          %3246 = vmatprep.subr.bf16.mxu0 0
          %3247 = vmatpush1.bf16.msra.mxu0 0
          %3248 = vmatprep.subr.bf16.mxu0 0
          %3249 = vmatpush1.bf16.msra.mxu0 0
          %3250 = vmatprep.subr.bf16.mxu0 0
          %3251 = vmatpush1.bf16.msra.mxu0 0
          %3252 = vmatprep.subr.bf16.mxu0 0
          %3253 = vmatpush1.bf16.msra.mxu0 0
          %3254 = vmatprep.subr.bf16.mxu0 0
          %3255 = vmatpush1.bf16.msra.mxu0 0
          %3256 = vmatprep.subr.bf16.mxu0 0
          %3257 = vmatpush1.bf16.msra.mxu0 0
          %3258 = vmatprep.subr.bf16.mxu0 0
          %3259 = vmatpush1.bf16.msra.mxu0 0
          %3260 = vmatprep.subr.bf16.mxu0 0
          %3261 = vmatpush1.bf16.msra.mxu0 0
          %3262 = vmatprep.subr.bf16.mxu0 0
          %3263 = vmatpush1.bf16.msra.mxu0 0
          %3264 = vmatprep.subr.bf16.mxu0 0
          %3265 = vmatpush1.bf16.msra.mxu0 0
          %3266 = vmatprep.subr.bf16.mxu0 0
          %3267 = vmatpush1.bf16.msra.mxu0 0
          %3268 = vmatprep.subr.bf16.mxu0 0
          %3269 = vmatpush1.bf16.msra.mxu0 0
          %3270 = vmatprep.subr.bf16.mxu0 0
          %3271 = vmatpush1.bf16.msra.mxu0 0
          %3272 = vmatprep.subr.bf16.mxu0 0
          %3273 = vmatpush1.bf16.msra.mxu0 0
          %3274 = vmatprep.mubr.bf16.mxu0 0
          %3275 = vmatmul.mubr.bf16.gmra.mrb[0].mxu0 %v238
          %v3276 = vpop.f32.mrb[0].mxu0
          %v3277 = vadd.f32 0.0, %v3276
          %v3278 = vpop.f32.mrb[0].mxu0
          %v3279 = vpop.f32.mrb[0].mxu0
          %v3280 = vadd.f32 0.0, %v3279
          %v3281 = vpop.f32.mrb[0].mxu0
          %3282 = vdwg.mxu0
          %3283 = vmatprep.subr.bf16.mxu0 0
          %3284 = vmatpush1.bf16.msra.mxu0 %v2667
          %3285 = vmatprep.subr.bf16.mxu0 0
          %3286 = vmatpush1.bf16.msra.mxu0 0
          %3287 = vmatprep.subr.bf16.mxu0 0
          %3288 = vmatpush1.bf16.msra.mxu0 0
          %3289 = vmatprep.subr.bf16.mxu0 0
          %3290 = vmatpush1.bf16.msra.mxu0 0
          %3291 = vmatprep.subr.bf16.mxu0 0
          %3292 = vmatpush1.bf16.msra.mxu0 0
          %3293 = vmatprep.subr.bf16.mxu0 0
          %3294 = vmatpush1.bf16.msra.mxu0 0
          %3295 = vmatprep.subr.bf16.mxu0 0
          %3296 = vmatpush1.bf16.msra.mxu0 0
          %3297 = vmatprep.subr.bf16.mxu0 0
          %3298 = vmatpush1.bf16.msra.mxu0 0
          %3299 = vmatprep.subr.bf16.mxu0 0
          %3300 = vmatpush1.bf16.msra.mxu0 0
          %3301 = vmatprep.subr.bf16.mxu0 0
          %3302 = vmatpush1.bf16.msra.mxu0 0
          %3303 = vmatprep.subr.bf16.mxu0 0
          %3304 = vmatpush1.bf16.msra.mxu0 0
          %3305 = vmatprep.subr.bf16.mxu0 0
          %3306 = vmatpush1.bf16.msra.mxu0 0
          %3307 = vmatprep.subr.bf16.mxu0 0
          %3308 = vmatpush1.bf16.msra.mxu0 0
          %3309 = vmatprep.subr.bf16.mxu0 0
          %3310 = vmatpush1.bf16.msra.mxu0 0
          %3311 = vmatprep.subr.bf16.mxu0 0
          %3312 = vmatpush1.bf16.msra.mxu0 0
          %3313 = vmatprep.subr.bf16.mxu0 0
          %3314 = vmatpush1.bf16.msra.mxu0 0
          %3315 = vmatprep.mubr.bf16.mxu0 0
          %3316 = vmatmul.mubr.bf16.gmra.mrb[0].mxu0 %v291
          %v3317 = vpop.f32.mrb[0].mxu0
          %v3318 = vadd.f32 %v3277, %v3317
          %v3319 = vpop.f32.mrb[0].mxu0
          %v3320 = vpop.f32.mrb[0].mxu0
          %v3321 = vadd.f32 %v3280, %v3320
          %v3322 = vpop.f32.mrb[0].mxu0
          %3323 = vdwg.mxu0
          %3324 = vmatprep.subr.bf16.mxu0 0
          %3325 = vmatpush1.bf16.msra.mxu0 %v2771
          %3326 = vmatprep.subr.bf16.mxu0 0
          %3327 = vmatpush1.bf16.msra.mxu0 0
          %3328 = vmatprep.subr.bf16.mxu0 0
          %3329 = vmatpush1.bf16.msra.mxu0 0
          %3330 = vmatprep.subr.bf16.mxu0 0
          %3331 = vmatpush1.bf16.msra.mxu0 0
          %3332 = vmatprep.subr.bf16.mxu0 0
          %3333 = vmatpush1.bf16.msra.mxu0 0
          %3334 = vmatprep.subr.bf16.mxu0 0
          %3335 = vmatpush1.bf16.msra.mxu0 0
          %3336 = vmatprep.subr.bf16.mxu0 0
          %3337 = vmatpush1.bf16.msra.mxu0 0
          %3338 = vmatprep.subr.bf16.mxu0 0
          %3339 = vmatpush1.bf16.msra.mxu0 0
          %3340 = vmatprep.subr.bf16.mxu0 0
          %3341 = vmatpush1.bf16.msra.mxu0 0
          %3342 = vmatprep.subr.bf16.mxu0 0
          %3343 = vmatpush1.bf16.msra.mxu0 0
          %3344 = vmatprep.subr.bf16.mxu0 0
          %3345 = vmatpush1.bf16.msra.mxu0 0
          %3346 = vmatprep.subr.bf16.mxu0 0
          %3347 = vmatpush1.bf16.msra.mxu0 0
          %3348 = vmatprep.subr.bf16.mxu0 0
          %3349 = vmatpush1.bf16.msra.mxu0 0
          %3350 = vmatprep.subr.bf16.mxu0 0
          %3351 = vmatpush1.bf16.msra.mxu0 0
          %3352 = vmatprep.subr.bf16.mxu0 0
          %3353 = vmatpush1.bf16.msra.mxu0 0
          %3354 = vmatprep.subr.bf16.mxu0 0
          %3355 = vmatpush1.bf16.msra.mxu0 0
          %3356 = vmatprep.mubr.bf16.mxu0 0
          %3357 = vmatmul.mubr.bf16.gmra.mrb[0].mxu0 %v345
          %v3358 = vpop.f32.mrb[0].mxu0
          %v3359 = vadd.f32 0.0, %v3358
          %v3360 = vpop.f32.mrb[0].mxu0
          %v3361 = vpop.f32.mrb[0].mxu0
          %v3362 = vadd.f32 0.0, %v3361
          %v3363 = vpop.f32.mrb[0].mxu0
          %3364 = vdwg.mxu0
          %v3365 = vadd.f32 %v3318, %v3359
          %v3366 = vadd.f32 %v3321, %v3362
          %3367 = vmatprep.subr.bf16.mxu0 0
          %3368 = vmatpush1.bf16.msra.mxu0 %v3082
          %3369 = vmatprep.subr.bf16.mxu0 0
          %3370 = vmatpush1.bf16.msra.mxu0 0
          %3371 = vmatprep.subr.bf16.mxu0 0
          %3372 = vmatpush1.bf16.msra.mxu0 0
          %3373 = vmatprep.subr.bf16.mxu0 0
          %3374 = vmatpush1.bf16.msra.mxu0 0
          %3375 = vmatprep.subr.bf16.mxu0 0
          %3376 = vmatpush1.bf16.msra.mxu0 0
          %3377 = vmatprep.subr.bf16.mxu0 0
          %3378 = vmatpush1.bf16.msra.mxu0 0
          %3379 = vmatprep.subr.bf16.mxu0 0
          %3380 = vmatpush1.bf16.msra.mxu0 0
          %3381 = vmatprep.subr.bf16.mxu0 0
          %3382 = vmatpush1.bf16.msra.mxu0 0
          %3383 = vmatprep.subr.bf16.mxu0 0
          %3384 = vmatpush1.bf16.msra.mxu0 0
          %3385 = vmatprep.subr.bf16.mxu0 0
          %3386 = vmatpush1.bf16.msra.mxu0 0
          %3387 = vmatprep.subr.bf16.mxu0 0
          %3388 = vmatpush1.bf16.msra.mxu0 0
          %3389 = vmatprep.subr.bf16.mxu0 0
          %3390 = vmatpush1.bf16.msra.mxu0 0
          %3391 = vmatprep.subr.bf16.mxu0 0
          %3392 = vmatpush1.bf16.msra.mxu0 0
          %3393 = vmatprep.subr.bf16.mxu0 0
          %3394 = vmatpush1.bf16.msra.mxu0 0
          %3395 = vmatprep.subr.bf16.mxu0 0
          %3396 = vmatpush1.bf16.msra.mxu0 0
          %3397 = vmatprep.subr.bf16.mxu0 0
          %3398 = vmatpush1.bf16.msra.mxu0 0
          %3399 = vmatprep.mubr.bf16.mxu0 0
          %3400 = vmatmul.mubr.bf16.gmra.mrb[0].mxu0 %v399
          %v3401 = vpop.f32.mrb[0].mxu0
          %v3402 = vadd.f32 0.0, %v3401
          %v3403 = vpop.f32.mrb[0].mxu0
          %v3404 = vpop.f32.mrb[0].mxu0
          %v3405 = vadd.f32 0.0, %v3404
          %v3406 = vpop.f32.mrb[0].mxu0
          %3407 = vdwg.mxu0
          %v3408 = vadd.f32 %v3365, %v3402
          %v3409 = vadd.f32 %v3366, %v3405
          %3410 = vmatprep.subr.bf16.mxu0 0
          %3411 = vmatpush1.bf16.msra.mxu0 %v3138
          %3412 = vmatprep.subr.bf16.mxu0 0
          %3413 = vmatpush1.bf16.msra.mxu0 0
          %3414 = vmatprep.subr.bf16.mxu0 0
          %3415 = vmatpush1.bf16.msra.mxu0 0
          %3416 = vmatprep.subr.bf16.mxu0 0
          %3417 = vmatpush1.bf16.msra.mxu0 0
          %3418 = vmatprep.subr.bf16.mxu0 0
          %3419 = vmatpush1.bf16.msra.mxu0 0
          %3420 = vmatprep.subr.bf16.mxu0 0
          %3421 = vmatpush1.bf16.msra.mxu0 0
          %3422 = vmatprep.subr.bf16.mxu0 0
          %3423 = vmatpush1.bf16.msra.mxu0 0
          %3424 = vmatprep.subr.bf16.mxu0 0
          %3425 = vmatpush1.bf16.msra.mxu0 0
          %3426 = vmatprep.subr.bf16.mxu0 0
          %3427 = vmatpush1.bf16.msra.mxu0 0
          %3428 = vmatprep.subr.bf16.mxu0 0
          %3429 = vmatpush1.bf16.msra.mxu0 0
          %3430 = vmatprep.subr.bf16.mxu0 0
          %3431 = vmatpush1.bf16.msra.mxu0 0
          %3432 = vmatprep.subr.bf16.mxu0 0
          %3433 = vmatpush1.bf16.msra.mxu0 0
          %3434 = vmatprep.subr.bf16.mxu0 0
          %3435 = vmatpush1.bf16.msra.mxu0 0
          %3436 = vmatprep.subr.bf16.mxu0 0
          %3437 = vmatpush1.bf16.msra.mxu0 0
          %3438 = vmatprep.subr.bf16.mxu0 0
          %3439 = vmatpush1.bf16.msra.mxu0 0
          %3440 = vmatprep.subr.bf16.mxu0 0
          %3441 = vmatpush1.bf16.msra.mxu0 0
          %3442 = vmatprep.mubr.bf16.mxu0 0
          %3443 = vmatmul.mubr.bf16.gmra.mrb[0].mxu0 %v463
          %v3444 = vpop.f32.mrb[0].mxu0
          %v3445 = vadd.f32 0.0, %v3444
          %v3446 = vpop.f32.mrb[0].mxu0
          %v3447 = vpop.f32.mrb[0].mxu0
          %v3448 = vadd.f32 0.0, %v3447
          %v3449 = vpop.f32.mrb[0].mxu0
          %3450 = vdwg.mxu0
          %v3451 = vadd.f32 %v3408, %v3445
          %v3452 = vadd.f32 %v3409, %v3448
          %3453 = vmatprep.subr.bf16.mxu0 0
          %3454 = vmatpush1.bf16.msra.mxu0 %v3186
          %3455 = vmatprep.subr.bf16.mxu0 0
          %3456 = vmatpush1.bf16.msra.mxu0 0
          %3457 = vmatprep.subr.bf16.mxu0 0
          %3458 = vmatpush1.bf16.msra.mxu0 0
          %3459 = vmatprep.subr.bf16.mxu0 0
          %3460 = vmatpush1.bf16.msra.mxu0 0
          %3461 = vmatprep.subr.bf16.mxu0 0
          %3462 = vmatpush1.bf16.msra.mxu0 0
          %3463 = vmatprep.subr.bf16.mxu0 0
          %3464 = vmatpush1.bf16.msra.mxu0 0
          %3465 = vmatprep.subr.bf16.mxu0 0
          %3466 = vmatpush1.bf16.msra.mxu0 0
          %3467 = vmatprep.subr.bf16.mxu0 0
          %3468 = vmatpush1.bf16.msra.mxu0 0
          %3469 = vmatprep.subr.bf16.mxu0 0
          %3470 = vmatpush1.bf16.msra.mxu0 0
          %3471 = vmatprep.subr.bf16.mxu0 0
          %3472 = vmatpush1.bf16.msra.mxu0 0
          %3473 = vmatprep.subr.bf16.mxu0 0
          %3474 = vmatpush1.bf16.msra.mxu0 0
          %3475 = vmatprep.subr.bf16.mxu0 0
          %3476 = vmatpush1.bf16.msra.mxu0 0
          %3477 = vmatprep.subr.bf16.mxu0 0
          %3478 = vmatpush1.bf16.msra.mxu0 0
          %3479 = vmatprep.subr.bf16.mxu0 0
          %3480 = vmatpush1.bf16.msra.mxu0 0
          %3481 = vmatprep.subr.bf16.mxu0 0
          %3482 = vmatpush1.bf16.msra.mxu0 0
          %3483 = vmatprep.subr.bf16.mxu0 0
          %3484 = vmatpush1.bf16.msra.mxu0 0
          %3485 = vmatprep.mubr.bf16.mxu0 0
          %3486 = vmatmul.mubr.bf16.gmra.mrb[0].mxu0 %v519
          %v3487 = vpop.f32.mrb[0].mxu0
          %v3488 = vadd.f32 0.0, %v3487
          %v3489 = vpop.f32.mrb[0].mxu0
          %v3490 = vpop.f32.mrb[0].mxu0
          %v3491 = vadd.f32 0.0, %v3490
          %v3492 = vpop.f32.mrb[0].mxu0
          %3493 = vdwg.mxu0
          %v3494 = vadd.f32 %v3451, %v3488
          %v3495 = vadd.f32 %v3452, %v3491
          %v3497 = vsel %vm240, %v220, 0
          %3499 = vmatprep.subr.bf16.mxu0 0
          %3500 = vmatpush1.bf16.msra.mxu0 %v3497
          %3501 = vmatprep.subr.bf16.mxu0 0
          %3502 = vmatpush1.bf16.msra.mxu0 0
          %3503 = vmatprep.subr.bf16.mxu0 0
          %3504 = vmatpush1.bf16.msra.mxu0 0
          %3505 = vmatprep.subr.bf16.mxu0 0
          %3506 = vmatpush1.bf16.msra.mxu0 0
          %3507 = vmatprep.subr.bf16.mxu0 0
          %3508 = vmatpush1.bf16.msra.mxu0 0
          %3509 = vmatprep.subr.bf16.mxu0 0
          %3510 = vmatpush1.bf16.msra.mxu0 0
          %3511 = vmatprep.subr.bf16.mxu0 0
          %3512 = vmatpush1.bf16.msra.mxu0 0
          %3513 = vmatprep.subr.bf16.mxu0 0
          %3514 = vmatpush1.bf16.msra.mxu0 0
          %3515 = vmatprep.subr.bf16.mxu0 0
          %3516 = vmatpush1.bf16.msra.mxu0 0
          %3517 = vmatprep.subr.bf16.mxu0 0
          %3518 = vmatpush1.bf16.msra.mxu0 0
          %3519 = vmatprep.subr.bf16.mxu0 0
          %3520 = vmatpush1.bf16.msra.mxu0 0
          %3521 = vmatprep.subr.bf16.mxu0 0
          %3522 = vmatpush1.bf16.msra.mxu0 0
          %3523 = vmatprep.subr.bf16.mxu0 0
          %3524 = vmatpush1.bf16.msra.mxu0 0
          %3525 = vmatprep.subr.bf16.mxu0 0
          %3526 = vmatpush1.bf16.msra.mxu0 0
          %3527 = vmatprep.subr.bf16.mxu0 0
          %3528 = vmatpush1.bf16.msra.mxu0 0
          %3529 = vmatprep.subr.bf16.mxu0 0
          %3530 = vmatpush1.bf16.msra.mxu0 0
          %3531 = vmatprep.mubr.bf16.mxu0 0
          %3532 = vmatmul.mubr.bf16.gmra.mrb[0].mxu0 %v573
          %v3533 = vpop.f32.mrb[0].mxu0
          %v3534 = vadd.f32 0.0, %v3533
          %v3535 = vpop.f32.mrb[0].mxu0
          %v3536 = vpop.f32.mrb[0].mxu0
          %v3537 = vadd.f32 0.0, %v3536
          %v3538 = vpop.f32.mrb[0].mxu0
          %3539 = vdwg.mxu0
          %v3540 = vadd.f32 %v3494, %v3534
          %v3541 = vadd.f32 %v3495, %v3537
          %v3544 = vunpack.c.l.s4 1983009808
          %v3545 = vunpack.c.0.s8 %v3544
          %v3546 = vlaneseq
          %v3547 = vshrl.u32 %v3546, 7
          %v3548 = vsub.s32 %v3545, %v3547
          %v3549 = vrot.slane %v220, %v3548
          %3550 = vrot.lane.b32.xlu0 %v3549, 127
          %v3551 = vpop.permute.xlu0 %3550
          %v3553 = vsel %vm240, %v3551, 0
          %3555 = vmatprep.subr.bf16.mxu0 0
          %3556 = vmatpush1.bf16.msra.mxu0 %v3553
          %3557 = vmatprep.subr.bf16.mxu0 0
          %3558 = vmatpush1.bf16.msra.mxu0 0
          %3559 = vmatprep.subr.bf16.mxu0 0
          %3560 = vmatpush1.bf16.msra.mxu0 0
          %3561 = vmatprep.subr.bf16.mxu0 0
          %3562 = vmatpush1.bf16.msra.mxu0 0
          %3563 = vmatprep.subr.bf16.mxu0 0
          %3564 = vmatpush1.bf16.msra.mxu0 0
          %3565 = vmatprep.subr.bf16.mxu0 0
          %3566 = vmatpush1.bf16.msra.mxu0 0
          %3567 = vmatprep.subr.bf16.mxu0 0
          %3568 = vmatpush1.bf16.msra.mxu0 0
          %3569 = vmatprep.subr.bf16.mxu0 0
          %3570 = vmatpush1.bf16.msra.mxu0 0
          %3571 = vmatprep.subr.bf16.mxu0 0
          %3572 = vmatpush1.bf16.msra.mxu0 0
          %3573 = vmatprep.subr.bf16.mxu0 0
          %3574 = vmatpush1.bf16.msra.mxu0 0
          %3575 = vmatprep.subr.bf16.mxu0 0
          %3576 = vmatpush1.bf16.msra.mxu0 0
          %3577 = vmatprep.subr.bf16.mxu0 0
          %3578 = vmatpush1.bf16.msra.mxu0 0
          %3579 = vmatprep.subr.bf16.mxu0 0
          %3580 = vmatpush1.bf16.msra.mxu0 0
          %3581 = vmatprep.subr.bf16.mxu0 0
          %3582 = vmatpush1.bf16.msra.mxu0 0
          %3583 = vmatprep.subr.bf16.mxu0 0
          %3584 = vmatpush1.bf16.msra.mxu0 0
          %3585 = vmatprep.subr.bf16.mxu0 0
          %3586 = vmatpush1.bf16.msra.mxu0 0
          %3587 = vmatprep.mubr.bf16.mxu0 0
          %3588 = vmatmul.mubr.bf16.gmra.mrb[0].mxu0 %v637
          %v3589 = vpop.f32.mrb[0].mxu0
          %v3590 = vadd.f32 0.0, %v3589
          %v3591 = vpop.f32.mrb[0].mxu0
          %v3592 = vpop.f32.mrb[0].mxu0
          %v3593 = vadd.f32 0.0, %v3592
          %v3594 = vpop.f32.mrb[0].mxu0
          %3595 = vdwg.mxu0
          %v3596 = vadd.f32 %v3540, %v3590
          %v3597 = vadd.f32 %v3541, %v3593
          %3598 = vrot.lane.b32.xlu0 %v3549, 126
          %v3599 = vpop.permute.xlu0 %3598
          %v3601 = vsel %vm240, %v3599, 0
          %3603 = vmatprep.subr.bf16.mxu0 0
          %3604 = vmatpush1.bf16.msra.mxu0 %v3601
          %3605 = vmatprep.subr.bf16.mxu0 0
          %3606 = vmatpush1.bf16.msra.mxu0 0
          %3607 = vmatprep.subr.bf16.mxu0 0
          %3608 = vmatpush1.bf16.msra.mxu0 0
          %3609 = vmatprep.subr.bf16.mxu0 0
          %3610 = vmatpush1.bf16.msra.mxu0 0
          %3611 = vmatprep.subr.bf16.mxu0 0
          %3612 = vmatpush1.bf16.msra.mxu0 0
          %3613 = vmatprep.subr.bf16.mxu0 0
          %3614 = vmatpush1.bf16.msra.mxu0 0
          %3615 = vmatprep.subr.bf16.mxu0 0
          %3616 = vmatpush1.bf16.msra.mxu0 0
          %3617 = vmatprep.subr.bf16.mxu0 0
          %3618 = vmatpush1.bf16.msra.mxu0 0
          %3619 = vmatprep.subr.bf16.mxu0 0
          %3620 = vmatpush1.bf16.msra.mxu0 0
          %3621 = vmatprep.subr.bf16.mxu0 0
          %3622 = vmatpush1.bf16.msra.mxu0 0
          %3623 = vmatprep.subr.bf16.mxu0 0
          %3624 = vmatpush1.bf16.msra.mxu0 0
          %3625 = vmatprep.subr.bf16.mxu0 0
          %3626 = vmatpush1.bf16.msra.mxu0 0
          %3627 = vmatprep.subr.bf16.mxu0 0
          %3628 = vmatpush1.bf16.msra.mxu0 0
          %3629 = vmatprep.subr.bf16.mxu0 0
          %3630 = vmatpush1.bf16.msra.mxu0 0
          %3631 = vmatprep.subr.bf16.mxu0 0
          %3632 = vmatpush1.bf16.msra.mxu0 0
          %3633 = vmatprep.subr.bf16.mxu0 0
          %3634 = vmatpush1.bf16.msra.mxu0 0
          %3635 = vmatprep.mubr.bf16.mxu0 0
          %3636 = vmatmul.mubr.bf16.gmra.mrb[0].mxu0 %v693
          %v3637 = vpop.f32.mrb[0].mxu0
          %v3638 = vadd.f32 0.0, %v3637
          %v3639 = vpop.f32.mrb[0].mxu0
          %v3640 = vpop.f32.mrb[0].mxu0
          %v3641 = vadd.f32 0.0, %v3640
          %v3642 = vpop.f32.mrb[0].mxu0
          %3643 = vdwg.mxu0
          %v3644 = vadd.f32 %v3596, %v3638
          %v3645 = vadd.f32 %v3597, %v3641
          %v3646 = vadd.f32 %v3231, %v3644
          %v3647 = vadd.f32 %v3232, %v3645
          %v3648 = vmul.f32 %v3644, %v3644
          %v3649 = vmul.f32 %v3645, %v3645
          %v3650 = vadd.f32 %v3235, %v3648
          %v3651 = vadd.f32 %v3236, %v3649
          %v3652 = vpack.c.bf16 %v3645, %v3644
          %s3653 = sadd.s32 %s168, 7
          %s3654 = smul.addr %s3653, 8
          %s3655 = scalar_lea.vmem [#allocation2], %s3654
          %3656 = vst.msk [vmem:[%s3655] sm:$0xff] %vm750, %v3652
          %v3657 = vld [vmem:[#allocation3] sm:$0xff]
          %v3658 = vld [vmem:[#allocation3 + $0x8] sm:$0xff]
          %v3659 = vadd.f32 %v3657, %v3646
          %v3660 = vadd.f32 %v3658, %v3647
          %3661 = vst.msk [vmem:[#allocation3] sm:$0xff] %vm750, %v3659
          %3662 = vst.msk [vmem:[#allocation3 + $0x8] sm:$0xff] %vm750, %v3660
          %v3663 = vld [vmem:[#allocation4] sm:$0xff]
          %v3664 = vld [vmem:[#allocation4 + $0x8] sm:$0xff]
          %v3665 = vadd.f32 %v3663, %v3650
          %v3666 = vadd.f32 %v3664, %v3651
          %3667 = vst.msk [vmem:[#allocation4] sm:$0xff] %vm750, %v3665
          %3668 = vst.msk [vmem:[#allocation4 + $0x8] sm:$0xff] %vm750, %v3666
        $region36: #{tpu_custom_call.1} parent=27 // pred_fallthru
          _
        %p3669 = scmp.eq.s32.totalorder %s22, 1
        %p3670 = pnand %p3669, %p170
        %p3671 = pneg %p3670
        // Predicated region
        $region37: #{tpu_custom_call.1} parent=27 // pred_check
          _
        $region38: #{tpu_custom_call.1} parent=27 // pred_check_branch
          %3673 = sbr.rel (%p3670) target = $region40
        $region39: #{tpu_custom_call.1} parent=27 // pred_region
          %v3674 = vld [vmem:[#allocation3] sm:$0xff]
          %v3675 = vld [vmem:[#allocation3 + $0x8] sm:$0xff]
          %vm3676 = vcmask 261120
          %v3677 = vsel %vm3676, %v3674, 0.0
          %3678 = vadd.xlane.f32.xlu0 %v3677
          %v3679 = vpop.xlane.xlu0 %3678
          %v3680 = vsel %vm3676, %v3675, 0.0
          %3681 = vadd.xlane.f32.xlu0 %v3680
          %v3682 = vpop.xlane.xlu0 %3681
          %v3683 = vld [vmem:[#allocation4] sm:$0xff]
          %v3684 = vld [vmem:[#allocation4 + $0x8] sm:$0xff]
          %v3685 = vsel %vm3676, %v3683, 0.0
          %3686 = vadd.xlane.f32.xlu0 %v3685
          %v3687 = vpop.xlane.xlu0 %3686
          %v3688 = vsel %vm3676, %v3684, 0.0
          %3689 = vadd.xlane.f32.xlu0 %v3688
          %v3690 = vpop.xlane.xlu0 %3689
          %v3691 = vadd.f32 %v3679, %v3682
          %v3692 = vadd.f32 %v3687, %v3690
          %v3693 = vrcp.pop 1024.0
          %v3694 = vmul.f32 %v3691, %v3693
          %v3695 = vmul.f32 %v3692, %v3693
          %v3696 = vmul.f32 %v3694, %v3694
          %v3697 = vsub.f32 %v3695, %v3696
          %v3698 = vmax.f32 %v3697, 0.0
          %v3699 = vadd.f32 %v3698, 1e-05
          %v3700 = vrsqrt.pop %v3699
          %vm3701 = vcmask 7168
          %3702 = vst.msk [vmem:[#allocation5] sm:$0xff] %vm3701, %v3694
          %3703 = vst.msk [vmem:[#allocation5 + $0x8] sm:$0xff] %vm3701, %v3694
          %3704 = vst.msk [vmem:[#allocation6] sm:$0xff] %vm3701, %v3700
          %3705 = vst.msk [vmem:[#allocation6 + $0x8] sm:$0xff] %vm3701, %v3700
        $region40: #{tpu_custom_call.1} parent=27 // pred_fallthru
          _
        // Predicated region
        $region41: #{tpu_custom_call.1} parent=27 // pred_check
          %p3706 = pneg %p3669
        $region42: #{tpu_custom_call.1} parent=27 // pred_check_branch
          %3708 = sbr.rel (%p3706) target = $region44
        $region43: #{tpu_custom_call.1} parent=27 // pred_region
          %v3709 = vld [vmem:[#allocation5] sm:$0xff]
          %v3710 = vld [vmem:[#allocation5 + $0x8] sm:$0xff]
          %v3711 = vld [vmem:[#allocation6] sm:$0xff]
          %v3712 = vld [vmem:[#allocation6 + $0x8] sm:$0xff]
          %s3713 = smul.addr %s168, 8
          %s3714 = scalar_lea.vmem [#allocation2], %s3713
          %v3715 = vld [vmem:[%s3714] sm:$0xff]
          %v3716 = vld [vmem:[%s3714 + $0x8] sm:$0xff]
          %v3717 = vld [vmem:[%s3714 + $0x10] sm:$0xff]
          %v3718 = vld [vmem:[%s3714 + $0x18] sm:$0xff]
          %v3719 = vld [vmem:[%s3714 + $0x20] sm:$0xff]
          %v3720 = vld [vmem:[%s3714 + $0x28] sm:$0xff]
          %v3721 = vld [vmem:[%s3714 + $0x30] sm:$0xff]
          %v3722 = vld [vmem:[%s3714 + $0x38] sm:$0xff]
          %v3723 = vunpack.c.l.bf16 %v3715
          %v3724 = vunpack.c.h.bf16 %v3715
          %3726 = vset.pattern.permute.xlu0 0
          %3727 = vperm.xlu0 %3726, %v3709
          %v3728 = vpop.permute.xlu0 %3727
          %3731 = vset.pattern.permute.xlu0 0
          %3732 = vperm.xlu0 %3731, %v3710
          %v3733 = vpop.permute.xlu0 %3732
          %v3735 = vsub.f32 %v3723, %v3728
          %v3736 = vsub.f32 %v3724, %v3733
          %3738 = vset.pattern.permute.xlu0 0
          %3739 = vperm.xlu0 %3738, %v3711
          %v3740 = vpop.permute.xlu0 %3739
          %3743 = vset.pattern.permute.xlu0 0
          %3744 = vperm.xlu0 %3743, %v3712
          %v3745 = vpop.permute.xlu0 %3744
          %v3747 = vmul.f32 %v3735, %v3740
          %v3748 = vmul.f32 %v3736, %v3745
          %v3749 = vmax.f32 %v3747, 0.0
          %v3750 = vmax.f32 %v3748, 0.0
          %v3752 = vcombine.high %v3749, %v3749
          %v3754 = vunpack.c.l.s4 1966171168
          %v3755 = vunpack.c.0.s8 %v3754
          %v3756 = vlaneseq
          %v3757 = vshrl.u32 %v3756, 7
          %v3758 = vsub.s32 %v3755, %v3757
          %v3759 = vrot.slane %v3749, %v3758
          %v3761 = vunpack.c.l.s4 1966171168
          %v3762 = vunpack.c.0.s8 %v3761
          %v3763 = vlaneseq
          %v3764 = vshrl.u32 %v3763, 7
          %v3765 = vsub.s32 %v3762, %v3764
          %v3766 = vrot.slane %v3752, %v3765
          %v3767 = vcombine.high %v3759, %v3759
          %v3768 = vcombine.high %v3766, %v3766
          %v3770 = vunpack.c.l.s4 1966171168
          %v3771 = vunpack.c.0.s8 %v3770
          %v3772 = vlaneseq
          %v3773 = vshrl.u32 %v3772, 7
          %v3774 = vsub.s32 %v3771, %v3773
          %v3775 = vrot.slane %v3759, %v3774
          %v3777 = vunpack.c.l.s4 1966171168
          %v3778 = vunpack.c.0.s8 %v3777
          %v3779 = vlaneseq
          %v3780 = vshrl.u32 %v3779, 7
          %v3781 = vsub.s32 %v3778, %v3780
          %v3782 = vrot.slane %v3766, %v3781
          %v3784 = vunpack.c.l.s4 1966171168
          %v3785 = vunpack.c.0.s8 %v3784
          %v3786 = vlaneseq
          %v3787 = vshrl.u32 %v3786, 7
          %v3788 = vsub.s32 %v3785, %v3787
          %v3789 = vrot.slane %v3767, %v3788
          %v3791 = vunpack.c.l.s4 1966171168
          %v3792 = vunpack.c.0.s8 %v3791
          %v3793 = vlaneseq
          %v3794 = vshrl.u32 %v3793, 7
          %v3795 = vsub.s32 %v3792, %v3794
          %v3796 = vrot.slane %v3768, %v3795
          %v3797 = vcombine.high %v3775, %v3775
          %v3798 = vcombine.high %v3782, %v3782
          %v3799 = vcombine.high %v3789, %v3789
          %v3800 = vcombine.high %v3796, %v3796
          %vm3809 = vcmask 253952
          %3810 = vst.msk [vmem:[%s159] sm:$0x1] %vm3809, %v3775
          %3811 = vst.msk [vmem:[%s159 + $0x10] sm:$0x1] %vm3809, %v3789
          %3812 = vst.msk [vmem:[%s159 + $0x20] sm:$0x1] %vm3809, %v3797
          %3813 = vst.msk [vmem:[%s159 + $0x30] sm:$0x1] %vm3809, %v3799
          %3814 = vst.msk [vmem:[%s159 + $0x40] sm:$0x1] %vm3809, %v3782
          %3815 = vst.msk [vmem:[%s159 + $0x50] sm:$0x1] %vm3809, %v3796
          %3816 = vst.msk [vmem:[%s159 + $0x60] sm:$0x1] %vm3809, %v3798
          %3817 = vst.msk [vmem:[%s159 + $0x70] sm:$0x1] %vm3809, %v3800
          %v3819 = vcombine.high %v3750, %v3750
          %v3821 = vunpack.c.l.s4 1966171168
          %v3822 = vunpack.c.0.s8 %v3821
          %v3823 = vlaneseq
          %v3824 = vshrl.u32 %v3823, 7
          %v3825 = vsub.s32 %v3822, %v3824
          %v3826 = vrot.slane %v3750, %v3825
          %v3828 = vunpack.c.l.s4 1966171168
          %v3829 = vunpack.c.0.s8 %v3828
          %v3830 = vlaneseq
          %v3831 = vshrl.u32 %v3830, 7
          %v3832 = vsub.s32 %v3829, %v3831
          %v3833 = vrot.slane %v3819, %v3832
          %v3834 = vcombine.high %v3826, %v3826
          %v3835 = vcombine.high %v3833, %v3833
          %v3837 = vunpack.c.l.s4 1966171168
          %v3838 = vunpack.c.0.s8 %v3837
          %v3839 = vlaneseq
          %v3840 = vshrl.u32 %v3839, 7
          %v3841 = vsub.s32 %v3838, %v3840
          %v3842 = vrot.slane %v3826, %v3841
          %v3844 = vunpack.c.l.s4 1966171168
          %v3845 = vunpack.c.0.s8 %v3844
          %v3846 = vlaneseq
          %v3847 = vshrl.u32 %v3846, 7
          %v3848 = vsub.s32 %v3845, %v3847
          %v3849 = vrot.slane %v3833, %v3848
          %v3851 = vunpack.c.l.s4 1966171168
          %v3852 = vunpack.c.0.s8 %v3851
          %v3853 = vlaneseq
          %v3854 = vshrl.u32 %v3853, 7
          %v3855 = vsub.s32 %v3852, %v3854
          %v3856 = vrot.slane %v3834, %v3855
          %v3858 = vunpack.c.l.s4 1966171168
          %v3859 = vunpack.c.0.s8 %v3858
          %v3860 = vlaneseq
          %v3861 = vshrl.u32 %v3860, 7
          %v3862 = vsub.s32 %v3859, %v3861
          %v3863 = vrot.slane %v3835, %v3862
          %v3864 = vcombine.high %v3842, %v3842
          %v3865 = vcombine.high %v3849, %v3849
          %v3866 = vcombine.high %v3856, %v3856
          %v3867 = vcombine.high %v3863, %v3863
          %3876 = vst.msk [vmem:[%s159 + $0x1] sm:$0x1] %vm3809, %v3842
          %3877 = vst.msk [vmem:[%s159 + $0x11] sm:$0x1] %vm3809, %v3856
          %3878 = vst.msk [vmem:[%s159 + $0x21] sm:$0x1] %vm3809, %v3864
          %3879 = vst.msk [vmem:[%s159 + $0x31] sm:$0x1] %vm3809, %v3866
          %3880 = vst.msk [vmem:[%s159 + $0x41] sm:$0x1] %vm3809, %v3849
          %3881 = vst.msk [vmem:[%s159 + $0x51] sm:$0x1] %vm3809, %v3863
          %3882 = vst.msk [vmem:[%s159 + $0x61] sm:$0x1] %vm3809, %v3865
          %3883 = vst.msk [vmem:[%s159 + $0x71] sm:$0x1] %vm3809, %v3867
          %v3884 = vunpack.c.l.bf16 %v3716
          %v3885 = vunpack.c.h.bf16 %v3716
          %v3886 = vsub.f32 %v3884, %v3728
          %v3887 = vsub.f32 %v3885, %v3733
          %v3888 = vmul.f32 %v3886, %v3740
          %v3889 = vmul.f32 %v3887, %v3745
          %v3890 = vmax.f32 %v3888, 0.0
          %v3891 = vmax.f32 %v3889, 0.0
          %v3893 = vcombine.high %v3890, %v3890
          %v3895 = vunpack.c.l.s4 1966171168
          %v3896 = vunpack.c.0.s8 %v3895
          %v3897 = vlaneseq
          %v3898 = vshrl.u32 %v3897, 7
          %v3899 = vsub.s32 %v3896, %v3898
          %v3900 = vrot.slane %v3890, %v3899
          %v3902 = vunpack.c.l.s4 1966171168
          %v3903 = vunpack.c.0.s8 %v3902
          %v3904 = vlaneseq
          %v3905 = vshrl.u32 %v3904, 7
          %v3906 = vsub.s32 %v3903, %v3905
          %v3907 = vrot.slane %v3893, %v3906
          %v3908 = vcombine.high %v3900, %v3900
          %v3909 = vcombine.high %v3907, %v3907
          %v3911 = vunpack.c.l.s4 1966171168
          %v3912 = vunpack.c.0.s8 %v3911
          %v3913 = vlaneseq
          %v3914 = vshrl.u32 %v3913, 7
          %v3915 = vsub.s32 %v3912, %v3914
          %v3916 = vrot.slane %v3900, %v3915
          %v3918 = vunpack.c.l.s4 1966171168
          %v3919 = vunpack.c.0.s8 %v3918
          %v3920 = vlaneseq
          %v3921 = vshrl.u32 %v3920, 7
          %v3922 = vsub.s32 %v3919, %v3921
          %v3923 = vrot.slane %v3907, %v3922
          %v3925 = vunpack.c.l.s4 1966171168
          %v3926 = vunpack.c.0.s8 %v3925
          %v3927 = vlaneseq
          %v3928 = vshrl.u32 %v3927, 7
          %v3929 = vsub.s32 %v3926, %v3928
          %v3930 = vrot.slane %v3908, %v3929
          %v3932 = vunpack.c.l.s4 1966171168
          %v3933 = vunpack.c.0.s8 %v3932
          %v3934 = vlaneseq
          %v3935 = vshrl.u32 %v3934, 7
          %v3936 = vsub.s32 %v3933, %v3935
          %v3937 = vrot.slane %v3909, %v3936
          %v3938 = vcombine.high %v3916, %v3916
          %v3939 = vcombine.high %v3923, %v3923
          %v3940 = vcombine.high %v3930, %v3930
          %v3941 = vcombine.high %v3937, %v3937
          %3950 = vst.msk [vmem:[%s159 + $0x2] sm:$0x1] %vm3809, %v3916
          %3951 = vst.msk [vmem:[%s159 + $0x12] sm:$0x1] %vm3809, %v3930
          %3952 = vst.msk [vmem:[%s159 + $0x22] sm:$0x1] %vm3809, %v3938
          %3953 = vst.msk [vmem:[%s159 + $0x32] sm:$0x1] %vm3809, %v3940
          %3954 = vst.msk [vmem:[%s159 + $0x42] sm:$0x1] %vm3809, %v3923
          %3955 = vst.msk [vmem:[%s159 + $0x52] sm:$0x1] %vm3809, %v3937
          %3956 = vst.msk [vmem:[%s159 + $0x62] sm:$0x1] %vm3809, %v3939
          %3957 = vst.msk [vmem:[%s159 + $0x72] sm:$0x1] %vm3809, %v3941
          %v3959 = vcombine.high %v3891, %v3891
          %v3961 = vunpack.c.l.s4 1966171168
          %v3962 = vunpack.c.0.s8 %v3961
          %v3963 = vlaneseq
          %v3964 = vshrl.u32 %v3963, 7
          %v3965 = vsub.s32 %v3962, %v3964
          %v3966 = vrot.slane %v3891, %v3965
          %v3968 = vunpack.c.l.s4 1966171168
          %v3969 = vunpack.c.0.s8 %v3968
          %v3970 = vlaneseq
          %v3971 = vshrl.u32 %v3970, 7
          %v3972 = vsub.s32 %v3969, %v3971
          %v3973 = vrot.slane %v3959, %v3972
          %v3974 = vcombine.high %v3966, %v3966
          %v3975 = vcombine.high %v3973, %v3973
          %v3977 = vunpack.c.l.s4 1966171168
          %v3978 = vunpack.c.0.s8 %v3977
          %v3979 = vlaneseq
          %v3980 = vshrl.u32 %v3979, 7
          %v3981 = vsub.s32 %v3978, %v3980
          %v3982 = vrot.slane %v3966, %v3981
          %v3984 = vunpack.c.l.s4 1966171168
          %v3985 = vunpack.c.0.s8 %v3984
          %v3986 = vlaneseq
          %v3987 = vshrl.u32 %v3986, 7
          %v3988 = vsub.s32 %v3985, %v3987
          %v3989 = vrot.slane %v3973, %v3988
          %v3991 = vunpack.c.l.s4 1966171168
          %v3992 = vunpack.c.0.s8 %v3991
          %v3993 = vlaneseq
          %v3994 = vshrl.u32 %v3993, 7
          %v3995 = vsub.s32 %v3992, %v3994
          %v3996 = vrot.slane %v3974, %v3995
          %v3998 = vunpack.c.l.s4 1966171168
          %v3999 = vunpack.c.0.s8 %v3998
          %v4000 = vlaneseq
          %v4001 = vshrl.u32 %v4000, 7
          %v4002 = vsub.s32 %v3999, %v4001
          %v4003 = vrot.slane %v3975, %v4002
          %v4004 = vcombine.high %v3982, %v3982
          %v4005 = vcombine.high %v3989, %v3989
          %v4006 = vcombine.high %v3996, %v3996
          %v4007 = vcombine.high %v4003, %v4003
          %4016 = vst.msk [vmem:[%s159 + $0x3] sm:$0x1] %vm3809, %v3982
          %4017 = vst.msk [vmem:[%s159 + $0x13] sm:$0x1] %vm3809, %v3996
          %4018 = vst.msk [vmem:[%s159 + $0x23] sm:$0x1] %vm3809, %v4004
          %4019 = vst.msk [vmem:[%s159 + $0x33] sm:$0x1] %vm3809, %v4006
          %4020 = vst.msk [vmem:[%s159 + $0x43] sm:$0x1] %vm3809, %v3989
          %4021 = vst.msk [vmem:[%s159 + $0x53] sm:$0x1] %vm3809, %v4003
          %4022 = vst.msk [vmem:[%s159 + $0x63] sm:$0x1] %vm3809, %v4005
          %4023 = vst.msk [vmem:[%s159 + $0x73] sm:$0x1] %vm3809, %v4007
          %v4024 = vunpack.c.l.bf16 %v3717
          %v4025 = vunpack.c.h.bf16 %v3717
          %v4026 = vsub.f32 %v4024, %v3728
          %v4027 = vsub.f32 %v4025, %v3733
          %v4028 = vmul.f32 %v4026, %v3740
          %v4029 = vmul.f32 %v4027, %v3745
          %v4030 = vmax.f32 %v4028, 0.0
          %v4031 = vmax.f32 %v4029, 0.0
          %v4033 = vcombine.high %v4030, %v4030
          %v4035 = vunpack.c.l.s4 1966171168
          %v4036 = vunpack.c.0.s8 %v4035
          %v4037 = vlaneseq
          %v4038 = vshrl.u32 %v4037, 7
          %v4039 = vsub.s32 %v4036, %v4038
          %v4040 = vrot.slane %v4030, %v4039
          %v4042 = vunpack.c.l.s4 1966171168
          %v4043 = vunpack.c.0.s8 %v4042
          %v4044 = vlaneseq
          %v4045 = vshrl.u32 %v4044, 7
          %v4046 = vsub.s32 %v4043, %v4045
          %v4047 = vrot.slane %v4033, %v4046
          %v4048 = vcombine.high %v4040, %v4040
          %v4049 = vcombine.high %v4047, %v4047
          %v4051 = vunpack.c.l.s4 1966171168
          %v4052 = vunpack.c.0.s8 %v4051
          %v4053 = vlaneseq
          %v4054 = vshrl.u32 %v4053, 7
          %v4055 = vsub.s32 %v4052, %v4054
          %v4056 = vrot.slane %v4040, %v4055
          %v4058 = vunpack.c.l.s4 1966171168
          %v4059 = vunpack.c.0.s8 %v4058
          %v4060 = vlaneseq
          %v4061 = vshrl.u32 %v4060, 7
          %v4062 = vsub.s32 %v4059, %v4061
          %v4063 = vrot.slane %v4047, %v4062
          %v4065 = vunpack.c.l.s4 1966171168
          %v4066 = vunpack.c.0.s8 %v4065
          %v4067 = vlaneseq
          %v4068 = vshrl.u32 %v4067, 7
          %v4069 = vsub.s32 %v4066, %v4068
          %v4070 = vrot.slane %v4048, %v4069
          %v4072 = vunpack.c.l.s4 1966171168
          %v4073 = vunpack.c.0.s8 %v4072
          %v4074 = vlaneseq
          %v4075 = vshrl.u32 %v4074, 7
          %v4076 = vsub.s32 %v4073, %v4075
          %v4077 = vrot.slane %v4049, %v4076
          %v4078 = vcombine.high %v4056, %v4056
          %v4079 = vcombine.high %v4063, %v4063
          %v4080 = vcombine.high %v4070, %v4070
          %v4081 = vcombine.high %v4077, %v4077
          %4090 = vst.msk [vmem:[%s159 + $0x4] sm:$0x1] %vm3809, %v4056
          %4091 = vst.msk [vmem:[%s159 + $0x14] sm:$0x1] %vm3809, %v4070
          %4092 = vst.msk [vmem:[%s159 + $0x24] sm:$0x1] %vm3809, %v4078
          %4093 = vst.msk [vmem:[%s159 + $0x34] sm:$0x1] %vm3809, %v4080
          %4094 = vst.msk [vmem:[%s159 + $0x44] sm:$0x1] %vm3809, %v4063
          %4095 = vst.msk [vmem:[%s159 + $0x54] sm:$0x1] %vm3809, %v4077
          %4096 = vst.msk [vmem:[%s159 + $0x64] sm:$0x1] %vm3809, %v4079
          %4097 = vst.msk [vmem:[%s159 + $0x74] sm:$0x1] %vm3809, %v4081
          %v4099 = vcombine.high %v4031, %v4031
          %v4101 = vunpack.c.l.s4 1966171168
          %v4102 = vunpack.c.0.s8 %v4101
          %v4103 = vlaneseq
          %v4104 = vshrl.u32 %v4103, 7
          %v4105 = vsub.s32 %v4102, %v4104
          %v4106 = vrot.slane %v4031, %v4105
          %v4108 = vunpack.c.l.s4 1966171168
          %v4109 = vunpack.c.0.s8 %v4108
          %v4110 = vlaneseq
          %v4111 = vshrl.u32 %v4110, 7
          %v4112 = vsub.s32 %v4109, %v4111
          %v4113 = vrot.slane %v4099, %v4112
          %v4114 = vcombine.high %v4106, %v4106
          %v4115 = vcombine.high %v4113, %v4113
          %v4117 = vunpack.c.l.s4 1966171168
          %v4118 = vunpack.c.0.s8 %v4117
          %v4119 = vlaneseq
          %v4120 = vshrl.u32 %v4119, 7
          %v4121 = vsub.s32 %v4118, %v4120
          %v4122 = vrot.slane %v4106, %v4121
          %v4124 = vunpack.c.l.s4 1966171168
          %v4125 = vunpack.c.0.s8 %v4124
          %v4126 = vlaneseq
          %v4127 = vshrl.u32 %v4126, 7
          %v4128 = vsub.s32 %v4125, %v4127
          %v4129 = vrot.slane %v4113, %v4128
          %v4131 = vunpack.c.l.s4 1966171168
          %v4132 = vunpack.c.0.s8 %v4131
          %v4133 = vlaneseq
          %v4134 = vshrl.u32 %v4133, 7
          %v4135 = vsub.s32 %v4132, %v4134
          %v4136 = vrot.slane %v4114, %v4135
          %v4138 = vunpack.c.l.s4 1966171168
          %v4139 = vunpack.c.0.s8 %v4138
          %v4140 = vlaneseq
          %v4141 = vshrl.u32 %v4140, 7
          %v4142 = vsub.s32 %v4139, %v4141
          %v4143 = vrot.slane %v4115, %v4142
          %v4144 = vcombine.high %v4122, %v4122
          %v4145 = vcombine.high %v4129, %v4129
          %v4146 = vcombine.high %v4136, %v4136
          %v4147 = vcombine.high %v4143, %v4143
          %4156 = vst.msk [vmem:[%s159 + $0x5] sm:$0x1] %vm3809, %v4122
          %4157 = vst.msk [vmem:[%s159 + $0x15] sm:$0x1] %vm3809, %v4136
          %4158 = vst.msk [vmem:[%s159 + $0x25] sm:$0x1] %vm3809, %v4144
          %4159 = vst.msk [vmem:[%s159 + $0x35] sm:$0x1] %vm3809, %v4146
          %4160 = vst.msk [vmem:[%s159 + $0x45] sm:$0x1] %vm3809, %v4129
          %4161 = vst.msk [vmem:[%s159 + $0x55] sm:$0x1] %vm3809, %v4143
          %4162 = vst.msk [vmem:[%s159 + $0x65] sm:$0x1] %vm3809, %v4145
          %4163 = vst.msk [vmem:[%s159 + $0x75] sm:$0x1] %vm3809, %v4147
          %v4164 = vunpack.c.l.bf16 %v3718
          %v4165 = vunpack.c.h.bf16 %v3718
          %v4166 = vsub.f32 %v4164, %v3728
          %v4167 = vsub.f32 %v4165, %v3733
          %v4168 = vmul.f32 %v4166, %v3740
          %v4169 = vmul.f32 %v4167, %v3745
          %v4170 = vmax.f32 %v4168, 0.0
          %v4171 = vmax.f32 %v4169, 0.0
          %v4173 = vcombine.high %v4170, %v4170
          %v4175 = vunpack.c.l.s4 1966171168
          %v4176 = vunpack.c.0.s8 %v4175
          %v4177 = vlaneseq
          %v4178 = vshrl.u32 %v4177, 7
          %v4179 = vsub.s32 %v4176, %v4178
          %v4180 = vrot.slane %v4170, %v4179
          %v4182 = vunpack.c.l.s4 1966171168
          %v4183 = vunpack.c.0.s8 %v4182
          %v4184 = vlaneseq
          %v4185 = vshrl.u32 %v4184, 7
          %v4186 = vsub.s32 %v4183, %v4185
          %v4187 = vrot.slane %v4173, %v4186
          %v4188 = vcombine.high %v4180, %v4180
          %v4189 = vcombine.high %v4187, %v4187
          %v4191 = vunpack.c.l.s4 1966171168
          %v4192 = vunpack.c.0.s8 %v4191
          %v4193 = vlaneseq
          %v4194 = vshrl.u32 %v4193, 7
          %v4195 = vsub.s32 %v4192, %v4194
          %v4196 = vrot.slane %v4180, %v4195
          %v4198 = vunpack.c.l.s4 1966171168
          %v4199 = vunpack.c.0.s8 %v4198
          %v4200 = vlaneseq
          %v4201 = vshrl.u32 %v4200, 7
          %v4202 = vsub.s32 %v4199, %v4201
          %v4203 = vrot.slane %v4187, %v4202
          %v4205 = vunpack.c.l.s4 1966171168
          %v4206 = vunpack.c.0.s8 %v4205
          %v4207 = vlaneseq
          %v4208 = vshrl.u32 %v4207, 7
          %v4209 = vsub.s32 %v4206, %v4208
          %v4210 = vrot.slane %v4188, %v4209
          %v4212 = vunpack.c.l.s4 1966171168
          %v4213 = vunpack.c.0.s8 %v4212
          %v4214 = vlaneseq
          %v4215 = vshrl.u32 %v4214, 7
          %v4216 = vsub.s32 %v4213, %v4215
          %v4217 = vrot.slane %v4189, %v4216
          %v4218 = vcombine.high %v4196, %v4196
          %v4219 = vcombine.high %v4203, %v4203
          %v4220 = vcombine.high %v4210, %v4210
          %v4221 = vcombine.high %v4217, %v4217
          %4230 = vst.msk [vmem:[%s159 + $0x6] sm:$0x1] %vm3809, %v4196
          %4231 = vst.msk [vmem:[%s159 + $0x16] sm:$0x1] %vm3809, %v4210
          %4232 = vst.msk [vmem:[%s159 + $0x26] sm:$0x1] %vm3809, %v4218
          %4233 = vst.msk [vmem:[%s159 + $0x36] sm:$0x1] %vm3809, %v4220
          %4234 = vst.msk [vmem:[%s159 + $0x46] sm:$0x1] %vm3809, %v4203
          %4235 = vst.msk [vmem:[%s159 + $0x56] sm:$0x1] %vm3809, %v4217
          %4236 = vst.msk [vmem:[%s159 + $0x66] sm:$0x1] %vm3809, %v4219
          %4237 = vst.msk [vmem:[%s159 + $0x76] sm:$0x1] %vm3809, %v4221
          %v4239 = vcombine.high %v4171, %v4171
          %v4241 = vunpack.c.l.s4 1966171168
          %v4242 = vunpack.c.0.s8 %v4241
          %v4243 = vlaneseq
          %v4244 = vshrl.u32 %v4243, 7
          %v4245 = vsub.s32 %v4242, %v4244
          %v4246 = vrot.slane %v4171, %v4245
          %v4248 = vunpack.c.l.s4 1966171168
          %v4249 = vunpack.c.0.s8 %v4248
          %v4250 = vlaneseq
          %v4251 = vshrl.u32 %v4250, 7
          %v4252 = vsub.s32 %v4249, %v4251
          %v4253 = vrot.slane %v4239, %v4252
          %v4254 = vcombine.high %v4246, %v4246
          %v4255 = vcombine.high %v4253, %v4253
          %v4257 = vunpack.c.l.s4 1966171168
          %v4258 = vunpack.c.0.s8 %v4257
          %v4259 = vlaneseq
          %v4260 = vshrl.u32 %v4259, 7
          %v4261 = vsub.s32 %v4258, %v4260
          %v4262 = vrot.slane %v4246, %v4261
          %v4264 = vunpack.c.l.s4 1966171168
          %v4265 = vunpack.c.0.s8 %v4264
          %v4266 = vlaneseq
          %v4267 = vshrl.u32 %v4266, 7
          %v4268 = vsub.s32 %v4265, %v4267
          %v4269 = vrot.slane %v4253, %v4268
          %v4271 = vunpack.c.l.s4 1966171168
          %v4272 = vunpack.c.0.s8 %v4271
          %v4273 = vlaneseq
          %v4274 = vshrl.u32 %v4273, 7
          %v4275 = vsub.s32 %v4272, %v4274
          %v4276 = vrot.slane %v4254, %v4275
          %v4278 = vunpack.c.l.s4 1966171168
          %v4279 = vunpack.c.0.s8 %v4278
          %v4280 = vlaneseq
          %v4281 = vshrl.u32 %v4280, 7
          %v4282 = vsub.s32 %v4279, %v4281
          %v4283 = vrot.slane %v4255, %v4282
          %v4284 = vcombine.high %v4262, %v4262
          %v4285 = vcombine.high %v4269, %v4269
          %v4286 = vcombine.high %v4276, %v4276
          %v4287 = vcombine.high %v4283, %v4283
          %4296 = vst.msk [vmem:[%s159 + $0x7] sm:$0x1] %vm3809, %v4262
          %4297 = vst.msk [vmem:[%s159 + $0x17] sm:$0x1] %vm3809, %v4276
          %4298 = vst.msk [vmem:[%s159 + $0x27] sm:$0x1] %vm3809, %v4284
          %4299 = vst.msk [vmem:[%s159 + $0x37] sm:$0x1] %vm3809, %v4286
          %4300 = vst.msk [vmem:[%s159 + $0x47] sm:$0x1] %vm3809, %v4269
          %4301 = vst.msk [vmem:[%s159 + $0x57] sm:$0x1] %vm3809, %v4283
          %4302 = vst.msk [vmem:[%s159 + $0x67] sm:$0x1] %vm3809, %v4285
          %4303 = vst.msk [vmem:[%s159 + $0x77] sm:$0x1] %vm3809, %v4287
          %v4304 = vunpack.c.l.bf16 %v3719
          %v4305 = vunpack.c.h.bf16 %v3719
          %v4306 = vsub.f32 %v4304, %v3728
          %v4307 = vsub.f32 %v4305, %v3733
          %v4308 = vmul.f32 %v4306, %v3740
          %v4309 = vmul.f32 %v4307, %v3745
          %v4310 = vmax.f32 %v4308, 0.0
          %v4311 = vmax.f32 %v4309, 0.0
          %v4313 = vcombine.high %v4310, %v4310
          %v4315 = vunpack.c.l.s4 1966171168
          %v4316 = vunpack.c.0.s8 %v4315
          %v4317 = vlaneseq
          %v4318 = vshrl.u32 %v4317, 7
          %v4319 = vsub.s32 %v4316, %v4318
          %v4320 = vrot.slane %v4310, %v4319
          %v4322 = vunpack.c.l.s4 1966171168
          %v4323 = vunpack.c.0.s8 %v4322
          %v4324 = vlaneseq
          %v4325 = vshrl.u32 %v4324, 7
          %v4326 = vsub.s32 %v4323, %v4325
          %v4327 = vrot.slane %v4313, %v4326
          %v4328 = vcombine.high %v4320, %v4320
          %v4329 = vcombine.high %v4327, %v4327
          %v4331 = vunpack.c.l.s4 1966171168
          %v4332 = vunpack.c.0.s8 %v4331
          %v4333 = vlaneseq
          %v4334 = vshrl.u32 %v4333, 7
          %v4335 = vsub.s32 %v4332, %v4334
          %v4336 = vrot.slane %v4320, %v4335
          %v4338 = vunpack.c.l.s4 1966171168
          %v4339 = vunpack.c.0.s8 %v4338
          %v4340 = vlaneseq
          %v4341 = vshrl.u32 %v4340, 7
          %v4342 = vsub.s32 %v4339, %v4341
          %v4343 = vrot.slane %v4327, %v4342
          %v4345 = vunpack.c.l.s4 1966171168
          %v4346 = vunpack.c.0.s8 %v4345
          %v4347 = vlaneseq
          %v4348 = vshrl.u32 %v4347, 7
          %v4349 = vsub.s32 %v4346, %v4348
          %v4350 = vrot.slane %v4328, %v4349
          %v4352 = vunpack.c.l.s4 1966171168
          %v4353 = vunpack.c.0.s8 %v4352
          %v4354 = vlaneseq
          %v4355 = vshrl.u32 %v4354, 7
          %v4356 = vsub.s32 %v4353, %v4355
          %v4357 = vrot.slane %v4329, %v4356
          %v4358 = vcombine.high %v4336, %v4336
          %v4359 = vcombine.high %v4343, %v4343
          %v4360 = vcombine.high %v4350, %v4350
          %v4361 = vcombine.high %v4357, %v4357
          %4370 = vst.msk [vmem:[%s159 + $0x8] sm:$0x1] %vm3809, %v4336
          %4371 = vst.msk [vmem:[%s159 + $0x18] sm:$0x1] %vm3809, %v4350
          %4372 = vst.msk [vmem:[%s159 + $0x28] sm:$0x1] %vm3809, %v4358
          %4373 = vst.msk [vmem:[%s159 + $0x38] sm:$0x1] %vm3809, %v4360
          %4374 = vst.msk [vmem:[%s159 + $0x48] sm:$0x1] %vm3809, %v4343
          %4375 = vst.msk [vmem:[%s159 + $0x58] sm:$0x1] %vm3809, %v4357
          %4376 = vst.msk [vmem:[%s159 + $0x68] sm:$0x1] %vm3809, %v4359
          %4377 = vst.msk [vmem:[%s159 + $0x78] sm:$0x1] %vm3809, %v4361
          %v4379 = vcombine.high %v4311, %v4311
          %v4381 = vunpack.c.l.s4 1966171168
          %v4382 = vunpack.c.0.s8 %v4381
          %v4383 = vlaneseq
          %v4384 = vshrl.u32 %v4383, 7
          %v4385 = vsub.s32 %v4382, %v4384
          %v4386 = vrot.slane %v4311, %v4385
          %v4388 = vunpack.c.l.s4 1966171168
          %v4389 = vunpack.c.0.s8 %v4388
          %v4390 = vlaneseq
          %v4391 = vshrl.u32 %v4390, 7
          %v4392 = vsub.s32 %v4389, %v4391
          %v4393 = vrot.slane %v4379, %v4392
          %v4394 = vcombine.high %v4386, %v4386
          %v4395 = vcombine.high %v4393, %v4393
          %v4397 = vunpack.c.l.s4 1966171168
          %v4398 = vunpack.c.0.s8 %v4397
          %v4399 = vlaneseq
          %v4400 = vshrl.u32 %v4399, 7
          %v4401 = vsub.s32 %v4398, %v4400
          %v4402 = vrot.slane %v4386, %v4401
          %v4404 = vunpack.c.l.s4 1966171168
          %v4405 = vunpack.c.0.s8 %v4404
          %v4406 = vlaneseq
          %v4407 = vshrl.u32 %v4406, 7
          %v4408 = vsub.s32 %v4405, %v4407
          %v4409 = vrot.slane %v4393, %v4408
          %v4411 = vunpack.c.l.s4 1966171168
          %v4412 = vunpack.c.0.s8 %v4411
          %v4413 = vlaneseq
          %v4414 = vshrl.u32 %v4413, 7
          %v4415 = vsub.s32 %v4412, %v4414
          %v4416 = vrot.slane %v4394, %v4415
          %v4418 = vunpack.c.l.s4 1966171168
          %v4419 = vunpack.c.0.s8 %v4418
          %v4420 = vlaneseq
          %v4421 = vshrl.u32 %v4420, 7
          %v4422 = vsub.s32 %v4419, %v4421
          %v4423 = vrot.slane %v4395, %v4422
          %v4424 = vcombine.high %v4402, %v4402
          %v4425 = vcombine.high %v4409, %v4409
          %v4426 = vcombine.high %v4416, %v4416
          %v4427 = vcombine.high %v4423, %v4423
          %4436 = vst.msk [vmem:[%s159 + $0x9] sm:$0x1] %vm3809, %v4402
          %4437 = vst.msk [vmem:[%s159 + $0x19] sm:$0x1] %vm3809, %v4416
          %4438 = vst.msk [vmem:[%s159 + $0x29] sm:$0x1] %vm3809, %v4424
          %4439 = vst.msk [vmem:[%s159 + $0x39] sm:$0x1] %vm3809, %v4426
          %4440 = vst.msk [vmem:[%s159 + $0x49] sm:$0x1] %vm3809, %v4409
          %4441 = vst.msk [vmem:[%s159 + $0x59] sm:$0x1] %vm3809, %v4423
          %4442 = vst.msk [vmem:[%s159 + $0x69] sm:$0x1] %vm3809, %v4425
          %4443 = vst.msk [vmem:[%s159 + $0x79] sm:$0x1] %vm3809, %v4427
          %v4444 = vunpack.c.l.bf16 %v3720
          %v4445 = vunpack.c.h.bf16 %v3720
          %v4446 = vsub.f32 %v4444, %v3728
          %v4447 = vsub.f32 %v4445, %v3733
          %v4448 = vmul.f32 %v4446, %v3740
          %v4449 = vmul.f32 %v4447, %v3745
          %v4450 = vmax.f32 %v4448, 0.0
          %v4451 = vmax.f32 %v4449, 0.0
          %v4453 = vcombine.high %v4450, %v4450
          %v4455 = vunpack.c.l.s4 1966171168
          %v4456 = vunpack.c.0.s8 %v4455
          %v4457 = vlaneseq
          %v4458 = vshrl.u32 %v4457, 7
          %v4459 = vsub.s32 %v4456, %v4458
          %v4460 = vrot.slane %v4450, %v4459
          %v4462 = vunpack.c.l.s4 1966171168
          %v4463 = vunpack.c.0.s8 %v4462
          %v4464 = vlaneseq
          %v4465 = vshrl.u32 %v4464, 7
          %v4466 = vsub.s32 %v4463, %v4465
          %v4467 = vrot.slane %v4453, %v4466
          %v4468 = vcombine.high %v4460, %v4460
          %v4469 = vcombine.high %v4467, %v4467
          %v4471 = vunpack.c.l.s4 1966171168
          %v4472 = vunpack.c.0.s8 %v4471
          %v4473 = vlaneseq
          %v4474 = vshrl.u32 %v4473, 7
          %v4475 = vsub.s32 %v4472, %v4474
          %v4476 = vrot.slane %v4460, %v4475
          %v4478 = vunpack.c.l.s4 1966171168
          %v4479 = vunpack.c.0.s8 %v4478
          %v4480 = vlaneseq
          %v4481 = vshrl.u32 %v4480, 7
          %v4482 = vsub.s32 %v4479, %v4481
          %v4483 = vrot.slane %v4467, %v4482
          %v4485 = vunpack.c.l.s4 1966171168
          %v4486 = vunpack.c.0.s8 %v4485
          %v4487 = vlaneseq
          %v4488 = vshrl.u32 %v4487, 7
          %v4489 = vsub.s32 %v4486, %v4488
          %v4490 = vrot.slane %v4468, %v4489
          %v4492 = vunpack.c.l.s4 1966171168
          %v4493 = vunpack.c.0.s8 %v4492
          %v4494 = vlaneseq
          %v4495 = vshrl.u32 %v4494, 7
          %v4496 = vsub.s32 %v4493, %v4495
          %v4497 = vrot.slane %v4469, %v4496
          %v4498 = vcombine.high %v4476, %v4476
          %v4499 = vcombine.high %v4483, %v4483
          %v4500 = vcombine.high %v4490, %v4490
          %v4501 = vcombine.high %v4497, %v4497
          %4510 = vst.msk [vmem:[%s159 + $0xa] sm:$0x1] %vm3809, %v4476
          %4511 = vst.msk [vmem:[%s159 + $0x1a] sm:$0x1] %vm3809, %v4490
          %4512 = vst.msk [vmem:[%s159 + $0x2a] sm:$0x1] %vm3809, %v4498
          %4513 = vst.msk [vmem:[%s159 + $0x3a] sm:$0x1] %vm3809, %v4500
          %4514 = vst.msk [vmem:[%s159 + $0x4a] sm:$0x1] %vm3809, %v4483
          %4515 = vst.msk [vmem:[%s159 + $0x5a] sm:$0x1] %vm3809, %v4497
          %4516 = vst.msk [vmem:[%s159 + $0x6a] sm:$0x1] %vm3809, %v4499
          %4517 = vst.msk [vmem:[%s159 + $0x7a] sm:$0x1] %vm3809, %v4501
          %v4519 = vcombine.high %v4451, %v4451
          %v4521 = vunpack.c.l.s4 1966171168
          %v4522 = vunpack.c.0.s8 %v4521
          %v4523 = vlaneseq
          %v4524 = vshrl.u32 %v4523, 7
          %v4525 = vsub.s32 %v4522, %v4524
          %v4526 = vrot.slane %v4451, %v4525
          %v4528 = vunpack.c.l.s4 1966171168
          %v4529 = vunpack.c.0.s8 %v4528
          %v4530 = vlaneseq
          %v4531 = vshrl.u32 %v4530, 7
          %v4532 = vsub.s32 %v4529, %v4531
          %v4533 = vrot.slane %v4519, %v4532
          %v4534 = vcombine.high %v4526, %v4526
          %v4535 = vcombine.high %v4533, %v4533
          %v4537 = vunpack.c.l.s4 1966171168
          %v4538 = vunpack.c.0.s8 %v4537
          %v4539 = vlaneseq
          %v4540 = vshrl.u32 %v4539, 7
          %v4541 = vsub.s32 %v4538, %v4540
          %v4542 = vrot.slane %v4526, %v4541
          %v4544 = vunpack.c.l.s4 1966171168
          %v4545 = vunpack.c.0.s8 %v4544
          %v4546 = vlaneseq
          %v4547 = vshrl.u32 %v4546, 7
          %v4548 = vsub.s32 %v4545, %v4547
          %v4549 = vrot.slane %v4533, %v4548
          %v4551 = vunpack.c.l.s4 1966171168
          %v4552 = vunpack.c.0.s8 %v4551
          %v4553 = vlaneseq
          %v4554 = vshrl.u32 %v4553, 7
          %v4555 = vsub.s32 %v4552, %v4554
          %v4556 = vrot.slane %v4534, %v4555
          %v4558 = vunpack.c.l.s4 1966171168
          %v4559 = vunpack.c.0.s8 %v4558
          %v4560 = vlaneseq
          %v4561 = vshrl.u32 %v4560, 7
          %v4562 = vsub.s32 %v4559, %v4561
          %v4563 = vrot.slane %v4535, %v4562
          %v4564 = vcombine.high %v4542, %v4542
          %v4565 = vcombine.high %v4549, %v4549
          %v4566 = vcombine.high %v4556, %v4556
          %v4567 = vcombine.high %v4563, %v4563
          %4576 = vst.msk [vmem:[%s159 + $0xb] sm:$0x1] %vm3809, %v4542
          %4577 = vst.msk [vmem:[%s159 + $0x1b] sm:$0x1] %vm3809, %v4556
          %4578 = vst.msk [vmem:[%s159 + $0x2b] sm:$0x1] %vm3809, %v4564
          %4579 = vst.msk [vmem:[%s159 + $0x3b] sm:$0x1] %vm3809, %v4566
          %4580 = vst.msk [vmem:[%s159 + $0x4b] sm:$0x1] %vm3809, %v4549
          %4581 = vst.msk [vmem:[%s159 + $0x5b] sm:$0x1] %vm3809, %v4563
          %4582 = vst.msk [vmem:[%s159 + $0x6b] sm:$0x1] %vm3809, %v4565
          %4583 = vst.msk [vmem:[%s159 + $0x7b] sm:$0x1] %vm3809, %v4567
          %v4584 = vunpack.c.l.bf16 %v3721
          %v4585 = vunpack.c.h.bf16 %v3721
          %v4586 = vsub.f32 %v4584, %v3728
          %v4587 = vsub.f32 %v4585, %v3733
          %v4588 = vmul.f32 %v4586, %v3740
          %v4589 = vmul.f32 %v4587, %v3745
          %v4590 = vmax.f32 %v4588, 0.0
          %v4591 = vmax.f32 %v4589, 0.0
          %v4593 = vcombine.high %v4590, %v4590
          %v4595 = vunpack.c.l.s4 1966171168
          %v4596 = vunpack.c.0.s8 %v4595
          %v4597 = vlaneseq
          %v4598 = vshrl.u32 %v4597, 7
          %v4599 = vsub.s32 %v4596, %v4598
          %v4600 = vrot.slane %v4590, %v4599
          %v4602 = vunpack.c.l.s4 1966171168
          %v4603 = vunpack.c.0.s8 %v4602
          %v4604 = vlaneseq
          %v4605 = vshrl.u32 %v4604, 7
          %v4606 = vsub.s32 %v4603, %v4605
          %v4607 = vrot.slane %v4593, %v4606
          %v4608 = vcombine.high %v4600, %v4600
          %v4609 = vcombine.high %v4607, %v4607
          %v4611 = vunpack.c.l.s4 1966171168
          %v4612 = vunpack.c.0.s8 %v4611
          %v4613 = vlaneseq
          %v4614 = vshrl.u32 %v4613, 7
          %v4615 = vsub.s32 %v4612, %v4614
          %v4616 = vrot.slane %v4600, %v4615
          %v4618 = vunpack.c.l.s4 1966171168
          %v4619 = vunpack.c.0.s8 %v4618
          %v4620 = vlaneseq
          %v4621 = vshrl.u32 %v4620, 7
          %v4622 = vsub.s32 %v4619, %v4621
          %v4623 = vrot.slane %v4607, %v4622
          %v4625 = vunpack.c.l.s4 1966171168
          %v4626 = vunpack.c.0.s8 %v4625
          %v4627 = vlaneseq
          %v4628 = vshrl.u32 %v4627, 7
          %v4629 = vsub.s32 %v4626, %v4628
          %v4630 = vrot.slane %v4608, %v4629
          %v4632 = vunpack.c.l.s4 1966171168
          %v4633 = vunpack.c.0.s8 %v4632
          %v4634 = vlaneseq
          %v4635 = vshrl.u32 %v4634, 7
          %v4636 = vsub.s32 %v4633, %v4635
          %v4637 = vrot.slane %v4609, %v4636
          %v4638 = vcombine.high %v4616, %v4616
          %v4639 = vcombine.high %v4623, %v4623
          %v4640 = vcombine.high %v4630, %v4630
          %v4641 = vcombine.high %v4637, %v4637
          %4650 = vst.msk [vmem:[%s159 + $0xc] sm:$0x1] %vm3809, %v4616
          %4651 = vst.msk [vmem:[%s159 + $0x1c] sm:$0x1] %vm3809, %v4630
          %4652 = vst.msk [vmem:[%s159 + $0x2c] sm:$0x1] %vm3809, %v4638
          %4653 = vst.msk [vmem:[%s159 + $0x3c] sm:$0x1] %vm3809, %v4640
          %4654 = vst.msk [vmem:[%s159 + $0x4c] sm:$0x1] %vm3809, %v4623
          %4655 = vst.msk [vmem:[%s159 + $0x5c] sm:$0x1] %vm3809, %v4637
          %4656 = vst.msk [vmem:[%s159 + $0x6c] sm:$0x1] %vm3809, %v4639
          %4657 = vst.msk [vmem:[%s159 + $0x7c] sm:$0x1] %vm3809, %v4641
          %v4659 = vcombine.high %v4591, %v4591
          %v4661 = vunpack.c.l.s4 1966171168
          %v4662 = vunpack.c.0.s8 %v4661
          %v4663 = vlaneseq
          %v4664 = vshrl.u32 %v4663, 7
          %v4665 = vsub.s32 %v4662, %v4664
          %v4666 = vrot.slane %v4591, %v4665
          %v4668 = vunpack.c.l.s4 1966171168
          %v4669 = vunpack.c.0.s8 %v4668
          %v4670 = vlaneseq
          %v4671 = vshrl.u32 %v4670, 7
          %v4672 = vsub.s32 %v4669, %v4671
          %v4673 = vrot.slane %v4659, %v4672
          %v4674 = vcombine.high %v4666, %v4666
          %v4675 = vcombine.high %v4673, %v4673
          %v4677 = vunpack.c.l.s4 1966171168
          %v4678 = vunpack.c.0.s8 %v4677
          %v4679 = vlaneseq
          %v4680 = vshrl.u32 %v4679, 7
          %v4681 = vsub.s32 %v4678, %v4680
          %v4682 = vrot.slane %v4666, %v4681
          %v4684 = vunpack.c.l.s4 1966171168
          %v4685 = vunpack.c.0.s8 %v4684
          %v4686 = vlaneseq
          %v4687 = vshrl.u32 %v4686, 7
          %v4688 = vsub.s32 %v4685, %v4687
          %v4689 = vrot.slane %v4673, %v4688
          %v4691 = vunpack.c.l.s4 1966171168
          %v4692 = vunpack.c.0.s8 %v4691
          %v4693 = vlaneseq
          %v4694 = vshrl.u32 %v4693, 7
          %v4695 = vsub.s32 %v4692, %v4694
          %v4696 = vrot.slane %v4674, %v4695
          %v4698 = vunpack.c.l.s4 1966171168
          %v4699 = vunpack.c.0.s8 %v4698
          %v4700 = vlaneseq
          %v4701 = vshrl.u32 %v4700, 7
          %v4702 = vsub.s32 %v4699, %v4701
          %v4703 = vrot.slane %v4675, %v4702
          %v4704 = vcombine.high %v4682, %v4682
          %v4705 = vcombine.high %v4689, %v4689
          %v4706 = vcombine.high %v4696, %v4696
          %v4707 = vcombine.high %v4703, %v4703
          %4716 = vst.msk [vmem:[%s159 + $0xd] sm:$0x1] %vm3809, %v4682
          %4717 = vst.msk [vmem:[%s159 + $0x1d] sm:$0x1] %vm3809, %v4696
          %4718 = vst.msk [vmem:[%s159 + $0x2d] sm:$0x1] %vm3809, %v4704
          %4719 = vst.msk [vmem:[%s159 + $0x3d] sm:$0x1] %vm3809, %v4706
          %4720 = vst.msk [vmem:[%s159 + $0x4d] sm:$0x1] %vm3809, %v4689
          %4721 = vst.msk [vmem:[%s159 + $0x5d] sm:$0x1] %vm3809, %v4703
          %4722 = vst.msk [vmem:[%s159 + $0x6d] sm:$0x1] %vm3809, %v4705
          %4723 = vst.msk [vmem:[%s159 + $0x7d] sm:$0x1] %vm3809, %v4707
          %v4724 = vunpack.c.l.bf16 %v3722
          %v4725 = vunpack.c.h.bf16 %v3722
          %v4726 = vsub.f32 %v4724, %v3728
          %v4727 = vsub.f32 %v4725, %v3733
          %v4728 = vmul.f32 %v4726, %v3740
          %v4729 = vmul.f32 %v4727, %v3745
          %v4730 = vmax.f32 %v4728, 0.0
          %v4731 = vmax.f32 %v4729, 0.0
          %v4733 = vcombine.high %v4730, %v4730
          %v4735 = vunpack.c.l.s4 1966171168
          %v4736 = vunpack.c.0.s8 %v4735
          %v4737 = vlaneseq
          %v4738 = vshrl.u32 %v4737, 7
          %v4739 = vsub.s32 %v4736, %v4738
          %v4740 = vrot.slane %v4730, %v4739
          %v4742 = vunpack.c.l.s4 1966171168
          %v4743 = vunpack.c.0.s8 %v4742
          %v4744 = vlaneseq
          %v4745 = vshrl.u32 %v4744, 7
          %v4746 = vsub.s32 %v4743, %v4745
          %v4747 = vrot.slane %v4733, %v4746
          %v4748 = vcombine.high %v4740, %v4740
          %v4749 = vcombine.high %v4747, %v4747
          %v4751 = vunpack.c.l.s4 1966171168
          %v4752 = vunpack.c.0.s8 %v4751
          %v4753 = vlaneseq
          %v4754 = vshrl.u32 %v4753, 7
          %v4755 = vsub.s32 %v4752, %v4754
          %v4756 = vrot.slane %v4740, %v4755
          %v4758 = vunpack.c.l.s4 1966171168
          %v4759 = vunpack.c.0.s8 %v4758
          %v4760 = vlaneseq
          %v4761 = vshrl.u32 %v4760, 7
          %v4762 = vsub.s32 %v4759, %v4761
          %v4763 = vrot.slane %v4747, %v4762
          %v4765 = vunpack.c.l.s4 1966171168
          %v4766 = vunpack.c.0.s8 %v4765
          %v4767 = vlaneseq
          %v4768 = vshrl.u32 %v4767, 7
          %v4769 = vsub.s32 %v4766, %v4768
          %v4770 = vrot.slane %v4748, %v4769
          %v4772 = vunpack.c.l.s4 1966171168
          %v4773 = vunpack.c.0.s8 %v4772
          %v4774 = vlaneseq
          %v4775 = vshrl.u32 %v4774, 7
          %v4776 = vsub.s32 %v4773, %v4775
          %v4777 = vrot.slane %v4749, %v4776
          %v4778 = vcombine.high %v4756, %v4756
          %v4779 = vcombine.high %v4763, %v4763
          %v4780 = vcombine.high %v4770, %v4770
          %v4781 = vcombine.high %v4777, %v4777
          %4790 = vst.msk [vmem:[%s159 + $0xe] sm:$0x1] %vm3809, %v4756
          %4791 = vst.msk [vmem:[%s159 + $0x1e] sm:$0x1] %vm3809, %v4770
          %4792 = vst.msk [vmem:[%s159 + $0x2e] sm:$0x1] %vm3809, %v4778
          %4793 = vst.msk [vmem:[%s159 + $0x3e] sm:$0x1] %vm3809, %v4780
          %4794 = vst.msk [vmem:[%s159 + $0x4e] sm:$0x1] %vm3809, %v4763
          %4795 = vst.msk [vmem:[%s159 + $0x5e] sm:$0x1] %vm3809, %v4777
          %4796 = vst.msk [vmem:[%s159 + $0x6e] sm:$0x1] %vm3809, %v4779
          %4797 = vst.msk [vmem:[%s159 + $0x7e] sm:$0x1] %vm3809, %v4781
          %v4799 = vcombine.high %v4731, %v4731
          %v4801 = vunpack.c.l.s4 1966171168
          %v4802 = vunpack.c.0.s8 %v4801
          %v4803 = vlaneseq
          %v4804 = vshrl.u32 %v4803, 7
          %v4805 = vsub.s32 %v4802, %v4804
          %v4806 = vrot.slane %v4731, %v4805
          %v4808 = vunpack.c.l.s4 1966171168
          %v4809 = vunpack.c.0.s8 %v4808
          %v4810 = vlaneseq
          %v4811 = vshrl.u32 %v4810, 7
          %v4812 = vsub.s32 %v4809, %v4811
          %v4813 = vrot.slane %v4799, %v4812
          %v4814 = vcombine.high %v4806, %v4806
          %v4815 = vcombine.high %v4813, %v4813
          %v4817 = vunpack.c.l.s4 1966171168
          %v4818 = vunpack.c.0.s8 %v4817
          %v4819 = vlaneseq
          %v4820 = vshrl.u32 %v4819, 7
          %v4821 = vsub.s32 %v4818, %v4820
          %v4822 = vrot.slane %v4806, %v4821
          %v4824 = vunpack.c.l.s4 1966171168
          %v4825 = vunpack.c.0.s8 %v4824
          %v4826 = vlaneseq
          %v4827 = vshrl.u32 %v4826, 7
          %v4828 = vsub.s32 %v4825, %v4827
          %v4829 = vrot.slane %v4813, %v4828
          %v4831 = vunpack.c.l.s4 1966171168
          %v4832 = vunpack.c.0.s8 %v4831
          %v4833 = vlaneseq
          %v4834 = vshrl.u32 %v4833, 7
          %v4835 = vsub.s32 %v4832, %v4834
          %v4836 = vrot.slane %v4814, %v4835
          %v4838 = vunpack.c.l.s4 1966171168
          %v4839 = vunpack.c.0.s8 %v4838
          %v4840 = vlaneseq
          %v4841 = vshrl.u32 %v4840, 7
          %v4842 = vsub.s32 %v4839, %v4841
          %v4843 = vrot.slane %v4815, %v4842
          %v4844 = vcombine.high %v4822, %v4822
          %v4845 = vcombine.high %v4829, %v4829
          %v4846 = vcombine.high %v4836, %v4836
          %v4847 = vcombine.high %v4843, %v4843
          %4856 = vst.msk [vmem:[%s159 + $0xf] sm:$0x1] %vm3809, %v4822
          %4857 = vst.msk [vmem:[%s159 + $0x1f] sm:$0x1] %vm3809, %v4836
          %4858 = vst.msk [vmem:[%s159 + $0x2f] sm:$0x1] %vm3809, %v4844
          %4859 = vst.msk [vmem:[%s159 + $0x3f] sm:$0x1] %vm3809, %v4846
          %4860 = vst.msk [vmem:[%s159 + $0x4f] sm:$0x1] %vm3809, %v4829
          %4861 = vst.msk [vmem:[%s159 + $0x5f] sm:$0x1] %vm3809, %v4843
          %4862 = vst.msk [vmem:[%s159 + $0x6f] sm:$0x1] %vm3809, %v4845
          %4863 = vst.msk [vmem:[%s159 + $0x7f] sm:$0x1] %vm3809, %v4847
        $region44: #{tpu_custom_call.1} parent=27 // pred_fallthru
          _
        %s4864 = sand.u32 %s94, 1
        %s4865 = scalar_lea.sflag [#allocation8], %s4864
        %s4866 = sand.u32 %s94, 1
        %s4867 = smul.addr %s4866, 128
        %s4868 = scalar_lea.vmem [#allocation7], %s4867
        // Predicated region
        $region45: #{tpu_custom_call.1} parent=27 // pred_check
          %p4869 = pneg %p104
        $region46: #{tpu_custom_call.1} parent=27 // pred_check_branch
          %4871 = sbr.rel (%p4869) target = $region48
        $region47: #{tpu_custom_call.1} parent=27 // pred_region
          #allocation10 [shape = 'u32[6]{0}', space=smem, size = 0x18, scoped, tag = 'DMA stride descriptor']
          %s4872 = smul.u32 %s23, %s22
          %s4873 = smul.u32 2, %s4872
          %s4875 = ssub.s32 2048, 2048
          %4876 = vsyncadd %s4865, %s4875
          %s4877 = smul.addr %s21, 32
          %s4878 = sadd.s32 %s4873, %s4877
          %s4879 = smul.addr %s4878, 128
          %s4880 = scalar_lea.hbm %s2, %s4879
          %s4882 = sshll.u32 1, 14
          %s4883 = sxor.u32 4294967295, %s4882
          %s4886 = sshll.u32 7, 18
          %s4887 = sxor.u32 4294967295, %s4886
          %s4888 = sand.u32 0, %s4887
          %s4890 = sor.u32 %s4888, 0
          %s4892 = sshll.u32 3, 24
          %s4893 = sxor.u32 4294967295, %s4892
          %s4894 = sand.u32 %s4890, %s4893
          %s4896 = sor.u32 %s4894, 0
          %s4897 = sshll.u32 %s4868, 4
          %s4898 = int_to_ptr.vmem [resolvable:$true] %s4897
          %4904 = sst [smem:[#allocation10]] 256
          %s4905 = scalar_lea.smem [#allocation10], 1
          %4906 = sst [smem:[%s4905]] 512
          %s4907 = scalar_lea.smem [#allocation10], 2
          %4908 = sst [smem:[%s4907]] 2
          %s4909 = scalar_lea.smem [#allocation10], 3
          %4910 = sst [smem:[%s4909]] 128
          %s4911 = scalar_lea.smem [#allocation10], 4
          %4912 = sst [smem:[%s4911]] 128
          %s4913 = scalar_lea.smem [#allocation10], 5
          %4914 = sst [smem:[%s4913]] 8
          %4916 = dma.general %s4898, 2048, %s4880, %s4865, [#allocation9], [#allocation10], %s4896, 0
        $region48: #{tpu_custom_call.1} parent=27 // pred_fallthru
          _
      $region28: #{tpu_custom_call.1} parent=5 // pred_fallthru
        _
      %p4917 = scmp.le.s32.totalorder 2, %s11
      // Predicated region
      $region49: #{tpu_custom_call.1} parent=5 // pred_check
        %p4918 = pneg %p4917
      $region50: #{tpu_custom_call.1} parent=5 // pred_check_branch
        %4920 = sbr.rel (%p4918) target = $region52
      $region51: #{tpu_custom_call.1} parent=5 // pred_region
        %s4921 = ssub.s32 %s11, 2
        // Predicated region
        $region53: #{tpu_custom_call.1} parent=51 // pred_check
          %p4922 = pneg %p110
        $region54: #{tpu_custom_call.1} parent=51 // pred_check_branch
          %4924 = sbr.rel (%p4922) target = $region56
        $region55: #{tpu_custom_call.1} parent=51 // pred_region
          %s4925 = sand.u32 %s95, 1
          %s4926 = scalar_lea.sflag [#allocation8], %s4925
          %s4927 = sand.u32 %s95, 1
          %s4928 = smul.addr %s4927, 128
          %s4929 = scalar_lea.vmem [#allocation7], %s4928
          %4930 = dma.done %s4926, 2048
        $region56: #{tpu_custom_call.1} parent=51 // pred_fallthru
          _
      $region52: #{tpu_custom_call.1} parent=5 // pred_fallthru
        _
    $region6: #{tpu_custom_call.1} parent=1 // loop_footer
      %s15 = sadd.s32 1, %s11
    $region7: #{tpu_custom_call.1} parent=1 // loop_footer_branch
      %10 = sbr.rel target = $region3
    $region8: #{tpu_custom_call.1} parent=1 // loop_exit
      _
    %4931 = vsyncpa [#allocation8], 1
    %s4932 = scalar_lea.sflag [#allocation8], 1
    %4933 = vsyncpa %s4932, 1

</llo_original>
